<compile_context>
chip_gen: v7x
topology: tpu7x:2x2x1
jax: 0.10.0
libtpu: 0.0.40
codegen_flags: <defaults>
</compile_context>

<pallas_src>
import functools
import math

import jax
import jax.numpy as jnp
from jax.experimental import pallas as pl
from jax.experimental.pallas import tpu as pltpu


def _round_up(x, m):
    return ((x + m - 1) // m) * m


# ----------------------------------------------------------------------------
# In-kernel building blocks (trace-time helpers on loaded values)
# ----------------------------------------------------------------------------

def _dot_bf16(x, w_bf16, bias=None):
    """MXU matmul, bf16 inputs, f32 accumulation (+ optional f32 bias)."""
    y = jnp.dot(x.astype(jnp.bfloat16), w_bf16,
                preferred_element_type=jnp.float32)
    if bias is not None:
        y = y + bias
    return y


def _normalize_seq(x, *, b, s):
    """F.normalize(x, p=2, dim=1, eps=1e-12) of a (B, S, D) tensor, applied to
    the batch-folded (B*S, D) layout: per batch block, L2-normalize every
    feature column over the sequence axis."""
    outs = []
    for bi in range(b):
        blk = x[bi * s:(bi + 1) * s, :]
        sq = jnp.sum(blk * blk, axis=0, keepdims=True)          # (1, D)
        outs.append(blk * jax.lax.rsqrt(jnp.maximum(sq, jnp.float32(1e-24))))
    return jnp.concatenate(outs, axis=0)


def _ffn(x, w1, b1, w2, b2):
    y = jnp.maximum(_dot_bf16(x, w1, b1), 0.0)
    return _dot_bf16(y, w2, b2)


def _split_heads(x, *, b, s, h, d):
    """(B*S, h*d) -> (B*h*S, d): stack per-(batch, head) blocks on sublanes."""
    blocks = []
    for bi in range(b):
        xb = x[bi * s:(bi + 1) * s, :]
        for hi in range(h):
            blocks.append(xb[:, hi * d:(hi + 1) * d])
    return jnp.concatenate(blocks, axis=0)


def _merge_heads(x, *, b, s, h, d):
    """(B*h*S, d) -> (B*S, h*d): inverse of _split_heads (concat over heads)."""
    rows = []
    for bi in range(b):
        heads = [x[(bi * h + hi) * s:(bi * h + hi + 1) * s, :]
                 for hi in range(h)]
        rows.append(jnp.concatenate(heads, axis=1))
    return jnp.concatenate(rows, axis=0)


def _block_masks(b, h, s):
    """Block-diagonal (per batch-head block) and block-causal masks, built
    once per kernel invocation.  Avoids integer div/mod (robust lowering)."""
    n = b * h * s
    row = jax.lax.broadcasted_iota(jnp.int32, (n, n), 0)
    col = jax.lax.broadcasted_iota(jnp.int32, (n, n), 1)
    same = None
    for blk in range(b * h):
        lo, hi = blk * s, (blk + 1) * s
        m = (row >= lo) & (row < hi) & (col >= lo) & (col < hi)
        same = m if same is None else (same | m)
    causal = same & (col <= row)       # within a diagonal block, causal == col<=row
    return same, causal


def _mha(q_in, kv_in, wqkv, bqkv, wo, bo, mask, *, b, s, h, d_k, d_v,
         self_attn):
    """Multi-head attention on batch-folded (B*S, D) streams.

    wqkv = [Wq | Wk | Wv] (bf16) with 1/sqrt(d_k) pre-folded into Wq/bq.
    Heads (and batches) are stacked along sublanes so there is exactly one
    scores matmul, one P@V matmul and one bf16 Wo matmul.
    """
    hk = h * d_k
    if self_attn:
        qkv = _dot_bf16(q_in, wqkv, bqkv)                     # (B*S, 2hk+h*dv)
        q, k, v = qkv[:, :hk], qkv[:, hk:2 * hk], qkv[:, 2 * hk:]
    else:  # cross attention: query stream != key/value stream
        q = _dot_bf16(q_in, wqkv[:, :hk], bqkv[:, :hk])       # (B*S, hk)
        kv = _dot_bf16(kv_in, wqkv[:, hk:], bqkv[:, hk:])     # (B*S, hk+h*dv)
        k, v = kv[:, :hk], kv[:, hk:]

    qs = _split_heads(q, b=b, s=s, h=h, d=d_k).astype(jnp.bfloat16)  # (BhS,dk)
    ks = _split_heads(k, b=b, s=s, h=h, d=d_k).astype(jnp.bfloat16)  # (BhS,dk)
    vs = _split_heads(v, b=b, s=s, h=h, d=d_v).astype(jnp.bfloat16)  # (BhS,dv)

    # ONE scores matmul for all batches and heads: (BhS, BhS), f32 acc.
    scores = jax.lax.dot_general(qs, ks, (((1,), (1,)), ((), ())),
                                 preferred_element_type=jnp.float32)
    scores = jnp.where(mask, scores, jnp.float32(-1e30))
    m = jnp.max(scores, axis=-1, keepdims=True)
    p = jnp.exp(scores - m)
    p = p / jnp.sum(p, axis=-1, keepdims=True)                # exact softmax

    # ONE P@V matmul (bf16 on MXU, f32 acc): (BhS, dv)
    o = jnp.dot(p.astype(jnp.bfloat16), vs,
                preferred_element_type=jnp.float32)
    o = _merge_heads(o, b=b, s=s, h=h, d=d_v)                 # (B*S, h*dv) f32

    # ONE concat(heads) @ Wo matmul, Wo kept in bf16 (no f32 upcast).
    return _dot_bf16(o, wo, bo)                               # (B*S, D)


# ----------------------------------------------------------------------------
# Fused whole-model kernel (encoder + decoder + output proj + dim-0 softmax)
# ----------------------------------------------------------------------------

def _transformer_kernel(
        x1_ref, x2_ref,
        e_wqkv, e_bqkv, e_wo, e_bo, e_w1, e_b1, e_w2, e_b2,
        dm_wqkv, dm_bqkv, dm_wo, dm_bo,
        dc_wqkv, dc_bqkv, dc_wo, dc_bo,
        d_w1, d_b1, d_w2, d_b2,
        w_out, b_out,
        out_ref,
        *, b, s, h, d_k, d_v):
    x1 = x1_ref[...]                   # (B*S, Dp) encoder input, batch-folded
    x2 = x2_ref[...]                   # (B*S, Dp) decoder input, batch-folded

    # Masks built once per kernel invocation (grid=(1,) => once total).
    same_mask, causal_mask = _block_masks(b, h, s)

    mha = functools.partial(_mha, b=b, s=s, h=h, d_k=d_k, d_v=d_v)
    norm = functools.partial(_normalize_seq, b=b, s=s)

    # ---------------- Encoder ----------------
    enc = x1 + mha(x1, x1, e_wqkv[...], e_bqkv[...], e_wo[...], e_bo[...],
                   mask=same_mask, self_attn=True)
    enc = norm(enc)
    enc = enc + _ffn(enc, e_w1[...], e_b1[...], e_w2[...], e_b2[...])

    # ---------------- Decoder ----------------
    # NOTE: no residual around the masked self-attention (as in the reference).
    dec = mha(x2, x2, dm_wqkv[...], dm_bqkv[...], dm_wo[...], dm_bo[...],
              mask=causal_mask, self_attn=True)
    dec = norm(dec)
    dec = dec + mha(dec, enc, dc_wqkv[...], dc_bqkv[...], dc_wo[...],
                    dc_bo[...], mask=same_mask, self_attn=False)
    dec = norm(dec)
    dec = norm(dec + _ffn(dec, d_w1[...], d_b1[...], d_w2[...], d_b2[...]))

    # -------------- Output projection (lane-dense, Vp = 128-mult) ----------
    logits = _dot_bf16(dec, w_out[...], b_out[...])           # (B*S, Vp) f32

    # -------- legacy F.softmax over dim 0 (batch axis), fused in-kernel ----
    blocks = [logits[bi * s:(bi + 1) * s, :] for bi in range(b)]
    mx = blocks[0]
    for blk in blocks[1:]:
        mx = jnp.maximum(mx, blk)
    exps = [jnp.exp(blk - mx) for blk in blocks]
    den = exps[0]
    for e in exps[1:]:
        den = den + e
    out_ref[...] = jnp.concatenate([e / den for e in exps], axis=0)


# ----------------------------------------------------------------------------
# JAX wrapper: one pallas_call for the whole forward pass
# ----------------------------------------------------------------------------

def transformer_forward(params, x1_ids, x2_ids, *, h, d_k, d_v, num_tokens):
    # Embedding lookups (tiny data-dependent gathers) kept as JAX glue.
    x1 = params["emb1"][x1_ids]                    # (B, S, Dp) f32
    x2 = params["emb2"][x2_ids]
    b, s, dp = x1.shape
    vp = params["b_out"].shape[1]

    # Fold batch into the matmul M dimension.
    x1f = x1.reshape(b * s, dp)
    x2f = x2.reshape(b * s, dp)

    enc_p, dec_p = params["encoder"], params["decoder"]
    weights = [
        enc_p["att"]["Wqkv"], enc_p["att"]["bqkv"],
        enc_p["att"]["Wo"], enc_p["att"]["bo"],
        enc_p["ff"]["W1"], enc_p["ff"]["b1"],
        enc_p["ff"]["W2"], enc_p["ff"]["b2"],
        dec_p["masked_att"]["Wqkv"], dec_p["masked_att"]["bqkv"],
        dec_p["masked_att"]["Wo"], dec_p["masked_att"]["bo"],
        dec_p["att"]["Wqkv"], dec_p["att"]["bqkv"],
        dec_p["att"]["Wo"], dec_p["att"]["bo"],
        dec_p["ff"]["W1"], dec_p["ff"]["b1"],
        dec_p["ff"]["W2"], dec_p["ff"]["b2"],
        params["W_out"], params["b_out"],
    ]

    def full(a):
        return pl.BlockSpec(a.shape, lambda i: (0,) * a.ndim)

    kern = functools.partial(_transformer_kernel, b=b, s=s, h=h,
                             d_k=d_k, d_v=d_v)
    out = pl.pallas_call(
        kern,
        out_shape=jax.ShapeDtypeStruct((b * s, vp), jnp.float32),
        grid=(1,),
        in_specs=[full(x1f), full(x2f)] + [full(w) for w in weights],
        out_specs=pl.BlockSpec((b * s, vp), lambda i: (0, 0)),
        compiler_params=pltpu.CompilerParams(
            dimension_semantics=("arbitrary",),
            vmem_limit_bytes=32 * 1024 * 1024),
    )(x1f, x2f, *weights)

    # Un-fold the batch and drop the zero-padded vocab columns.
    return out.reshape(b, s, vp)[:, :, :num_tokens]


# ----------------------------------------------------------------------------
# Deterministic parameter init (kernel-ready: fused QKV, 1/sqrt(d_k) folded,
# zero-padded to lane-dense shapes, bf16 weights).  In a real port this is a
# one-time prep from the PyTorch state_dict.
# ----------------------------------------------------------------------------

def init_params(key, h, d_model, d_k, d_v, num_tokens):
    dp = _round_up(d_model, 128)        # lane-dense d_model
    vp = _round_up(num_tokens, 128)     # lane-dense vocab / logits
    keys = iter(jax.random.split(key, 64))

    def w(shape, scale=0.02):
        return (scale * jax.random.normal(next(keys), shape)).astype(jnp.float32)

    def pad_to(a, shape):
        return jnp.pad(a, [(0, t - c) for c, t in zip(a.shape, shape)])

    def mha_p():
        sc = 1.0 / math.sqrt(d_k)
        wq, bq = w((d_model, h * d_k)), w((1, h * d_k))
        wk, bk = w((d_model, h * d_k)), w((1, h * d_k))
        wv, bv = w((d_model, h * d_v)), w((1, h * d_v))
        # fuse Q|K|V into one matmul; fold 1/sqrt(d_k) into Q
        wqkv = jnp.concatenate([wq * sc, wk, wv], axis=1)
        bqkv = jnp.concatenate([bq * sc, bk, bv], axis=1)
        wqkv = pad_to(wqkv, (dp, wqkv.shape[1]))            # zero-pad input rows
        return dict(Wqkv=wqkv.astype(jnp.bfloat16), bqkv=bqkv,
                    Wo=pad_to(w((h * d_v, d_model)),
                              (h * d_v, dp)).astype(jnp.bfloat16),
                    bo=pad_to(w((1, d_model)), (1, dp)))

    def ffn_p():
        return dict(
            W1=pad_to(w((d_model, d_model)), (dp, dp)).astype(jnp.bfloat16),
            b1=pad_to(w((1, d_model)), (1, dp)),
            W2=pad_to(w((d_model, d_model)), (dp, dp)).astype(jnp.bfloat16),
            b2=pad_to(w((1, d_model)), (1, dp)))

    emb1 = w((num_tokens, d_model), 1.0).at[2].set(0.0)     # padding_idx=2
    emb2 = w((num_tokens, d_model), 1.0).at[2].set(0.0)     # padding_idx=2
    return dict(
        emb1=pad_to(emb1, (num_tokens, dp)),
        emb2=pad_to(emb2, (num_tokens, dp)),
        encoder=dict(att=mha_p(), ff=ffn_p()),
        decoder=dict(masked_att=mha_p(), att=mha_p(), ff=ffn_p()),
        W_out=pad_to(w((d_model, num_tokens)), (dp, vp)).astype(jnp.bfloat16),
        b_out=pad_to(w((1, num_tokens)), (1, vp)),
    )


# ----------------------------------------------------------------------------
# Demo
# ----------------------------------------------------------------------------

if __name__ == "__main__":
    h, d_model, d_k, d_v, num_tokens = 4, 32, 8, 8, 16
    B, S = 2, 8

    root = jax.random.PRNGKey(0)
    k_params, k_x1, k_x2 = jax.random.split(root, 3)

    params = init_params(k_params, h, d_model, d_k, d_v, num_tokens)
    x_1 = jax.random.randint(k_x1, (B, S), 0, num_tokens, dtype=jnp.int32)
    x_2 = jax.random.randint(k_x2, (B, S), 0, num_tokens, dtype=jnp.int32)

    fwd = jax.jit(functools.partial(transformer_forward, h=h, d_k=d_k,
                                    d_v=d_v, num_tokens=num_tokens))
    out = jax.block_until_ready(fwd(params, x_1, x_2))

    assert out.shape == (B, S, num_tokens), out.shape
    assert bool(jnp.all(jnp.isfinite(out)))
    # softmax over dim=0 (legacy implicit dim for 3-D input) sums to 1 per column
    assert bool(jnp.allclose(jnp.sum(out, axis=0), 1.0, atol=1e-5))

    print("KERNEL_OK")
</pallas_src>

<mosaic_0001>
module attributes {stable_mosaic.version = 11 : i64} {
  func.func @_transformer_kernel(%arg0: i32, %arg1: memref<16x128xf32, #tpu.memory_space<vmem>>, %arg2: memref<16x128xf32, #tpu.memory_space<vmem>>, %arg3: memref<128x96xbf16, #tpu.memory_space<vmem>>, %arg4: memref<1x96xf32, #tpu.memory_space<vmem>>, %arg5: memref<32x128xbf16, #tpu.memory_space<vmem>>, %arg6: memref<1x128xf32, #tpu.memory_space<vmem>>, %arg7: memref<128x128xbf16, #tpu.memory_space<vmem>>, %arg8: memref<1x128xf32, #tpu.memory_space<vmem>>, %arg9: memref<128x128xbf16, #tpu.memory_space<vmem>>, %arg10: memref<1x128xf32, #tpu.memory_space<vmem>>, %arg11: memref<128x96xbf16, #tpu.memory_space<vmem>>, %arg12: memref<1x96xf32, #tpu.memory_space<vmem>>, %arg13: memref<32x128xbf16, #tpu.memory_space<vmem>>, %arg14: memref<1x128xf32, #tpu.memory_space<vmem>>, %arg15: memref<128x96xbf16, #tpu.memory_space<vmem>>, %arg16: memref<1x96xf32, #tpu.memory_space<vmem>>, %arg17: memref<32x128xbf16, #tpu.memory_space<vmem>>, %arg18: memref<1x128xf32, #tpu.memory_space<vmem>>, %arg19: memref<128x128xbf16, #tpu.memory_space<vmem>>, %arg20: memref<1x128xf32, #tpu.memory_space<vmem>>, %arg21: memref<128x128xbf16, #tpu.memory_space<vmem>>, %arg22: memref<1x128xf32, #tpu.memory_space<vmem>>, %arg23: memref<128x128xbf16, #tpu.memory_space<vmem>>, %arg24: memref<1x128xf32, #tpu.memory_space<vmem>>, %arg25: memref<16x128xf32, #tpu.memory_space<vmem>>) attributes {dimension_semantics = [#tpu.dimension_semantics<arbitrary>], iteration_bounds = array<i64: 1>, scalar_prefetch = 0 : i64, scratch_operands = 0 : i64, tpu.core_type = #tpu.core_type<tc>, window_params = [{pipeline_mode = #tpu.pipeline_mode<synchronous>, transform_indices = @transform_0, window_bounds = array<i64: 16, 128>}, {pipeline_mode = #tpu.pipeline_mode<synchronous>, transform_indices = @transform_1, window_bounds = array<i64: 16, 128>}, {pipeline_mode = #tpu.pipeline_mode<synchronous>, transform_indices = @transform_2, window_bounds = array<i64: 128, 96>}, {pipeline_mode = #tpu.pipeline_mode<synchronous>, transform_indices = @transform_3, window_bounds = array<i64: 1, 96>}, {pipeline_mode = #tpu.pipeline_mode<synchronous>, transform_indices = @transform_4, window_bounds = array<i64: 32, 128>}, {pipeline_mode = #tpu.pipeline_mode<synchronous>, transform_indices = @transform_5, window_bounds = array<i64: 1, 128>}, {pipeline_mode = #tpu.pipeline_mode<synchronous>, transform_indices = @transform_6, window_bounds = array<i64: 128, 128>}, {pipeline_mode = #tpu.pipeline_mode<synchronous>, transform_indices = @transform_7, window_bounds = array<i64: 1, 128>}, {pipeline_mode = #tpu.pipeline_mode<synchronous>, transform_indices = @transform_8, window_bounds = array<i64: 128, 128>}, {pipeline_mode = #tpu.pipeline_mode<synchronous>, transform_indices = @transform_9, window_bounds = array<i64: 1, 128>}, {pipeline_mode = #tpu.pipeline_mode<synchronous>, transform_indices = @transform_10, window_bounds = array<i64: 128, 96>}, {pipeline_mode = #tpu.pipeline_mode<synchronous>, transform_indices = @transform_11, window_bounds = array<i64: 1, 96>}, {pipeline_mode = #tpu.pipeline_mode<synchronous>, transform_indices = @transform_12, window_bounds = array<i64: 32, 128>}, {pipeline_mode = #tpu.pipeline_mode<synchronous>, transform_indices = @transform_13, window_bounds = array<i64: 1, 128>}, {pipeline_mode = #tpu.pipeline_mode<synchronous>, transform_indices = @transform_14, window_bounds = array<i64: 128, 96>}, {pipeline_mode = #tpu.pipeline_mode<synchronous>, transform_indices = @transform_15, window_bounds = array<i64: 1, 96>}, {pipeline_mode = #tpu.pipeline_mode<synchronous>, transform_indices = @transform_16, window_bounds = array<i64: 32, 128>}, {pipeline_mode = #tpu.pipeline_mode<synchronous>, transform_indices = @transform_17, window_bounds = array<i64: 1, 128>}, {pipeline_mode = #tpu.pipeline_mode<synchronous>, transform_indices = @transform_18, window_bounds = array<i64: 128, 128>}, {pipeline_mode = #tpu.pipeline_mode<synchronous>, transform_indices = @transform_19, window_bounds = array<i64: 1, 128>}, {pipeline_mode = #tpu.pipeline_mode<synchronous>, transform_indices = @transform_20, window_bounds = array<i64: 128, 128>}, {pipeline_mode = #tpu.pipeline_mode<synchronous>, transform_indices = @transform_21, window_bounds = array<i64: 1, 128>}, {pipeline_mode = #tpu.pipeline_mode<synchronous>, transform_indices = @transform_22, window_bounds = array<i64: 128, 128>}, {pipeline_mode = #tpu.pipeline_mode<synchronous>, transform_indices = @transform_23, window_bounds = array<i64: 1, 128>}, {pipeline_mode = #tpu.pipeline_mode<synchronous>, transform_indices = @transform_24, window_bounds = array<i64: 16, 128>}]} {
    %c0 = arith.constant 0 : index
    %c0_0 = arith.constant 0 : index
    %0 = vector.load %arg1[%c0, %c0_0] : memref<16x128xf32, #tpu.memory_space<vmem>>, vector<16x128xf32>
    %c0_1 = arith.constant 0 : index
    %c0_2 = arith.constant 0 : index
    %1 = vector.load %arg2[%c0_1, %c0_2] : memref<16x128xf32, #tpu.memory_space<vmem>>, vector<16x128xf32>
    %2 = tpu.iota {dimensions = array<i32: 0>} : vector<64x64xi32>
    %3 = tpu.iota {dimensions = array<i32: 1>} : vector<64x64xi32>
    %c0_i32 = arith.constant 0 : i32
    %4 = vector.broadcast %c0_i32 : i32 to vector<64x64xi32>
    %5 = arith.cmpi sge, %2, %4 : vector<64x64xi32>
    %c8_i32 = arith.constant 8 : i32
    %6 = vector.broadcast %c8_i32 : i32 to vector<64x64xi32>
    %7 = arith.cmpi slt, %2, %6 : vector<64x64xi32>
    %8 = arith.andi %5, %7 : vector<64x64xi1>
    %c0_i32_3 = arith.constant 0 : i32
    %9 = vector.broadcast %c0_i32_3 : i32 to vector<64x64xi32>
    %10 = arith.cmpi sge, %3, %9 : vector<64x64xi32>
    %11 = arith.andi %8, %10 : vector<64x64xi1>
    %c8_i32_4 = arith.constant 8 : i32
    %12 = vector.broadcast %c8_i32_4 : i32 to vector<64x64xi32>
    %13 = arith.cmpi slt, %3, %12 : vector<64x64xi32>
    %14 = arith.andi %11, %13 : vector<64x64xi1>
    %c8_i32_5 = arith.constant 8 : i32
    %15 = vector.broadcast %c8_i32_5 : i32 to vector<64x64xi32>
    %16 = arith.cmpi sge, %2, %15 : vector<64x64xi32>
    %c16_i32 = arith.constant 16 : i32
    %17 = vector.broadcast %c16_i32 : i32 to vector<64x64xi32>
    %18 = arith.cmpi slt, %2, %17 : vector<64x64xi32>
    %19 = arith.andi %16, %18 : vector<64x64xi1>
    %c8_i32_6 = arith.constant 8 : i32
    %20 = vector.broadcast %c8_i32_6 : i32 to vector<64x64xi32>
    %21 = arith.cmpi sge, %3, %20 : vector<64x64xi32>
    %22 = arith.andi %19, %21 : vector<64x64xi1>
    %c16_i32_7 = arith.constant 16 : i32
    %23 = vector.broadcast %c16_i32_7 : i32 to vector<64x64xi32>
    %24 = arith.cmpi slt, %3, %23 : vector<64x64xi32>
    %25 = arith.andi %22, %24 : vector<64x64xi1>
    %26 = arith.ori %14, %25 : vector<64x64xi1>
    %c16_i32_8 = arith.constant 16 : i32
    %27 = vector.broadcast %c16_i32_8 : i32 to vector<64x64xi32>
    %28 = arith.cmpi sge, %2, %27 : vector<64x64xi32>
    %c24_i32 = arith.constant 24 : i32
    %29 = vector.broadcast %c24_i32 : i32 to vector<64x64xi32>
    %30 = arith.cmpi slt, %2, %29 : vector<64x64xi32>
    %31 = arith.andi %28, %30 : vector<64x64xi1>
    %c16_i32_9 = arith.constant 16 : i32
    %32 = vector.broadcast %c16_i32_9 : i32 to vector<64x64xi32>
    %33 = arith.cmpi sge, %3, %32 : vector<64x64xi32>
    %34 = arith.andi %31, %33 : vector<64x64xi1>
    %c24_i32_10 = arith.constant 24 : i32
    %35 = vector.broadcast %c24_i32_10 : i32 to vector<64x64xi32>
    %36 = arith.cmpi slt, %3, %35 : vector<64x64xi32>
    %37 = arith.andi %34, %36 : vector<64x64xi1>
    %38 = arith.ori %26, %37 : vector<64x64xi1>
    %c24_i32_11 = arith.constant 24 : i32
    %39 = vector.broadcast %c24_i32_11 : i32 to vector<64x64xi32>
    %40 = arith.cmpi sge, %2, %39 : vector<64x64xi32>
    %c32_i32 = arith.constant 32 : i32
    %41 = vector.broadcast %c32_i32 : i32 to vector<64x64xi32>
    %42 = arith.cmpi slt, %2, %41 : vector<64x64xi32>
    %43 = arith.andi %40, %42 : vector<64x64xi1>
    %c24_i32_12 = arith.constant 24 : i32
    %44 = vector.broadcast %c24_i32_12 : i32 to vector<64x64xi32>
    %45 = arith.cmpi sge, %3, %44 : vector<64x64xi32>
    %46 = arith.andi %43, %45 : vector<64x64xi1>
    %c32_i32_13 = arith.constant 32 : i32
    %47 = vector.broadcast %c32_i32_13 : i32 to vector<64x64xi32>
    %48 = arith.cmpi slt, %3, %47 : vector<64x64xi32>
    %49 = arith.andi %46, %48 : vector<64x64xi1>
    %50 = arith.ori %38, %49 : vector<64x64xi1>
    %c32_i32_14 = arith.constant 32 : i32
    %51 = vector.broadcast %c32_i32_14 : i32 to vector<64x64xi32>
    %52 = arith.cmpi sge, %2, %51 : vector<64x64xi32>
    %c40_i32 = arith.constant 40 : i32
    %53 = vector.broadcast %c40_i32 : i32 to vector<64x64xi32>
    %54 = arith.cmpi slt, %2, %53 : vector<64x64xi32>
    %55 = arith.andi %52, %54 : vector<64x64xi1>
    %c32_i32_15 = arith.constant 32 : i32
    %56 = vector.broadcast %c32_i32_15 : i32 to vector<64x64xi32>
    %57 = arith.cmpi sge, %3, %56 : vector<64x64xi32>
    %58 = arith.andi %55, %57 : vector<64x64xi1>
    %c40_i32_16 = arith.constant 40 : i32
    %59 = vector.broadcast %c40_i32_16 : i32 to vector<64x64xi32>
    %60 = arith.cmpi slt, %3, %59 : vector<64x64xi32>
    %61 = arith.andi %58, %60 : vector<64x64xi1>
    %62 = arith.ori %50, %61 : vector<64x64xi1>
    %c40_i32_17 = arith.constant 40 : i32
    %63 = vector.broadcast %c40_i32_17 : i32 to vector<64x64xi32>
    %64 = arith.cmpi sge, %2, %63 : vector<64x64xi32>
    %c48_i32 = arith.constant 48 : i32
    %65 = vector.broadcast %c48_i32 : i32 to vector<64x64xi32>
    %66 = arith.cmpi slt, %2, %65 : vector<64x64xi32>
    %67 = arith.andi %64, %66 : vector<64x64xi1>
    %c40_i32_18 = arith.constant 40 : i32
    %68 = vector.broadcast %c40_i32_18 : i32 to vector<64x64xi32>
    %69 = arith.cmpi sge, %3, %68 : vector<64x64xi32>
    %70 = arith.andi %67, %69 : vector<64x64xi1>
    %c48_i32_19 = arith.constant 48 : i32
    %71 = vector.broadcast %c48_i32_19 : i32 to vector<64x64xi32>
    %72 = arith.cmpi slt, %3, %71 : vector<64x64xi32>
    %73 = arith.andi %70, %72 : vector<64x64xi1>
    %74 = arith.ori %62, %73 : vector<64x64xi1>
    %c48_i32_20 = arith.constant 48 : i32
    %75 = vector.broadcast %c48_i32_20 : i32 to vector<64x64xi32>
    %76 = arith.cmpi sge, %2, %75 : vector<64x64xi32>
    %c56_i32 = arith.constant 56 : i32
    %77 = vector.broadcast %c56_i32 : i32 to vector<64x64xi32>
    %78 = arith.cmpi slt, %2, %77 : vector<64x64xi32>
    %79 = arith.andi %76, %78 : vector<64x64xi1>
    %c48_i32_21 = arith.constant 48 : i32
    %80 = vector.broadcast %c48_i32_21 : i32 to vector<64x64xi32>
    %81 = arith.cmpi sge, %3, %80 : vector<64x64xi32>
    %82 = arith.andi %79, %81 : vector<64x64xi1>
    %c56_i32_22 = arith.constant 56 : i32
    %83 = vector.broadcast %c56_i32_22 : i32 to vector<64x64xi32>
    %84 = arith.cmpi slt, %3, %83 : vector<64x64xi32>
    %85 = arith.andi %82, %84 : vector<64x64xi1>
    %86 = arith.ori %74, %85 : vector<64x64xi1>
    %c56_i32_23 = arith.constant 56 : i32
    %87 = vector.broadcast %c56_i32_23 : i32 to vector<64x64xi32>
    %88 = arith.cmpi sge, %2, %87 : vector<64x64xi32>
    %c64_i32 = arith.constant 64 : i32
    %89 = vector.broadcast %c64_i32 : i32 to vector<64x64xi32>
    %90 = arith.cmpi slt, %2, %89 : vector<64x64xi32>
    %91 = arith.andi %88, %90 : vector<64x64xi1>
    %c56_i32_24 = arith.constant 56 : i32
    %92 = vector.broadcast %c56_i32_24 : i32 to vector<64x64xi32>
    %93 = arith.cmpi sge, %3, %92 : vector<64x64xi32>
    %94 = arith.andi %91, %93 : vector<64x64xi1>
    %c64_i32_25 = arith.constant 64 : i32
    %95 = vector.broadcast %c64_i32_25 : i32 to vector<64x64xi32>
    %96 = arith.cmpi slt, %3, %95 : vector<64x64xi32>
    %97 = arith.andi %94, %96 : vector<64x64xi1>
    %98 = arith.ori %86, %97 : vector<64x64xi1>
    %99 = arith.cmpi sle, %3, %2 : vector<64x64xi32>
    %100 = arith.andi %98, %99 : vector<64x64xi1>
    %c0_26 = arith.constant 0 : index
    %c0_27 = arith.constant 0 : index
    %101 = vector.load %arg3[%c0_26, %c0_27] : memref<128x96xbf16, #tpu.memory_space<vmem>>, vector<128x96xbf16>
    %c0_28 = arith.constant 0 : index
    %c0_29 = arith.constant 0 : index
    %102 = vector.load %arg4[%c0_28, %c0_29] : memref<1x96xf32, #tpu.memory_space<vmem>>, vector<1x96xf32>
    %c0_30 = arith.constant 0 : index
    %c0_31 = arith.constant 0 : index
    %103 = vector.load %arg5[%c0_30, %c0_31] : memref<32x128xbf16, #tpu.memory_space<vmem>>, vector<32x128xbf16>
    %c0_32 = arith.constant 0 : index
    %c0_33 = arith.constant 0 : index
    %104 = vector.load %arg6[%c0_32, %c0_33] : memref<1x128xf32, #tpu.memory_space<vmem>>, vector<1x128xf32>
    %105 = arith.truncf %0 : vector<16x128xf32> to vector<16x128xbf16>
    %cst = arith.constant dense<0.000000e+00> : vector<16x96xf32>
    %106 = tpu.matmul %105, %101, %cst {dimension_numbers = #tpu.dot_dimension_numbers<[1], [0], [0], [1], [0, 0, 1, 1], [], []>} : vector<16x128xbf16>, vector<128x96xbf16>, vector<16x96xf32> -> vector<16x96xf32>
    %107 = vector.broadcast %102 : vector<1x96xf32> to vector<16x96xf32>
    %108 = arith.addf %106, %107 : vector<16x96xf32>
    %109 = vector.extract_strided_slice %108 {offsets = [0, 0], sizes = [16, 32], strides = [1, 1]} : vector<16x96xf32> to vector<16x32xf32>
    %110 = vector.extract_strided_slice %108 {offsets = [0, 32], sizes = [16, 32], strides = [1, 1]} : vector<16x96xf32> to vector<16x32xf32>
    %111 = vector.extract_strided_slice %108 {offsets = [0, 64], sizes = [16, 32], strides = [1, 1]} : vector<16x96xf32> to vector<16x32xf32>
    %112 = vector.extract_strided_slice %109 {offsets = [0, 0], sizes = [8, 32], strides = [1, 1]} : vector<16x32xf32> to vector<8x32xf32>
    %113 = vector.extract_strided_slice %112 {offsets = [0, 0], sizes = [8, 8], strides = [1, 1]} : vector<8x32xf32> to vector<8x8xf32>
    %114 = vector.extract_strided_slice %112 {offsets = [0, 8], sizes = [8, 8], strides = [1, 1]} : vector<8x32xf32> to vector<8x8xf32>
    %115 = vector.extract_strided_slice %112 {offsets = [0, 16], sizes = [8, 8], strides = [1, 1]} : vector<8x32xf32> to vector<8x8xf32>
    %116 = vector.extract_strided_slice %112 {offsets = [0, 24], sizes = [8, 8], strides = [1, 1]} : vector<8x32xf32> to vector<8x8xf32>
    %117 = vector.extract_strided_slice %109 {offsets = [8, 0], sizes = [8, 32], strides = [1, 1]} : vector<16x32xf32> to vector<8x32xf32>
    %118 = vector.extract_strided_slice %117 {offsets = [0, 0], sizes = [8, 8], strides = [1, 1]} : vector<8x32xf32> to vector<8x8xf32>
    %119 = vector.extract_strided_slice %117 {offsets = [0, 8], sizes = [8, 8], strides = [1, 1]} : vector<8x32xf32> to vector<8x8xf32>
    %120 = vector.extract_strided_slice %117 {offsets = [0, 16], sizes = [8, 8], strides = [1, 1]} : vector<8x32xf32> to vector<8x8xf32>
    %121 = vector.extract_strided_slice %117 {offsets = [0, 24], sizes = [8, 8], strides = [1, 1]} : vector<8x32xf32> to vector<8x8xf32>
    %122 = tpu.concatenate %113, %114, %115, %116, %118, %119, %120, %121 in 0 : vector<8x8xf32>, vector<8x8xf32>, vector<8x8xf32>, vector<8x8xf32>, vector<8x8xf32>, vector<8x8xf32>, vector<8x8xf32>, vector<8x8xf32> -> vector<64x8xf32>
    %123 = arith.truncf %122 : vector<64x8xf32> to vector<64x8xbf16>
    %124 = vector.extract_strided_slice %110 {offsets = [0, 0], sizes = [8, 32], strides = [1, 1]} : vector<16x32xf32> to vector<8x32xf32>
    %125 = vector.extract_strided_slice %124 {offsets = [0, 0], sizes = [8, 8], strides = [1, 1]} : vector<8x32xf32> to vector<8x8xf32>
    %126 = vector.extract_strided_slice %124 {offsets = [0, 8], sizes = [8, 8], strides = [1, 1]} : vector<8x32xf32> to vector<8x8xf32>
    %127 = vector.extract_strided_slice %124 {offsets = [0, 16], sizes = [8, 8], strides = [1, 1]} : vector<8x32xf32> to vector<8x8xf32>
    %128 = vector.extract_strided_slice %124 {offsets = [0, 24], sizes = [8, 8], strides = [1, 1]} : vector<8x32xf32> to vector<8x8xf32>
    %129 = vector.extract_strided_slice %110 {offsets = [8, 0], sizes = [8, 32], strides = [1, 1]} : vector<16x32xf32> to vector<8x32xf32>
    %130 = vector.extract_strided_slice %129 {offsets = [0, 0], sizes = [8, 8], strides = [1, 1]} : vector<8x32xf32> to vector<8x8xf32>
    %131 = vector.extract_strided_slice %129 {offsets = [0, 8], sizes = [8, 8], strides = [1, 1]} : vector<8x32xf32> to vector<8x8xf32>
    %132 = vector.extract_strided_slice %129 {offsets = [0, 16], sizes = [8, 8], strides = [1, 1]} : vector<8x32xf32> to vector<8x8xf32>
    %133 = vector.extract_strided_slice %129 {offsets = [0, 24], sizes = [8, 8], strides = [1, 1]} : vector<8x32xf32> to vector<8x8xf32>
    %134 = tpu.concatenate %125, %126, %127, %128, %130, %131, %132, %133 in 0 : vector<8x8xf32>, vector<8x8xf32>, vector<8x8xf32>, vector<8x8xf32>, vector<8x8xf32>, vector<8x8xf32>, vector<8x8xf32>, vector<8x8xf32> -> vector<64x8xf32>
    %135 = arith.truncf %134 : vector<64x8xf32> to vector<64x8xbf16>
    %136 = vector.extract_strided_slice %111 {offsets = [0, 0], sizes = [8, 32], strides = [1, 1]} : vector<16x32xf32> to vector<8x32xf32>
    %137 = vector.extract_strided_slice %136 {offsets = [0, 0], sizes = [8, 8], strides = [1, 1]} : vector<8x32xf32> to vector<8x8xf32>
    %138 = vector.extract_strided_slice %136 {offsets = [0, 8], sizes = [8, 8], strides = [1, 1]} : vector<8x32xf32> to vector<8x8xf32>
    %139 = vector.extract_strided_slice %136 {offsets = [0, 16], sizes = [8, 8], strides = [1, 1]} : vector<8x32xf32> to vector<8x8xf32>
    %140 = vector.extract_strided_slice %136 {offsets = [0, 24], sizes = [8, 8], strides = [1, 1]} : vector<8x32xf32> to vector<8x8xf32>
    %141 = vector.extract_strided_slice %111 {offsets = [8, 0], sizes = [8, 32], strides = [1, 1]} : vector<16x32xf32> to vector<8x32xf32>
    %142 = vector.extract_strided_slice %141 {offsets = [0, 0], sizes = [8, 8], strides = [1, 1]} : vector<8x32xf32> to vector<8x8xf32>
    %143 = vector.extract_strided_slice %141 {offsets = [0, 8], sizes = [8, 8], strides = [1, 1]} : vector<8x32xf32> to vector<8x8xf32>
    %144 = vector.extract_strided_slice %141 {offsets = [0, 16], sizes = [8, 8], strides = [1, 1]} : vector<8x32xf32> to vector<8x8xf32>
    %145 = vector.extract_strided_slice %141 {offsets = [0, 24], sizes = [8, 8], strides = [1, 1]} : vector<8x32xf32> to vector<8x8xf32>
    %146 = tpu.concatenate %137, %138, %139, %140, %142, %143, %144, %145 in 0 : vector<8x8xf32>, vector<8x8xf32>, vector<8x8xf32>, vector<8x8xf32>, vector<8x8xf32>, vector<8x8xf32>, vector<8x8xf32>, vector<8x8xf32> -> vector<64x8xf32>
    %147 = arith.truncf %146 : vector<64x8xf32> to vector<64x8xbf16>
    %cst_34 = arith.constant dense<0.000000e+00> : vector<64x64xf32>
    %148 = tpu.matmul %123, %135, %cst_34 {dimension_numbers = #tpu.dot_dimension_numbers<[1], [1], [0], [0], [0, 0, 1, 0], [], []>} : vector<64x8xbf16>, vector<64x8xbf16>, vector<64x64xf32> -> vector<64x64xf32>
    %cst_35 = arith.constant -1.000000e+30 : f32
    %149 = vector.broadcast %cst_35 : f32 to vector<64x64xf32>
    %150 = arith.select %98, %148, %149 : vector<64x64xi1>, vector<64x64xf32>
    %cst_36 = arith.constant dense<0xFF800000> : vector<64xf32>
    %151 = vector.multi_reduction <maximumf>, %150, %cst_36 [1] : vector<64x64xf32> to vector<64xf32>
    %152 = vector.shape_cast %151 : vector<64xf32> to vector<64x1xf32>
    %153 = vector.broadcast %152 : vector<64x1xf32> to vector<64x64xf32>
    %154 = arith.subf %150, %153 : vector<64x64xf32>
    %155 = math.exp %154 : vector<64x64xf32>
    %cst_37 = arith.constant dense<0.000000e+00> : vector<64xf32>
    %156 = vector.multi_reduction <add>, %155, %cst_37 [1] : vector<64x64xf32> to vector<64xf32>
    %157 = vector.shape_cast %156 : vector<64xf32> to vector<64x1xf32>
    %158 = vector.broadcast %157 : vector<64x1xf32> to vector<64x64xf32>
    %159 = arith.divf %155, %158 : vector<64x64xf32>
    %160 = arith.truncf %159 : vector<64x64xf32> to vector<64x64xbf16>
    %cst_38 = arith.constant dense<0.000000e+00> : vector<64x8xf32>
    %161 = tpu.matmul %160, %147, %cst_38 {dimension_numbers = #tpu.dot_dimension_numbers<[1], [0], [0], [1], [0, 0, 1, 1], [], []>} : vector<64x64xbf16>, vector<64x8xbf16>, vector<64x8xf32> -> vector<64x8xf32>
    %162 = vector.extract_strided_slice %161 {offsets = [0, 0], sizes = [8, 8], strides = [1, 1]} : vector<64x8xf32> to vector<8x8xf32>
    %163 = vector.extract_strided_slice %161 {offsets = [8, 0], sizes = [8, 8], strides = [1, 1]} : vector<64x8xf32> to vector<8x8xf32>
    %164 = vector.extract_strided_slice %161 {offsets = [16, 0], sizes = [8, 8], strides = [1, 1]} : vector<64x8xf32> to vector<8x8xf32>
    %165 = vector.extract_strided_slice %161 {offsets = [24, 0], sizes = [8, 8], strides = [1, 1]} : vector<64x8xf32> to vector<8x8xf32>
    %166 = tpu.concatenate %162, %163, %164, %165 in 1 : vector<8x8xf32>, vector<8x8xf32>, vector<8x8xf32>, vector<8x8xf32> -> vector<8x32xf32>
    %167 = vector.extract_strided_slice %161 {offsets = [32, 0], sizes = [8, 8], strides = [1, 1]} : vector<64x8xf32> to vector<8x8xf32>
    %168 = vector.extract_strided_slice %161 {offsets = [40, 0], sizes = [8, 8], strides = [1, 1]} : vector<64x8xf32> to vector<8x8xf32>
    %169 = vector.extract_strided_slice %161 {offsets = [48, 0], sizes = [8, 8], strides = [1, 1]} : vector<64x8xf32> to vector<8x8xf32>
    %170 = vector.extract_strided_slice %161 {offsets = [56, 0], sizes = [8, 8], strides = [1, 1]} : vector<64x8xf32> to vector<8x8xf32>
    %171 = tpu.concatenate %167, %168, %169, %170 in 1 : vector<8x8xf32>, vector<8x8xf32>, vector<8x8xf32>, vector<8x8xf32> -> vector<8x32xf32>
    %172 = tpu.concatenate %166, %171 in 0 : vector<8x32xf32>, vector<8x32xf32> -> vector<16x32xf32>
    %173 = arith.truncf %172 : vector<16x32xf32> to vector<16x32xbf16>
    %cst_39 = arith.constant dense<0.000000e+00> : vector<16x128xf32>
    %174 = tpu.matmul %173, %103, %cst_39 {dimension_numbers = #tpu.dot_dimension_numbers<[1], [0], [0], [1], [0, 0, 1, 1], [], []>} : vector<16x32xbf16>, vector<32x128xbf16>, vector<16x128xf32> -> vector<16x128xf32>
    %175 = vector.broadcast %104 : vector<1x128xf32> to vector<16x128xf32>
    %176 = arith.addf %174, %175 : vector<16x128xf32>
    %177 = arith.addf %0, %176 : vector<16x128xf32>
    %178 = vector.extract_strided_slice %177 {offsets = [0, 0], sizes = [8, 128], strides = [1, 1]} : vector<16x128xf32> to vector<8x128xf32>
    %179 = arith.mulf %178, %178 : vector<8x128xf32>
    %cst_40 = arith.constant dense<0.000000e+00> : vector<128xf32>
    %180 = vector.multi_reduction <add>, %179, %cst_40 [0] : vector<8x128xf32> to vector<128xf32>
    %181 = vector.shape_cast %180 : vector<128xf32> to vector<1x128xf32>
    %cst_41 = arith.constant 1.000000e-24 : f32
    %182 = vector.broadcast %cst_41 : f32 to vector<1x128xf32>
    %183 = arith.maximumf %181, %182 : vector<1x128xf32>
    %184 = math.rsqrt %183 : vector<1x128xf32>
    %185 = vector.broadcast %184 : vector<1x128xf32> to vector<8x128xf32>
    %186 = arith.mulf %178, %185 : vector<8x128xf32>
    %187 = vector.extract_strided_slice %177 {offsets = [8, 0], sizes = [8, 128], strides = [1, 1]} : vector<16x128xf32> to vector<8x128xf32>
    %188 = arith.mulf %187, %187 : vector<8x128xf32>
    %cst_42 = arith.constant dense<0.000000e+00> : vector<128xf32>
    %189 = vector.multi_reduction <add>, %188, %cst_42 [0] : vector<8x128xf32> to vector<128xf32>
    %190 = vector.shape_cast %189 : vector<128xf32> to vector<1x128xf32>
    %cst_43 = arith.constant 1.000000e-24 : f32
    %191 = vector.broadcast %cst_43 : f32 to vector<1x128xf32>
    %192 = arith.maximumf %190, %191 : vector<1x128xf32>
    %193 = math.rsqrt %192 : vector<1x128xf32>
    %194 = vector.broadcast %193 : vector<1x128xf32> to vector<8x128xf32>
    %195 = arith.mulf %187, %194 : vector<8x128xf32>
    %196 = tpu.concatenate %186, %195 in 0 : vector<8x128xf32>, vector<8x128xf32> -> vector<16x128xf32>
    %c0_44 = arith.constant 0 : index
    %c0_45 = arith.constant 0 : index
    %197 = vector.load %arg7[%c0_44, %c0_45] : memref<128x128xbf16, #tpu.memory_space<vmem>>, vector<128x128xbf16>
    %c0_46 = arith.constant 0 : index
    %c0_47 = arith.constant 0 : index
    %198 = vector.load %arg8[%c0_46, %c0_47] : memref<1x128xf32, #tpu.memory_space<vmem>>, vector<1x128xf32>
    %c0_48 = arith.constant 0 : index
    %c0_49 = arith.constant 0 : index
    %199 = vector.load %arg9[%c0_48, %c0_49] : memref<128x128xbf16, #tpu.memory_space<vmem>>, vector<128x128xbf16>
    %c0_50 = arith.constant 0 : index
    %c0_51 = arith.constant 0 : index
    %200 = vector.load %arg10[%c0_50, %c0_51] : memref<1x128xf32, #tpu.memory_space<vmem>>, vector<1x128xf32>
    %201 = arith.truncf %196 : vector<16x128xf32> to vector<16x128xbf16>
    %cst_52 = arith.constant dense<0.000000e+00> : vector<16x128xf32>
    %202 = tpu.matmul %201, %197, %cst_52 {dimension_numbers = #tpu.dot_dimension_numbers<[1], [0], [0], [1], [0, 0, 1, 1], [], []>} : vector<16x128xbf16>, vector<128x128xbf16>, vector<16x128xf32> -> vector<16x128xf32>
    %203 = vector.broadcast %198 : vector<1x128xf32> to vector<16x128xf32>
    %204 = arith.addf %202, %203 : vector<16x128xf32>
    %cst_53 = arith.constant 0.000000e+00 : f32
    %205 = vector.broadcast %cst_53 : f32 to vector<16x128xf32>
    %206 = arith.maximumf %204, %205 : vector<16x128xf32>
    %207 = arith.truncf %206 : vector<16x128xf32> to vector<16x128xbf16>
    %cst_54 = arith.constant dense<0.000000e+00> : vector<16x128xf32>
    %208 = tpu.matmul %207, %199, %cst_54 {dimension_numbers = #tpu.dot_dimension_numbers<[1], [0], [0], [1], [0, 0, 1, 1], [], []>} : vector<16x128xbf16>, vector<128x128xbf16>, vector<16x128xf32> -> vector<16x128xf32>
    %209 = vector.broadcast %200 : vector<1x128xf32> to vector<16x128xf32>
    %210 = arith.addf %208, %209 : vector<16x128xf32>
    %211 = arith.addf %196, %210 : vector<16x128xf32>
    %c0_55 = arith.constant 0 : index
    %c0_56 = arith.constant 0 : index
    %212 = vector.load %arg11[%c0_55, %c0_56] : memref<128x96xbf16, #tpu.memory_space<vmem>>, vector<128x96xbf16>
    %c0_57 = arith.constant 0 : index
    %c0_58 = arith.constant 0 : index
    %213 = vector.load %arg12[%c0_57, %c0_58] : memref<1x96xf32, #tpu.memory_space<vmem>>, vector<1x96xf32>
    %c0_59 = arith.constant 0 : index
    %c0_60 = arith.constant 0 : index
    %214 = vector.load %arg13[%c0_59, %c0_60] : memref<32x128xbf16, #tpu.memory_space<vmem>>, vector<32x128xbf16>
    %c0_61 = arith.constant 0 : index
    %c0_62 = arith.constant 0 : index
    %215 = vector.load %arg14[%c0_61, %c0_62] : memref<1x128xf32, #tpu.memory_space<vmem>>, vector<1x128xf32>
    %216 = arith.truncf %1 : vector<16x128xf32> to vector<16x128xbf16>
    %cst_63 = arith.constant dense<0.000000e+00> : vector<16x96xf32>
    %217 = tpu.matmul %216, %212, %cst_63 {dimension_numbers = #tpu.dot_dimension_numbers<[1], [0], [0], [1], [0, 0, 1, 1], [], []>} : vector<16x128xbf16>, vector<128x96xbf16>, vector<16x96xf32> -> vector<16x96xf32>
    %218 = vector.broadcast %213 : vector<1x96xf32> to vector<16x96xf32>
    %219 = arith.addf %217, %218 : vector<16x96xf32>
    %220 = vector.extract_strided_slice %219 {offsets = [0, 0], sizes = [16, 32], strides = [1, 1]} : vector<16x96xf32> to vector<16x32xf32>
    %221 = vector.extract_strided_slice %219 {offsets = [0, 32], sizes = [16, 32], strides = [1, 1]} : vector<16x96xf32> to vector<16x32xf32>
    %222 = vector.extract_strided_slice %219 {offsets = [0, 64], sizes = [16, 32], strides = [1, 1]} : vector<16x96xf32> to vector<16x32xf32>
    %223 = vector.extract_strided_slice %220 {offsets = [0, 0], sizes = [8, 32], strides = [1, 1]} : vector<16x32xf32> to vector<8x32xf32>
    %224 = vector.extract_strided_slice %223 {offsets = [0, 0], sizes = [8, 8], strides = [1, 1]} : vector<8x32xf32> to vector<8x8xf32>
    %225 = vector.extract_strided_slice %223 {offsets = [0, 8], sizes = [8, 8], strides = [1, 1]} : vector<8x32xf32> to vector<8x8xf32>
    %226 = vector.extract_strided_slice %223 {offsets = [0, 16], sizes = [8, 8], strides = [1, 1]} : vector<8x32xf32> to vector<8x8xf32>
    %227 = vector.extract_strided_slice %223 {offsets = [0, 24], sizes = [8, 8], strides = [1, 1]} : vector<8x32xf32> to vector<8x8xf32>
    %228 = vector.extract_strided_slice %220 {offsets = [8, 0], sizes = [8, 32], strides = [1, 1]} : vector<16x32xf32> to vector<8x32xf32>
    %229 = vector.extract_strided_slice %228 {offsets = [0, 0], sizes = [8, 8], strides = [1, 1]} : vector<8x32xf32> to vector<8x8xf32>
    %230 = vector.extract_strided_slice %228 {offsets = [0, 8], sizes = [8, 8], strides = [1, 1]} : vector<8x32xf32> to vector<8x8xf32>
    %231 = vector.extract_strided_slice %228 {offsets = [0, 16], sizes = [8, 8], strides = [1, 1]} : vector<8x32xf32> to vector<8x8xf32>
    %232 = vector.extract_strided_slice %228 {offsets = [0, 24], sizes = [8, 8], strides = [1, 1]} : vector<8x32xf32> to vector<8x8xf32>
    %233 = tpu.concatenate %224, %225, %226, %227, %229, %230, %231, %232 in 0 : vector<8x8xf32>, vector<8x8xf32>, vector<8x8xf32>, vector<8x8xf32>, vector<8x8xf32>, vector<8x8xf32>, vector<8x8xf32>, vector<8x8xf32> -> vector<64x8xf32>
    %234 = arith.truncf %233 : vector<64x8xf32> to vector<64x8xbf16>
    %235 = vector.extract_strided_slice %221 {offsets = [0, 0], sizes = [8, 32], strides = [1, 1]} : vector<16x32xf32> to vector<8x32xf32>
    %236 = vector.extract_strided_slice %235 {offsets = [0, 0], sizes = [8, 8], strides = [1, 1]} : vector<8x32xf32> to vector<8x8xf32>
    %237 = vector.extract_strided_slice %235 {offsets = [0, 8], sizes = [8, 8], strides = [1, 1]} : vector<8x32xf32> to vector<8x8xf32>
    %238 = vector.extract_strided_slice %235 {offsets = [0, 16], sizes = [8, 8], strides = [1, 1]} : vector<8x32xf32> to vector<8x8xf32>
    %239 = vector.extract_strided_slice %235 {offsets = [0, 24], sizes = [8, 8], strides = [1, 1]} : vector<8x32xf32> to vector<8x8xf32>
    %240 = vector.extract_strided_slice %221 {offsets = [8, 0], sizes = [8, 32], strides = [1, 1]} : vector<16x32xf32> to vector<8x32xf32>
    %241 = vector.extract_strided_slice %240 {offsets = [0, 0], sizes = [8, 8], strides = [1, 1]} : vector<8x32xf32> to vector<8x8xf32>
    %242 = vector.extract_strided_slice %240 {offsets = [0, 8], sizes = [8, 8], strides = [1, 1]} : vector<8x32xf32> to vector<8x8xf32>
    %243 = vector.extract_strided_slice %240 {offsets = [0, 16], sizes = [8, 8], strides = [1, 1]} : vector<8x32xf32> to vector<8x8xf32>
    %244 = vector.extract_strided_slice %240 {offsets = [0, 24], sizes = [8, 8], strides = [1, 1]} : vector<8x32xf32> to vector<8x8xf32>
    %245 = tpu.concatenate %236, %237, %238, %239, %241, %242, %243, %244 in 0 : vector<8x8xf32>, vector<8x8xf32>, vector<8x8xf32>, vector<8x8xf32>, vector<8x8xf32>, vector<8x8xf32>, vector<8x8xf32>, vector<8x8xf32> -> vector<64x8xf32>
    %246 = arith.truncf %245 : vector<64x8xf32> to vector<64x8xbf16>
    %247 = vector.extract_strided_slice %222 {offsets = [0, 0], sizes = [8, 32], strides = [1, 1]} : vector<16x32xf32> to vector<8x32xf32>
    %248 = vector.extract_strided_slice %247 {offsets = [0, 0], sizes = [8, 8], strides = [1, 1]} : vector<8x32xf32> to vector<8x8xf32>
    %249 = vector.extract_strided_slice %247 {offsets = [0, 8], sizes = [8, 8], strides = [1, 1]} : vector<8x32xf32> to vector<8x8xf32>
    %250 = vector.extract_strided_slice %247 {offsets = [0, 16], sizes = [8, 8], strides = [1, 1]} : vector<8x32xf32> to vector<8x8xf32>
    %251 = vector.extract_strided_slice %247 {offsets = [0, 24], sizes = [8, 8], strides = [1, 1]} : vector<8x32xf32> to vector<8x8xf32>
    %252 = vector.extract_strided_slice %222 {offsets = [8, 0], sizes = [8, 32], strides = [1, 1]} : vector<16x32xf32> to vector<8x32xf32>
    %253 = vector.extract_strided_slice %252 {offsets = [0, 0], sizes = [8, 8], strides = [1, 1]} : vector<8x32xf32> to vector<8x8xf32>
    %254 = vector.extract_strided_slice %252 {offsets = [0, 8], sizes = [8, 8], strides = [1, 1]} : vector<8x32xf32> to vector<8x8xf32>
    %255 = vector.extract_strided_slice %252 {offsets = [0, 16], sizes = [8, 8], strides = [1, 1]} : vector<8x32xf32> to vector<8x8xf32>
    %256 = vector.extract_strided_slice %252 {offsets = [0, 24], sizes = [8, 8], strides = [1, 1]} : vector<8x32xf32> to vector<8x8xf32>
    %257 = tpu.concatenate %248, %249, %250, %251, %253, %254, %255, %256 in 0 : vector<8x8xf32>, vector<8x8xf32>, vector<8x8xf32>, vector<8x8xf32>, vector<8x8xf32>, vector<8x8xf32>, vector<8x8xf32>, vector<8x8xf32> -> vector<64x8xf32>
    %258 = arith.truncf %257 : vector<64x8xf32> to vector<64x8xbf16>
    %cst_64 = arith.constant dense<0.000000e+00> : vector<64x64xf32>
    %259 = tpu.matmul %234, %246, %cst_64 {dimension_numbers = #tpu.dot_dimension_numbers<[1], [1], [0], [0], [0, 0, 1, 0], [], []>} : vector<64x8xbf16>, vector<64x8xbf16>, vector<64x64xf32> -> vector<64x64xf32>
    %cst_65 = arith.constant -1.000000e+30 : f32
    %260 = vector.broadcast %cst_65 : f32 to vector<64x64xf32>
    %261 = arith.select %100, %259, %260 : vector<64x64xi1>, vector<64x64xf32>
    %cst_66 = arith.constant dense<0xFF800000> : vector<64xf32>
    %262 = vector.multi_reduction <maximumf>, %261, %cst_66 [1] : vector<64x64xf32> to vector<64xf32>
    %263 = vector.shape_cast %262 : vector<64xf32> to vector<64x1xf32>
    %264 = vector.broadcast %263 : vector<64x1xf32> to vector<64x64xf32>
    %265 = arith.subf %261, %264 : vector<64x64xf32>
    %266 = math.exp %265 : vector<64x64xf32>
    %cst_67 = arith.constant dense<0.000000e+00> : vector<64xf32>
    %267 = vector.multi_reduction <add>, %266, %cst_67 [1] : vector<64x64xf32> to vector<64xf32>
    %268 = vector.shape_cast %267 : vector<64xf32> to vector<64x1xf32>
    %269 = vector.broadcast %268 : vector<64x1xf32> to vector<64x64xf32>
    %270 = arith.divf %266, %269 : vector<64x64xf32>
    %271 = arith.truncf %270 : vector<64x64xf32> to vector<64x64xbf16>
    %cst_68 = arith.constant dense<0.000000e+00> : vector<64x8xf32>
    %272 = tpu.matmul %271, %258, %cst_68 {dimension_numbers = #tpu.dot_dimension_numbers<[1], [0], [0], [1], [0, 0, 1, 1], [], []>} : vector<64x64xbf16>, vector<64x8xbf16>, vector<64x8xf32> -> vector<64x8xf32>
    %273 = vector.extract_strided_slice %272 {offsets = [0, 0], sizes = [8, 8], strides = [1, 1]} : vector<64x8xf32> to vector<8x8xf32>
    %274 = vector.extract_strided_slice %272 {offsets = [8, 0], sizes = [8, 8], strides = [1, 1]} : vector<64x8xf32> to vector<8x8xf32>
    %275 = vector.extract_strided_slice %272 {offsets = [16, 0], sizes = [8, 8], strides = [1, 1]} : vector<64x8xf32> to vector<8x8xf32>
    %276 = vector.extract_strided_slice %272 {offsets = [24, 0], sizes = [8, 8], strides = [1, 1]} : vector<64x8xf32> to vector<8x8xf32>
    %277 = tpu.concatenate %273, %274, %275, %276 in 1 : vector<8x8xf32>, vector<8x8xf32>, vector<8x8xf32>, vector<8x8xf32> -> vector<8x32xf32>
    %278 = vector.extract_strided_slice %272 {offsets = [32, 0], sizes = [8, 8], strides = [1, 1]} : vector<64x8xf32> to vector<8x8xf32>
    %279 = vector.extract_strided_slice %272 {offsets = [40, 0], sizes = [8, 8], strides = [1, 1]} : vector<64x8xf32> to vector<8x8xf32>
    %280 = vector.extract_strided_slice %272 {offsets = [48, 0], sizes = [8, 8], strides = [1, 1]} : vector<64x8xf32> to vector<8x8xf32>
    %281 = vector.extract_strided_slice %272 {offsets = [56, 0], sizes = [8, 8], strides = [1, 1]} : vector<64x8xf32> to vector<8x8xf32>
    %282 = tpu.concatenate %278, %279, %280, %281 in 1 : vector<8x8xf32>, vector<8x8xf32>, vector<8x8xf32>, vector<8x8xf32> -> vector<8x32xf32>
    %283 = tpu.concatenate %277, %282 in 0 : vector<8x32xf32>, vector<8x32xf32> -> vector<16x32xf32>
    %284 = arith.truncf %283 : vector<16x32xf32> to vector<16x32xbf16>
    %cst_69 = arith.constant dense<0.000000e+00> : vector<16x128xf32>
    %285 = tpu.matmul %284, %214, %cst_69 {dimension_numbers = #tpu.dot_dimension_numbers<[1], [0], [0], [1], [0, 0, 1, 1], [], []>} : vector<16x32xbf16>, vector<32x128xbf16>, vector<16x128xf32> -> vector<16x128xf32>
    %286 = vector.broadcast %215 : vector<1x128xf32> to vector<16x128xf32>
    %287 = arith.addf %285, %286 : vector<16x128xf32>
    %288 = vector.extract_strided_slice %287 {offsets = [0, 0], sizes = [8, 128], strides = [1, 1]} : vector<16x128xf32> to vector<8x128xf32>
    %289 = arith.mulf %288, %288 : vector<8x128xf32>
    %cst_70 = arith.constant dense<0.000000e+00> : vector<128xf32>
    %290 = vector.multi_reduction <add>, %289, %cst_70 [0] : vector<8x128xf32> to vector<128xf32>
    %291 = vector.shape_cast %290 : vector<128xf32> to vector<1x128xf32>
    %cst_71 = arith.constant 1.000000e-24 : f32
    %292 = vector.broadcast %cst_71 : f32 to vector<1x128xf32>
    %293 = arith.maximumf %291, %292 : vector<1x128xf32>
    %294 = math.rsqrt %293 : vector<1x128xf32>
    %295 = vector.broadcast %294 : vector<1x128xf32> to vector<8x128xf32>
    %296 = arith.mulf %288, %295 : vector<8x128xf32>
    %297 = vector.extract_strided_slice %287 {offsets = [8, 0], sizes = [8, 128], strides = [1, 1]} : vector<16x128xf32> to vector<8x128xf32>
    %298 = arith.mulf %297, %297 : vector<8x128xf32>
    %cst_72 = arith.constant dense<0.000000e+00> : vector<128xf32>
    %299 = vector.multi_reduction <add>, %298, %cst_72 [0] : vector<8x128xf32> to vector<128xf32>
    %300 = vector.shape_cast %299 : vector<128xf32> to vector<1x128xf32>
    %cst_73 = arith.constant 1.000000e-24 : f32
    %301 = vector.broadcast %cst_73 : f32 to vector<1x128xf32>
    %302 = arith.maximumf %300, %301 : vector<1x128xf32>
    %303 = math.rsqrt %302 : vector<1x128xf32>
    %304 = vector.broadcast %303 : vector<1x128xf32> to vector<8x128xf32>
    %305 = arith.mulf %297, %304 : vector<8x128xf32>
    %306 = tpu.concatenate %296, %305 in 0 : vector<8x128xf32>, vector<8x128xf32> -> vector<16x128xf32>
    %c0_74 = arith.constant 0 : index
    %c0_75 = arith.constant 0 : index
    %307 = vector.load %arg15[%c0_74, %c0_75] : memref<128x96xbf16, #tpu.memory_space<vmem>>, vector<128x96xbf16>
    %c0_76 = arith.constant 0 : index
    %c0_77 = arith.constant 0 : index
    %308 = vector.load %arg16[%c0_76, %c0_77] : memref<1x96xf32, #tpu.memory_space<vmem>>, vector<1x96xf32>
    %c0_78 = arith.constant 0 : index
    %c0_79 = arith.constant 0 : index
    %309 = vector.load %arg17[%c0_78, %c0_79] : memref<32x128xbf16, #tpu.memory_space<vmem>>, vector<32x128xbf16>
    %c0_80 = arith.constant 0 : index
    %c0_81 = arith.constant 0 : index
    %310 = vector.load %arg18[%c0_80, %c0_81] : memref<1x128xf32, #tpu.memory_space<vmem>>, vector<1x128xf32>
    %311 = vector.extract_strided_slice %307 {offsets = [0, 0], sizes = [128, 32], strides = [1, 1]} : vector<128x96xbf16> to vector<128x32xbf16>
    %312 = vector.extract_strided_slice %308 {offsets = [0, 0], sizes = [1, 32], strides = [1, 1]} : vector<1x96xf32> to vector<1x32xf32>
    %313 = arith.truncf %306 : vector<16x128xf32> to vector<16x128xbf16>
    %cst_82 = arith.constant dense<0.000000e+00> : vector<16x32xf32>
    %314 = tpu.matmul %313, %311, %cst_82 {dimension_numbers = #tpu.dot_dimension_numbers<[1], [0], [0], [1], [0, 0, 1, 1], [], []>} : vector<16x128xbf16>, vector<128x32xbf16>, vector<16x32xf32> -> vector<16x32xf32>
    %315 = vector.broadcast %312 : vector<1x32xf32> to vector<16x32xf32>
    %316 = arith.addf %314, %315 : vector<16x32xf32>
    %317 = vector.extract_strided_slice %307 {offsets = [0, 32], sizes = [128, 64], strides = [1, 1]} : vector<128x96xbf16> to vector<128x64xbf16>
    %318 = vector.extract_strided_slice %308 {offsets = [0, 32], sizes = [1, 64], strides = [1, 1]} : vector<1x96xf32> to vector<1x64xf32>
    %319 = arith.truncf %211 : vector<16x128xf32> to vector<16x128xbf16>
    %cst_83 = arith.constant dense<0.000000e+00> : vector<16x64xf32>
    %320 = tpu.matmul %319, %317, %cst_83 {dimension_numbers = #tpu.dot_dimension_numbers<[1], [0], [0], [1], [0, 0, 1, 1], [], []>} : vector<16x128xbf16>, vector<128x64xbf16>, vector<16x64xf32> -> vector<16x64xf32>
    %321 = vector.broadcast %318 : vector<1x64xf32> to vector<16x64xf32>
    %322 = arith.addf %320, %321 : vector<16x64xf32>
    %323 = vector.extract_strided_slice %322 {offsets = [0, 0], sizes = [16, 32], strides = [1, 1]} : vector<16x64xf32> to vector<16x32xf32>
    %324 = vector.extract_strided_slice %322 {offsets = [0, 32], sizes = [16, 32], strides = [1, 1]} : vector<16x64xf32> to vector<16x32xf32>
    %325 = vector.extract_strided_slice %316 {offsets = [0, 0], sizes = [8, 32], strides = [1, 1]} : vector<16x32xf32> to vector<8x32xf32>
    %326 = vector.extract_strided_slice %325 {offsets = [0, 0], sizes = [8, 8], strides = [1, 1]} : vector<8x32xf32> to vector<8x8xf32>
    %327 = vector.extract_strided_slice %325 {offsets = [0, 8], sizes = [8, 8], strides = [1, 1]} : vector<8x32xf32> to vector<8x8xf32>
    %328 = vector.extract_strided_slice %325 {offsets = [0, 16], sizes = [8, 8], strides = [1, 1]} : vector<8x32xf32> to vector<8x8xf32>
    %329 = vector.extract_strided_slice %325 {offsets = [0, 24], sizes = [8, 8], strides = [1, 1]} : vector<8x32xf32> to vector<8x8xf32>
    %330 = vector.extract_strided_slice %316 {offsets = [8, 0], sizes = [8, 32], strides = [1, 1]} : vector<16x32xf32> to vector<8x32xf32>
    %331 = vector.extract_strided_slice %330 {offsets = [0, 0], sizes = [8, 8], strides = [1, 1]} : vector<8x32xf32> to vector<8x8xf32>
    %332 = vector.extract_strided_slice %330 {offsets = [0, 8], sizes = [8, 8], strides = [1, 1]} : vector<8x32xf32> to vector<8x8xf32>
    %333 = vector.extract_strided_slice %330 {offsets = [0, 16], sizes = [8, 8], strides = [1, 1]} : vector<8x32xf32> to vector<8x8xf32>
    %334 = vector.extract_strided_slice %330 {offsets = [0, 24], sizes = [8, 8], strides = [1, 1]} : vector<8x32xf32> to vector<8x8xf32>
    %335 = tpu.concatenate %326, %327, %328, %329, %331, %332, %333, %334 in 0 : vector<8x8xf32>, vector<8x8xf32>, vector<8x8xf32>, vector<8x8xf32>, vector<8x8xf32>, vector<8x8xf32>, vector<8x8xf32>, vector<8x8xf32> -> vector<64x8xf32>
    %336 = arith.truncf %335 : vector<64x8xf32> to vector<64x8xbf16>
    %337 = vector.extract_strided_slice %323 {offsets = [0, 0], sizes = [8, 32], strides = [1, 1]} : vector<16x32xf32> to vector<8x32xf32>
    %338 = vector.extract_strided_slice %337 {offsets = [0, 0], sizes = [8, 8], strides = [1, 1]} : vector<8x32xf32> to vector<8x8xf32>
    %339 = vector.extract_strided_slice %337 {offsets = [0, 8], sizes = [8, 8], strides = [1, 1]} : vector<8x32xf32> to vector<8x8xf32>
    %340 = vector.extract_strided_slice %337 {offsets = [0, 16], sizes = [8, 8], strides = [1, 1]} : vector<8x32xf32> to vector<8x8xf32>
    %341 = vector.extract_strided_slice %337 {offsets = [0, 24], sizes = [8, 8], strides = [1, 1]} : vector<8x32xf32> to vector<8x8xf32>
    %342 = vector.extract_strided_slice %323 {offsets = [8, 0], sizes = [8, 32], strides = [1, 1]} : vector<16x32xf32> to vector<8x32xf32>
    %343 = vector.extract_strided_slice %342 {offsets = [0, 0], sizes = [8, 8], strides = [1, 1]} : vector<8x32xf32> to vector<8x8xf32>
    %344 = vector.extract_strided_slice %342 {offsets = [0, 8], sizes = [8, 8], strides = [1, 1]} : vector<8x32xf32> to vector<8x8xf32>
    %345 = vector.extract_strided_slice %342 {offsets = [0, 16], sizes = [8, 8], strides = [1, 1]} : vector<8x32xf32> to vector<8x8xf32>
    %346 = vector.extract_strided_slice %342 {offsets = [0, 24], sizes = [8, 8], strides = [1, 1]} : vector<8x32xf32> to vector<8x8xf32>
    %347 = tpu.concatenate %338, %339, %340, %341, %343, %344, %345, %346 in 0 : vector<8x8xf32>, vector<8x8xf32>, vector<8x8xf32>, vector<8x8xf32>, vector<8x8xf32>, vector<8x8xf32>, vector<8x8xf32>, vector<8x8xf32> -> vector<64x8xf32>
    %348 = arith.truncf %347 : vector<64x8xf32> to vector<64x8xbf16>
    %349 = vector.extract_strided_slice %324 {offsets = [0, 0], sizes = [8, 32], strides = [1, 1]} : vector<16x32xf32> to vector<8x32xf32>
    %350 = vector.extract_strided_slice %349 {offsets = [0, 0], sizes = [8, 8], strides = [1, 1]} : vector<8x32xf32> to vector<8x8xf32>
    %351 = vector.extract_strided_slice %349 {offsets = [0, 8], sizes = [8, 8], strides = [1, 1]} : vector<8x32xf32> to vector<8x8xf32>
    %352 = vector.extract_strided_slice %349 {offsets = [0, 16], sizes = [8, 8], strides = [1, 1]} : vector<8x32xf32> to vector<8x8xf32>
    %353 = vector.extract_strided_slice %349 {offsets = [0, 24], sizes = [8, 8], strides = [1, 1]} : vector<8x32xf32> to vector<8x8xf32>
    %354 = vector.extract_strided_slice %324 {offsets = [8, 0], sizes = [8, 32], strides = [1, 1]} : vector<16x32xf32> to vector<8x32xf32>
    %355 = vector.extract_strided_slice %354 {offsets = [0, 0], sizes = [8, 8], strides = [1, 1]} : vector<8x32xf32> to vector<8x8xf32>
    %356 = vector.extract_strided_slice %354 {offsets = [0, 8], sizes = [8, 8], strides = [1, 1]} : vector<8x32xf32> to vector<8x8xf32>
    %357 = vector.extract_strided_slice %354 {offsets = [0, 16], sizes = [8, 8], strides = [1, 1]} : vector<8x32xf32> to vector<8x8xf32>
    %358 = vector.extract_strided_slice %354 {offsets = [0, 24], sizes = [8, 8], strides = [1, 1]} : vector<8x32xf32> to vector<8x8xf32>
    %359 = tpu.concatenate %350, %351, %352, %353, %355, %356, %357, %358 in 0 : vector<8x8xf32>, vector<8x8xf32>, vector<8x8xf32>, vector<8x8xf32>, vector<8x8xf32>, vector<8x8xf32>, vector<8x8xf32>, vector<8x8xf32> -> vector<64x8xf32>
    %360 = arith.truncf %359 : vector<64x8xf32> to vector<64x8xbf16>
    %cst_84 = arith.constant dense<0.000000e+00> : vector<64x64xf32>
    %361 = tpu.matmul %336, %348, %cst_84 {dimension_numbers = #tpu.dot_dimension_numbers<[1], [1], [0], [0], [0, 0, 1, 0], [], []>} : vector<64x8xbf16>, vector<64x8xbf16>, vector<64x64xf32> -> vector<64x64xf32>
    %cst_85 = arith.constant -1.000000e+30 : f32
    %362 = vector.broadcast %cst_85 : f32 to vector<64x64xf32>
    %363 = arith.select %98, %361, %362 : vector<64x64xi1>, vector<64x64xf32>
    %cst_86 = arith.constant dense<0xFF800000> : vector<64xf32>
    %364 = vector.multi_reduction <maximumf>, %363, %cst_86 [1] : vector<64x64xf32> to vector<64xf32>
    %365 = vector.shape_cast %364 : vector<64xf32> to vector<64x1xf32>
    %366 = vector.broadcast %365 : vector<64x1xf32> to vector<64x64xf32>
    %367 = arith.subf %363, %366 : vector<64x64xf32>
    %368 = math.exp %367 : vector<64x64xf32>
    %cst_87 = arith.constant dense<0.000000e+00> : vector<64xf32>
    %369 = vector.multi_reduction <add>, %368, %cst_87 [1] : vector<64x64xf32> to vector<64xf32>
    %370 = vector.shape_cast %369 : vector<64xf32> to vector<64x1xf32>
    %371 = vector.broadcast %370 : vector<64x1xf32> to vector<64x64xf32>
    %372 = arith.divf %368, %371 : vector<64x64xf32>
    %373 = arith.truncf %372 : vector<64x64xf32> to vector<64x64xbf16>
    %cst_88 = arith.constant dense<0.000000e+00> : vector<64x8xf32>
    %374 = tpu.matmul %373, %360, %cst_88 {dimension_numbers = #tpu.dot_dimension_numbers<[1], [0], [0], [1], [0, 0, 1, 1], [], []>} : vector<64x64xbf16>, vector<64x8xbf16>, vector<64x8xf32> -> vector<64x8xf32>
    %375 = vector.extract_strided_slice %374 {offsets = [0, 0], sizes = [8, 8], strides = [1, 1]} : vector<64x8xf32> to vector<8x8xf32>
    %376 = vector.extract_strided_slice %374 {offsets = [8, 0], sizes = [8, 8], strides = [1, 1]} : vector<64x8xf32> to vector<8x8xf32>
    %377 = vector.extract_strided_slice %374 {offsets = [16, 0], sizes = [8, 8], strides = [1, 1]} : vector<64x8xf32> to vector<8x8xf32>
    %378 = vector.extract_strided_slice %374 {offsets = [24, 0], sizes = [8, 8], strides = [1, 1]} : vector<64x8xf32> to vector<8x8xf32>
    %379 = tpu.concatenate %375, %376, %377, %378 in 1 : vector<8x8xf32>, vector<8x8xf32>, vector<8x8xf32>, vector<8x8xf32> -> vector<8x32xf32>
    %380 = vector.extract_strided_slice %374 {offsets = [32, 0], sizes = [8, 8], strides = [1, 1]} : vector<64x8xf32> to vector<8x8xf32>
    %381 = vector.extract_strided_slice %374 {offsets = [40, 0], sizes = [8, 8], strides = [1, 1]} : vector<64x8xf32> to vector<8x8xf32>
    %382 = vector.extract_strided_slice %374 {offsets = [48, 0], sizes = [8, 8], strides = [1, 1]} : vector<64x8xf32> to vector<8x8xf32>
    %383 = vector.extract_strided_slice %374 {offsets = [56, 0], sizes = [8, 8], strides = [1, 1]} : vector<64x8xf32> to vector<8x8xf32>
    %384 = tpu.concatenate %380, %381, %382, %383 in 1 : vector<8x8xf32>, vector<8x8xf32>, vector<8x8xf32>, vector<8x8xf32> -> vector<8x32xf32>
    %385 = tpu.concatenate %379, %384 in 0 : vector<8x32xf32>, vector<8x32xf32> -> vector<16x32xf32>
    %386 = arith.truncf %385 : vector<16x32xf32> to vector<16x32xbf16>
    %cst_89 = arith.constant dense<0.000000e+00> : vector<16x128xf32>
    %387 = tpu.matmul %386, %309, %cst_89 {dimension_numbers = #tpu.dot_dimension_numbers<[1], [0], [0], [1], [0, 0, 1, 1], [], []>} : vector<16x32xbf16>, vector<32x128xbf16>, vector<16x128xf32> -> vector<16x128xf32>
    %388 = vector.broadcast %310 : vector<1x128xf32> to vector<16x128xf32>
    %389 = arith.addf %387, %388 : vector<16x128xf32>
    %390 = arith.addf %306, %389 : vector<16x128xf32>
    %391 = vector.extract_strided_slice %390 {offsets = [0, 0], sizes = [8, 128], strides = [1, 1]} : vector<16x128xf32> to vector<8x128xf32>
    %392 = arith.mulf %391, %391 : vector<8x128xf32>
    %cst_90 = arith.constant dense<0.000000e+00> : vector<128xf32>
    %393 = vector.multi_reduction <add>, %392, %cst_90 [0] : vector<8x128xf32> to vector<128xf32>
    %394 = vector.shape_cast %393 : vector<128xf32> to vector<1x128xf32>
    %cst_91 = arith.constant 1.000000e-24 : f32
    %395 = vector.broadcast %cst_91 : f32 to vector<1x128xf32>
    %396 = arith.maximumf %394, %395 : vector<1x128xf32>
    %397 = math.rsqrt %396 : vector<1x128xf32>
    %398 = vector.broadcast %397 : vector<1x128xf32> to vector<8x128xf32>
    %399 = arith.mulf %391, %398 : vector<8x128xf32>
    %400 = vector.extract_strided_slice %390 {offsets = [8, 0], sizes = [8, 128], strides = [1, 1]} : vector<16x128xf32> to vector<8x128xf32>
    %401 = arith.mulf %400, %400 : vector<8x128xf32>
    %cst_92 = arith.constant dense<0.000000e+00> : vector<128xf32>
    %402 = vector.multi_reduction <add>, %401, %cst_92 [0] : vector<8x128xf32> to vector<128xf32>
    %403 = vector.shape_cast %402 : vector<128xf32> to vector<1x128xf32>
    %cst_93 = arith.constant 1.000000e-24 : f32
    %404 = vector.broadcast %cst_93 : f32 to vector<1x128xf32>
    %405 = arith.maximumf %403, %404 : vector<1x128xf32>
    %406 = math.rsqrt %405 : vector<1x128xf32>
    %407 = vector.broadcast %406 : vector<1x128xf32> to vector<8x128xf32>
    %408 = arith.mulf %400, %407 : vector<8x128xf32>
    %409 = tpu.concatenate %399, %408 in 0 : vector<8x128xf32>, vector<8x128xf32> -> vector<16x128xf32>
    %c0_94 = arith.constant 0 : index
    %c0_95 = arith.constant 0 : index
    %410 = vector.load %arg19[%c0_94, %c0_95] : memref<128x128xbf16, #tpu.memory_space<vmem>>, vector<128x128xbf16>
    %c0_96 = arith.constant 0 : index
    %c0_97 = arith.constant 0 : index
    %411 = vector.load %arg20[%c0_96, %c0_97] : memref<1x128xf32, #tpu.memory_space<vmem>>, vector<1x128xf32>
    %c0_98 = arith.constant 0 : index
    %c0_99 = arith.constant 0 : index
    %412 = vector.load %arg21[%c0_98, %c0_99] : memref<128x128xbf16, #tpu.memory_space<vmem>>, vector<128x128xbf16>
    %c0_100 = arith.constant 0 : index
    %c0_101 = arith.constant 0 : index
    %413 = vector.load %arg22[%c0_100, %c0_101] : memref<1x128xf32, #tpu.memory_space<vmem>>, vector<1x128xf32>
    %414 = arith.truncf %409 : vector<16x128xf32> to vector<16x128xbf16>
    %cst_102 = arith.constant dense<0.000000e+00> : vector<16x128xf32>
    %415 = tpu.matmul %414, %410, %cst_102 {dimension_numbers = #tpu.dot_dimension_numbers<[1], [0], [0], [1], [0, 0, 1, 1], [], []>} : vector<16x128xbf16>, vector<128x128xbf16>, vector<16x128xf32> -> vector<16x128xf32>
    %416 = vector.broadcast %411 : vector<1x128xf32> to vector<16x128xf32>
    %417 = arith.addf %415, %416 : vector<16x128xf32>
    %cst_103 = arith.constant 0.000000e+00 : f32
    %418 = vector.broadcast %cst_103 : f32 to vector<16x128xf32>
    %419 = arith.maximumf %417, %418 : vector<16x128xf32>
    %420 = arith.truncf %419 : vector<16x128xf32> to vector<16x128xbf16>
    %cst_104 = arith.constant dense<0.000000e+00> : vector<16x128xf32>
    %421 = tpu.matmul %420, %412, %cst_104 {dimension_numbers = #tpu.dot_dimension_numbers<[1], [0], [0], [1], [0, 0, 1, 1], [], []>} : vector<16x128xbf16>, vector<128x128xbf16>, vector<16x128xf32> -> vector<16x128xf32>
    %422 = vector.broadcast %413 : vector<1x128xf32> to vector<16x128xf32>
    %423 = arith.addf %421, %422 : vector<16x128xf32>
    %424 = arith.addf %409, %423 : vector<16x128xf32>
    %425 = vector.extract_strided_slice %424 {offsets = [0, 0], sizes = [8, 128], strides = [1, 1]} : vector<16x128xf32> to vector<8x128xf32>
    %426 = arith.mulf %425, %425 : vector<8x128xf32>
    %cst_105 = arith.constant dense<0.000000e+00> : vector<128xf32>
    %427 = vector.multi_reduction <add>, %426, %cst_105 [0] : vector<8x128xf32> to vector<128xf32>
    %428 = vector.shape_cast %427 : vector<128xf32> to vector<1x128xf32>
    %cst_106 = arith.constant 1.000000e-24 : f32
    %429 = vector.broadcast %cst_106 : f32 to vector<1x128xf32>
    %430 = arith.maximumf %428, %429 : vector<1x128xf32>
    %431 = math.rsqrt %430 : vector<1x128xf32>
    %432 = vector.broadcast %431 : vector<1x128xf32> to vector<8x128xf32>
    %433 = arith.mulf %425, %432 : vector<8x128xf32>
    %434 = vector.extract_strided_slice %424 {offsets = [8, 0], sizes = [8, 128], strides = [1, 1]} : vector<16x128xf32> to vector<8x128xf32>
    %435 = arith.mulf %434, %434 : vector<8x128xf32>
    %cst_107 = arith.constant dense<0.000000e+00> : vector<128xf32>
    %436 = vector.multi_reduction <add>, %435, %cst_107 [0] : vector<8x128xf32> to vector<128xf32>
    %437 = vector.shape_cast %436 : vector<128xf32> to vector<1x128xf32>
    %cst_108 = arith.constant 1.000000e-24 : f32
    %438 = vector.broadcast %cst_108 : f32 to vector<1x128xf32>
    %439 = arith.maximumf %437, %438 : vector<1x128xf32>
    %440 = math.rsqrt %439 : vector<1x128xf32>
    %441 = vector.broadcast %440 : vector<1x128xf32> to vector<8x128xf32>
    %442 = arith.mulf %434, %441 : vector<8x128xf32>
    %443 = tpu.concatenate %433, %442 in 0 : vector<8x128xf32>, vector<8x128xf32> -> vector<16x128xf32>
    %c0_109 = arith.constant 0 : index
    %c0_110 = arith.constant 0 : index
    %444 = vector.load %arg23[%c0_109, %c0_110] : memref<128x128xbf16, #tpu.memory_space<vmem>>, vector<128x128xbf16>
    %c0_111 = arith.constant 0 : index
    %c0_112 = arith.constant 0 : index
    %445 = vector.load %arg24[%c0_111, %c0_112] : memref<1x128xf32, #tpu.memory_space<vmem>>, vector<1x128xf32>
    %446 = arith.truncf %443 : vector<16x128xf32> to vector<16x128xbf16>
    %cst_113 = arith.constant dense<0.000000e+00> : vector<16x128xf32>
    %447 = tpu.matmul %446, %444, %cst_113 {dimension_numbers = #tpu.dot_dimension_numbers<[1], [0], [0], [1], [0, 0, 1, 1], [], []>} : vector<16x128xbf16>, vector<128x128xbf16>, vector<16x128xf32> -> vector<16x128xf32>
    %448 = vector.broadcast %445 : vector<1x128xf32> to vector<16x128xf32>
    %449 = arith.addf %447, %448 : vector<16x128xf32>
    %450 = vector.extract_strided_slice %449 {offsets = [0, 0], sizes = [8, 128], strides = [1, 1]} : vector<16x128xf32> to vector<8x128xf32>
    %451 = vector.extract_strided_slice %449 {offsets = [8, 0], sizes = [8, 128], strides = [1, 1]} : vector<16x128xf32> to vector<8x128xf32>
    %452 = arith.maximumf %450, %451 : vector<8x128xf32>
    %453 = arith.subf %450, %452 : vector<8x128xf32>
    %454 = math.exp %453 : vector<8x128xf32>
    %455 = arith.subf %451, %452 : vector<8x128xf32>
    %456 = math.exp %455 : vector<8x128xf32>
    %457 = arith.addf %454, %456 : vector<8x128xf32>
    %458 = arith.divf %454, %457 : vector<8x128xf32>
    %459 = arith.divf %456, %457 : vector<8x128xf32>
    %460 = tpu.concatenate %458, %459 in 0 : vector<8x128xf32>, vector<8x128xf32> -> vector<16x128xf32>
    %c0_114 = arith.constant 0 : index
    %c0_115 = arith.constant 0 : index
    %461 = vector.load %arg25[%c0_114, %c0_115] : memref<16x128xf32, #tpu.memory_space<vmem>>, vector<16x128xf32>
    tpu.vector_store %arg25[%c0_114, %c0_115], %460 {strides = array<i32>} : memref<16x128xf32, #tpu.memory_space<vmem>>, vector<16x128xf32>,
    return
  }
  func.func @transform_0(%arg0: i32) -> (i32, i32) {
    %c0_i32 = arith.constant 0 : i32
    %c0_i32_0 = arith.constant 0 : i32
    %c0_i32_1 = arith.constant 0 : i32
    return %c0_i32, %c0_i32_0 : i32, i32
  }
  func.func @transform_1(%arg0: i32) -> (i32, i32) {
    %c0_i32 = arith.constant 0 : i32
    %c0_i32_0 = arith.constant 0 : i32
    %c0_i32_1 = arith.constant 0 : i32
    return %c0_i32, %c0_i32_0 : i32, i32
  }
  func.func @transform_2(%arg0: i32) -> (i32, i32) {
    %c0_i32 = arith.constant 0 : i32
    %c0_i32_0 = arith.constant 0 : i32
    %c0_i32_1 = arith.constant 0 : i32
    return %c0_i32, %c0_i32_0 : i32, i32
  }
  func.func @transform_3(%arg0: i32) -> (i32, i32) {
    %c0_i32 = arith.constant 0 : i32
    %c0_i32_0 = arith.constant 0 : i32
    %c0_i32_1 = arith.constant 0 : i32
    return %c0_i32, %c0_i32_0 : i32, i32
  }
  func.func @transform_4(%arg0: i32) -> (i32, i32) {
    %c0_i32 = arith.constant 0 : i32
    %c0_i32_0 = arith.constant 0 : i32
    %c0_i32_1 = arith.constant 0 : i32
    return %c0_i32, %c0_i32_0 : i32, i32
  }
  func.func @transform_5(%arg0: i32) -> (i32, i32) {
    %c0_i32 = arith.constant 0 : i32
    %c0_i32_0 = arith.constant 0 : i32
    %c0_i32_1 = arith.constant 0 : i32
    return %c0_i32, %c0_i32_0 : i32, i32
  }
  func.func @transform_6(%arg0: i32) -> (i32, i32) {
    %c0_i32 = arith.constant 0 : i32
    %c0_i32_0 = arith.constant 0 : i32
    %c0_i32_1 = arith.constant 0 : i32
    return %c0_i32, %c0_i32_0 : i32, i32
  }
  func.func @transform_7(%arg0: i32) -> (i32, i32) {
    %c0_i32 = arith.constant 0 : i32
    %c0_i32_0 = arith.constant 0 : i32
    %c0_i32_1 = arith.constant 0 : i32
    return %c0_i32, %c0_i32_0 : i32, i32
  }
  func.func @transform_8(%arg0: i32) -> (i32, i32) {
    %c0_i32 = arith.constant 0 : i32
    %c0_i32_0 = arith.constant 0 : i32
    %c0_i32_1 = arith.constant 0 : i32
    return %c0_i32, %c0_i32_0 : i32, i32
  }
  func.func @transform_9(%arg0: i32) -> (i32, i32) {
    %c0_i32 = arith.constant 0 : i32
    %c0_i32_0 = arith.constant 0 : i32
    %c0_i32_1 = arith.constant 0 : i32
    return %c0_i32, %c0_i32_0 : i32, i32
  }
  func.func @transform_10(%arg0: i32) -> (i32, i32) {
    %c0_i32 = arith.constant 0 : i32
    %c0_i32_0 = arith.constant 0 : i32
    %c0_i32_1 = arith.constant 0 : i32
    return %c0_i32, %c0_i32_0 : i32, i32
  }
  func.func @transform_11(%arg0: i32) -> (i32, i32) {
    %c0_i32 = arith.constant 0 : i32
    %c0_i32_0 = arith.constant 0 : i32
    %c0_i32_1 = arith.constant 0 : i32
    return %c0_i32, %c0_i32_0 : i32, i32
  }
  func.func @transform_12(%arg0: i32) -> (i32, i32) {
    %c0_i32 = arith.constant 0 : i32
    %c0_i32_0 = arith.constant 0 : i32
    %c0_i32_1 = arith.constant 0 : i32
    return %c0_i32, %c0_i32_0 : i32, i32
  }
  func.func @transform_13(%arg0: i32) -> (i32, i32) {
    %c0_i32 = arith.constant 0 : i32
    %c0_i32_0 = arith.constant 0 : i32
    %c0_i32_1 = arith.constant 0 : i32
    return %c0_i32, %c0_i32_0 : i32, i32
  }
  func.func @transform_14(%arg0: i32) -> (i32, i32) {
    %c0_i32 = arith.constant 0 : i32
    %c0_i32_0 = arith.constant 0 : i32
    %c0_i32_1 = arith.constant 0 : i32
    return %c0_i32, %c0_i32_0 : i32, i32
  }
  func.func @transform_15(%arg0: i32) -> (i32, i32) {
    %c0_i32 = arith.constant 0 : i32
    %c0_i32_0 = arith.constant 0 : i32
    %c0_i32_1 = arith.constant 0 : i32
    return %c0_i32, %c0_i32_0 : i32, i32
  }
  func.func @transform_16(%arg0: i32) -> (i32, i32) {
    %c0_i32 = arith.constant 0 : i32
    %c0_i32_0 = arith.constant 0 : i32
    %c0_i32_1 = arith.constant 0 : i32
    return %c0_i32, %c0_i32_0 : i32, i32
  }
  func.func @transform_17(%arg0: i32) -> (i32, i32) {
    %c0_i32 = arith.constant 0 : i32
    %c0_i32_0 = arith.constant 0 : i32
    %c0_i32_1 = arith.constant 0 : i32
    return %c0_i32, %c0_i32_0 : i32, i32
  }
  func.func @transform_18(%arg0: i32) -> (i32, i32) {
    %c0_i32 = arith.constant 0 : i32
    %c0_i32_0 = arith.constant 0 : i32
    %c0_i32_1 = arith.constant 0 : i32
    return %c0_i32, %c0_i32_0 : i32, i32
  }
  func.func @transform_19(%arg0: i32) -> (i32, i32) {
    %c0_i32 = arith.constant 0 : i32
    %c0_i32_0 = arith.constant 0 : i32
    %c0_i32_1 = arith.constant 0 : i32
    return %c0_i32, %c0_i32_0 : i32, i32
  }
  func.func @transform_20(%arg0: i32) -> (i32, i32) {
    %c0_i32 = arith.constant 0 : i32
    %c0_i32_0 = arith.constant 0 : i32
    %c0_i32_1 = arith.constant 0 : i32
    return %c0_i32, %c0_i32_0 : i32, i32
  }
  func.func @transform_21(%arg0: i32) -> (i32, i32) {
    %c0_i32 = arith.constant 0 : i32
    %c0_i32_0 = arith.constant 0 : i32
    %c0_i32_1 = arith.constant 0 : i32
    return %c0_i32, %c0_i32_0 : i32, i32
  }
  func.func @transform_22(%arg0: i32) -> (i32, i32) {
    %c0_i32 = arith.constant 0 : i32
    %c0_i32_0 = arith.constant 0 : i32
    %c0_i32_1 = arith.constant 0 : i32
    return %c0_i32, %c0_i32_0 : i32, i32
  }
  func.func @transform_23(%arg0: i32) -> (i32, i32) {
    %c0_i32 = arith.constant 0 : i32
    %c0_i32_0 = arith.constant 0 : i32
    %c0_i32_1 = arith.constant 0 : i32
    return %c0_i32, %c0_i32_0 : i32, i32
  }
  func.func @transform_24(%arg0: i32) -> (i32, i32) {
    %c0_i32 = arith.constant 0 : i32
    %c0_i32_0 = arith.constant 0 : i32
    %c0_i32_1 = arith.constant 0 : i32
    return %c0_i32, %c0_i32_0 : i32, i32
  }
}

</mosaic_0001>

<llo_original>
// kernel: transformer_forward.1
$region0: #{transformer_forward.1}
  #allocation0 [shape = 'u32[]', space=smem, size = 0x4, offset = 0x4, fixed_abs, tag = 'smem constant byte address 0x4 - core index']
  #allocation1 [shape = 'u32[144,128]{1,0:T(1,128)}', space=vmem, size = 0x12000, scoped, tag = 'internal scratch']
  %s0 = inlined_call_operand.vmem [shape: f32[16,128], index: 0, kind: input, shape index: {}]
  %s1 = inlined_call_operand.vmem [shape: f32[16,128], index: 1, kind: input, shape index: {}]
  %s2 = inlined_call_operand.vmem [shape: bf16[128,96], index: 2, kind: input, shape index: {}]
  %s3 = inlined_call_operand.vmem [shape: f32[1,96], index: 3, kind: input, shape index: {}]
  %s4 = inlined_call_operand.vmem [shape: bf16[32,128], index: 4, kind: input, shape index: {}]
  %s5 = inlined_call_operand.vmem [shape: f32[1,128], index: 5, kind: input, shape index: {}]
  %s6 = inlined_call_operand.vmem [shape: bf16[128,128], index: 6, kind: input, shape index: {}]
  %s7 = inlined_call_operand.vmem [shape: f32[1,128], index: 7, kind: input, shape index: {}]
  %s8 = inlined_call_operand.vmem [shape: bf16[128,128], index: 8, kind: input, shape index: {}]
  %s9 = inlined_call_operand.vmem [shape: f32[1,128], index: 9, kind: input, shape index: {}]
  %s10 = inlined_call_operand.vmem [shape: bf16[128,96], index: 10, kind: input, shape index: {}]
  %s11 = inlined_call_operand.vmem [shape: f32[1,96], index: 11, kind: input, shape index: {}]
  %s12 = inlined_call_operand.vmem [shape: bf16[32,128], index: 12, kind: input, shape index: {}]
  %s13 = inlined_call_operand.vmem [shape: f32[1,128], index: 13, kind: input, shape index: {}]
  %s14 = inlined_call_operand.vmem [shape: bf16[128,96], index: 14, kind: input, shape index: {}]
  %s15 = inlined_call_operand.vmem [shape: f32[1,96], index: 15, kind: input, shape index: {}]
  %s16 = inlined_call_operand.vmem [shape: bf16[32,128], index: 16, kind: input, shape index: {}]
  %s17 = inlined_call_operand.vmem [shape: f32[1,128], index: 17, kind: input, shape index: {}]
  %s18 = inlined_call_operand.vmem [shape: bf16[128,128], index: 18, kind: input, shape index: {}]
  %s19 = inlined_call_operand.vmem [shape: f32[1,128], index: 19, kind: input, shape index: {}]
  %s20 = inlined_call_operand.vmem [shape: bf16[128,128], index: 20, kind: input, shape index: {}]
  %s21 = inlined_call_operand.vmem [shape: f32[1,128], index: 21, kind: input, shape index: {}]
  %s22 = inlined_call_operand.vmem [shape: bf16[128,128], index: 22, kind: input, shape index: {}]
  %s23 = inlined_call_operand.vmem [shape: f32[1,128], index: 23, kind: input, shape index: {}]
  %s24 = inlined_call_operand.hbm [shape: f32[16,128], index: 24, kind: output, shape index: {}]
  %s25 = sld [smem:[#allocation0]]
  $region106: #{transformer_forward.1} parent=0
    _
  %s27 = ssub.s32 1, %s25
  %s28 = scalar_select 0, %s27, %s25
  $region1: #{transformer_forward.1} parent=0
    #allocation2 [shape = 'u8[8192]{0}', space=vmem, size = 0x2000, scoped, tag = 'output window, operand 0, single buffered']
    #allocation3 [shape = 's32[1]{0}', space=sflag, size = 0x4, scoped, tag = 'scoped memory for transformer_forward.1']
    %29 = vsyncpa [#allocation3], 0
    // Predicated region
    $region2: #{transformer_forward.1} parent=1 // pred_check
      _
    $region3: #{transformer_forward.1} parent=1 // pred_check_branch
      %31 = sbr.rel (0) target = $region5
    $region4: #{transformer_forward.1} parent=1 // pred_region
      _
    $region5: #{transformer_forward.1} parent=1 // pred_fallthru
      _
    // Predicated region
    $region6: #{transformer_forward.1} parent=1 // pred_check
      _
    $region7: #{transformer_forward.1} parent=1 // pred_check_branch
      %33 = sbr.rel (0) target = $region9
    $region8: #{transformer_forward.1} parent=1 // pred_region
      _
    $region9: #{transformer_forward.1} parent=1 // pred_fallthru
      _
    // Predicated region
    $region10: #{transformer_forward.1} parent=1 // pred_check
      _
    $region11: #{transformer_forward.1} parent=1 // pred_check_branch
      %35 = sbr.rel (0) target = $region13
    $region12: #{transformer_forward.1} parent=1 // pred_region
      _
    $region13: #{transformer_forward.1} parent=1 // pred_fallthru
      _
    // Predicated region
    $region14: #{transformer_forward.1} parent=1 // pred_check
      _
    $region15: #{transformer_forward.1} parent=1 // pred_check_branch
      %37 = sbr.rel (0) target = $region17
    $region16: #{transformer_forward.1} parent=1 // pred_region
      _
    $region17: #{transformer_forward.1} parent=1 // pred_fallthru
      _
    // Predicated region
    $region18: #{transformer_forward.1} parent=1 // pred_check
      _
    $region19: #{transformer_forward.1} parent=1 // pred_check_branch
      %39 = sbr.rel (0) target = $region21
    $region20: #{transformer_forward.1} parent=1 // pred_region
      _
    $region21: #{transformer_forward.1} parent=1 // pred_fallthru
      _
    // Predicated region
    $region22: #{transformer_forward.1} parent=1 // pred_check
      _
    $region23: #{transformer_forward.1} parent=1 // pred_check_branch
      %41 = sbr.rel (0) target = $region25
    $region24: #{transformer_forward.1} parent=1 // pred_region
      _
    $region25: #{transformer_forward.1} parent=1 // pred_fallthru
      _
    // Predicated region
    $region26: #{transformer_forward.1} parent=1 // pred_check
      _
    $region27: #{transformer_forward.1} parent=1 // pred_check_branch
      %43 = sbr.rel (0) target = $region29
    $region28: #{transformer_forward.1} parent=1 // pred_region
      _
    $region29: #{transformer_forward.1} parent=1 // pred_fallthru
      _
    // Predicated region
    $region30: #{transformer_forward.1} parent=1 // pred_check
      _
    $region31: #{transformer_forward.1} parent=1 // pred_check_branch
      %45 = sbr.rel (0) target = $region33
    $region32: #{transformer_forward.1} parent=1 // pred_region
      _
    $region33: #{transformer_forward.1} parent=1 // pred_fallthru
      _
    // Predicated region
    $region34: #{transformer_forward.1} parent=1 // pred_check
      _
    $region35: #{transformer_forward.1} parent=1 // pred_check_branch
      %47 = sbr.rel (0) target = $region37
    $region36: #{transformer_forward.1} parent=1 // pred_region
      _
    $region37: #{transformer_forward.1} parent=1 // pred_fallthru
      _
    // Predicated region
    $region38: #{transformer_forward.1} parent=1 // pred_check
      _
    $region39: #{transformer_forward.1} parent=1 // pred_check_branch
      %49 = sbr.rel (0) target = $region41
    $region40: #{transformer_forward.1} parent=1 // pred_region
      _
    $region41: #{transformer_forward.1} parent=1 // pred_fallthru
      _
    // Predicated region
    $region42: #{transformer_forward.1} parent=1 // pred_check
      _
    $region43: #{transformer_forward.1} parent=1 // pred_check_branch
      %51 = sbr.rel (0) target = $region45
    $region44: #{transformer_forward.1} parent=1 // pred_region
      _
    $region45: #{transformer_forward.1} parent=1 // pred_fallthru
      _
    // Predicated region
    $region46: #{transformer_forward.1} parent=1 // pred_check
      _
    $region47: #{transformer_forward.1} parent=1 // pred_check_branch
      %53 = sbr.rel (0) target = $region49
    $region48: #{transformer_forward.1} parent=1 // pred_region
      _
    $region49: #{transformer_forward.1} parent=1 // pred_fallthru
      _
    // Predicated region
    $region50: #{transformer_forward.1} parent=1 // pred_check
      _
    $region51: #{transformer_forward.1} parent=1 // pred_check_branch
      %55 = sbr.rel (0) target = $region53
    $region52: #{transformer_forward.1} parent=1 // pred_region
      _
    $region53: #{transformer_forward.1} parent=1 // pred_fallthru
      _
    // Predicated region
    $region54: #{transformer_forward.1} parent=1 // pred_check
      _
    $region55: #{transformer_forward.1} parent=1 // pred_check_branch
      %57 = sbr.rel (0) target = $region57
    $region56: #{transformer_forward.1} parent=1 // pred_region
      _
    $region57: #{transformer_forward.1} parent=1 // pred_fallthru
      _
    // Predicated region
    $region58: #{transformer_forward.1} parent=1 // pred_check
      _
    $region59: #{transformer_forward.1} parent=1 // pred_check_branch
      %59 = sbr.rel (0) target = $region61
    $region60: #{transformer_forward.1} parent=1 // pred_region
      _
    $region61: #{transformer_forward.1} parent=1 // pred_fallthru
      _
    // Predicated region
    $region62: #{transformer_forward.1} parent=1 // pred_check
      _
    $region63: #{transformer_forward.1} parent=1 // pred_check_branch
      %61 = sbr.rel (0) target = $region65
    $region64: #{transformer_forward.1} parent=1 // pred_region
      _
    $region65: #{transformer_forward.1} parent=1 // pred_fallthru
      _
    // Predicated region
    $region66: #{transformer_forward.1} parent=1 // pred_check
      _
    $region67: #{transformer_forward.1} parent=1 // pred_check_branch
      %63 = sbr.rel (0) target = $region69
    $region68: #{transformer_forward.1} parent=1 // pred_region
      _
    $region69: #{transformer_forward.1} parent=1 // pred_fallthru
      _
    // Predicated region
    $region70: #{transformer_forward.1} parent=1 // pred_check
      _
    $region71: #{transformer_forward.1} parent=1 // pred_check_branch
      %65 = sbr.rel (0) target = $region73
    $region72: #{transformer_forward.1} parent=1 // pred_region
      _
    $region73: #{transformer_forward.1} parent=1 // pred_fallthru
      _
    // Predicated region
    $region74: #{transformer_forward.1} parent=1 // pred_check
      _
    $region75: #{transformer_forward.1} parent=1 // pred_check_branch
      %67 = sbr.rel (0) target = $region77
    $region76: #{transformer_forward.1} parent=1 // pred_region
      _
    $region77: #{transformer_forward.1} parent=1 // pred_fallthru
      _
    // Predicated region
    $region78: #{transformer_forward.1} parent=1 // pred_check
      _
    $region79: #{transformer_forward.1} parent=1 // pred_check_branch
      %69 = sbr.rel (0) target = $region81
    $region80: #{transformer_forward.1} parent=1 // pred_region
      _
    $region81: #{transformer_forward.1} parent=1 // pred_fallthru
      _
    // Predicated region
    $region82: #{transformer_forward.1} parent=1 // pred_check
      _
    $region83: #{transformer_forward.1} parent=1 // pred_check_branch
      %71 = sbr.rel (0) target = $region85
    $region84: #{transformer_forward.1} parent=1 // pred_region
      _
    $region85: #{transformer_forward.1} parent=1 // pred_fallthru
      _
    // Predicated region
    $region86: #{transformer_forward.1} parent=1 // pred_check
      _
    $region87: #{transformer_forward.1} parent=1 // pred_check_branch
      %73 = sbr.rel (0) target = $region89
    $region88: #{transformer_forward.1} parent=1 // pred_region
      _
    $region89: #{transformer_forward.1} parent=1 // pred_fallthru
      _
    // Predicated region
    $region90: #{transformer_forward.1} parent=1 // pred_check
      _
    $region91: #{transformer_forward.1} parent=1 // pred_check_branch
      %75 = sbr.rel (0) target = $region93
    $region92: #{transformer_forward.1} parent=1 // pred_region
      _
    $region93: #{transformer_forward.1} parent=1 // pred_fallthru
      _
    // Predicated region
    $region94: #{transformer_forward.1} parent=1 // pred_check
      _
    $region95: #{transformer_forward.1} parent=1 // pred_check_branch
      %77 = sbr.rel (0) target = $region97
    $region96: #{transformer_forward.1} parent=1 // pred_region
      _
    $region97: #{transformer_forward.1} parent=1 // pred_fallthru
      _
    %v79 = vld [vmem:[%s0] sm:$0xff]
    %v80 = vld [vmem:[%s0 + $0x8] sm:$0xff]
    %v81 = vld [vmem:[%s1] sm:$0xff]
    %v82 = vld [vmem:[%s1 + $0x8] sm:$0xff]
    %v83 = vlaneseq
    %v84 = vshrl.u32 %v83, 7
    %v85 = vadd.s32 %v84, 8
    %v86 = vadd.s32 %v84, 16
    %v87 = vadd.s32 %v84, 24
    %v88 = vadd.s32 %v84, 32
    %v89 = vadd.s32 %v84, 40
    %v90 = vadd.s32 %v84, 48
    %v91 = vadd.s32 %v84, 56
    %v92 = vlaneseq
    %v93 = vand.u32 %v92, 127
    %vm94 = vcmp.ge.s32.totalorder %v84, 0
    %vm95 = vcmp.ge.s32.totalorder %v85, 0
    %vm96 = vcmp.ge.s32.totalorder %v86, 0
    %vm97 = vcmp.ge.s32.totalorder %v87, 0
    %vm98 = vcmp.ge.s32.totalorder %v88, 0
    %vm99 = vcmp.ge.s32.totalorder %v89, 0
    %vm100 = vcmp.ge.s32.totalorder %v90, 0
    %vm101 = vcmp.ge.s32.totalorder %v91, 0
    %vm102 = vcmp.lt.s32.totalorder %v84, 8
    %vm103 = vcmp.lt.s32.totalorder %v85, 8
    %vm104 = vcmp.lt.s32.totalorder %v86, 8
    %vm105 = vcmp.lt.s32.totalorder %v87, 8
    %vm106 = vcmp.lt.s32.totalorder %v88, 8
    %vm107 = vcmp.lt.s32.totalorder %v89, 8
    %vm108 = vcmp.lt.s32.totalorder %v90, 8
    %vm109 = vcmp.lt.s32.totalorder %v91, 8
    %vm110 = vmand %vm94, %vm102
    %vm111 = vmand %vm95, %vm103
    %vm112 = vmand %vm96, %vm104
    %vm113 = vmand %vm97, %vm105
    %vm114 = vmand %vm98, %vm106
    %vm115 = vmand %vm99, %vm107
    %vm116 = vmand %vm100, %vm108
    %vm117 = vmand %vm101, %vm109
    %vm118 = vcmp.ge.s32.totalorder %v93, 0
    %vm119 = vmand %vm110, %vm118
    %vm120 = vmand %vm111, %vm118
    %vm121 = vmand %vm112, %vm118
    %vm122 = vmand %vm113, %vm118
    %vm123 = vmand %vm114, %vm118
    %vm124 = vmand %vm115, %vm118
    %vm125 = vmand %vm116, %vm118
    %vm126 = vmand %vm117, %vm118
    %vm127 = vcmp.lt.s32.totalorder %v93, 8
    %vm128 = vmand %vm119, %vm127
    %vm129 = vmand %vm120, %vm127
    %vm130 = vmand %vm121, %vm127
    %vm131 = vmand %vm122, %vm127
    %vm132 = vmand %vm123, %vm127
    %vm133 = vmand %vm124, %vm127
    %vm134 = vmand %vm125, %vm127
    %vm135 = vmand %vm126, %vm127
    %vm136 = vcmp.ge.s32.totalorder %v84, 8
    %vm137 = vcmp.ge.s32.totalorder %v85, 8
    %vm138 = vcmp.ge.s32.totalorder %v86, 8
    %vm139 = vcmp.ge.s32.totalorder %v87, 8
    %vm140 = vcmp.ge.s32.totalorder %v88, 8
    %vm141 = vcmp.ge.s32.totalorder %v89, 8
    %vm142 = vcmp.ge.s32.totalorder %v90, 8
    %vm143 = vcmp.ge.s32.totalorder %v91, 8
    %vm144 = vcmp.lt.s32.totalorder %v84, 16
    %vm145 = vcmp.lt.s32.totalorder %v85, 16
    %vm146 = vcmp.lt.s32.totalorder %v86, 16
    %vm147 = vcmp.lt.s32.totalorder %v87, 16
    %vm148 = vcmp.lt.s32.totalorder %v88, 16
    %vm149 = vcmp.lt.s32.totalorder %v89, 16
    %vm150 = vcmp.lt.s32.totalorder %v90, 16
    %vm151 = vcmp.lt.s32.totalorder %v91, 16
    %vm152 = vmand %vm136, %vm144
    %vm153 = vmand %vm137, %vm145
    %vm154 = vmand %vm138, %vm146
    %vm155 = vmand %vm139, %vm147
    %vm156 = vmand %vm140, %vm148
    %vm157 = vmand %vm141, %vm149
    %vm158 = vmand %vm142, %vm150
    %vm159 = vmand %vm143, %vm151
    %vm160 = vcmp.ge.s32.totalorder %v93, 8
    %vm161 = vmand %vm152, %vm160
    %vm162 = vmand %vm153, %vm160
    %vm163 = vmand %vm154, %vm160
    %vm164 = vmand %vm155, %vm160
    %vm165 = vmand %vm156, %vm160
    %vm166 = vmand %vm157, %vm160
    %vm167 = vmand %vm158, %vm160
    %vm168 = vmand %vm159, %vm160
    %vm169 = vcmp.lt.s32.totalorder %v93, 16
    %vm170 = vmand %vm161, %vm169
    %vm171 = vmand %vm162, %vm169
    %vm172 = vmand %vm163, %vm169
    %vm173 = vmand %vm164, %vm169
    %vm174 = vmand %vm165, %vm169
    %vm175 = vmand %vm166, %vm169
    %vm176 = vmand %vm167, %vm169
    %vm177 = vmand %vm168, %vm169
    %vm178 = vmor %vm128, %vm170
    %vm179 = vmor %vm129, %vm171
    %vm180 = vmor %vm130, %vm172
    %vm181 = vmor %vm131, %vm173
    %vm182 = vmor %vm132, %vm174
    %vm183 = vmor %vm133, %vm175
    %vm184 = vmor %vm134, %vm176
    %vm185 = vmor %vm135, %vm177
    %vm186 = vcmp.ge.s32.totalorder %v84, 16
    %vm187 = vcmp.ge.s32.totalorder %v85, 16
    %vm188 = vcmp.ge.s32.totalorder %v86, 16
    %vm189 = vcmp.ge.s32.totalorder %v87, 16
    %vm190 = vcmp.ge.s32.totalorder %v88, 16
    %vm191 = vcmp.ge.s32.totalorder %v89, 16
    %vm192 = vcmp.ge.s32.totalorder %v90, 16
    %vm193 = vcmp.ge.s32.totalorder %v91, 16
    %vm194 = vcmp.lt.s32.totalorder %v84, 24
    %vm195 = vcmp.lt.s32.totalorder %v85, 24
    %vm196 = vcmp.lt.s32.totalorder %v86, 24
    %vm197 = vcmp.lt.s32.totalorder %v87, 24
    %vm198 = vcmp.lt.s32.totalorder %v88, 24
    %vm199 = vcmp.lt.s32.totalorder %v89, 24
    %vm200 = vcmp.lt.s32.totalorder %v90, 24
    %vm201 = vcmp.lt.s32.totalorder %v91, 24
    %vm202 = vmand %vm186, %vm194
    %vm203 = vmand %vm187, %vm195
    %vm204 = vmand %vm188, %vm196
    %vm205 = vmand %vm189, %vm197
    %vm206 = vmand %vm190, %vm198
    %vm207 = vmand %vm191, %vm199
    %vm208 = vmand %vm192, %vm200
    %vm209 = vmand %vm193, %vm201
    %vm210 = vcmp.ge.s32.totalorder %v93, 16
    %vm211 = vmand %vm202, %vm210
    %vm212 = vmand %vm203, %vm210
    %vm213 = vmand %vm204, %vm210
    %vm214 = vmand %vm205, %vm210
    %vm215 = vmand %vm206, %vm210
    %vm216 = vmand %vm207, %vm210
    %vm217 = vmand %vm208, %vm210
    %vm218 = vmand %vm209, %vm210
    %vm219 = vcmp.lt.s32.totalorder %v93, 24
    %vm220 = vmand %vm211, %vm219
    %vm221 = vmand %vm212, %vm219
    %vm222 = vmand %vm213, %vm219
    %vm223 = vmand %vm214, %vm219
    %vm224 = vmand %vm215, %vm219
    %vm225 = vmand %vm216, %vm219
    %vm226 = vmand %vm217, %vm219
    %vm227 = vmand %vm218, %vm219
    %vm228 = vmor %vm178, %vm220
    %vm229 = vmor %vm179, %vm221
    %vm230 = vmor %vm180, %vm222
    %vm231 = vmor %vm181, %vm223
    %vm232 = vmor %vm182, %vm224
    %vm233 = vmor %vm183, %vm225
    %vm234 = vmor %vm184, %vm226
    %vm235 = vmor %vm185, %vm227
    %vm236 = vcmp.ge.s32.totalorder %v84, 24
    %vm237 = vcmp.ge.s32.totalorder %v85, 24
    %vm238 = vcmp.ge.s32.totalorder %v86, 24
    %vm239 = vcmp.ge.s32.totalorder %v87, 24
    %vm240 = vcmp.ge.s32.totalorder %v88, 24
    %vm241 = vcmp.ge.s32.totalorder %v89, 24
    %vm242 = vcmp.ge.s32.totalorder %v90, 24
    %vm243 = vcmp.ge.s32.totalorder %v91, 24
    %vm244 = vcmp.lt.s32.totalorder %v84, 32
    %vm245 = vcmp.lt.s32.totalorder %v85, 32
    %vm246 = vcmp.lt.s32.totalorder %v86, 32
    %vm247 = vcmp.lt.s32.totalorder %v87, 32
    %vm248 = vcmp.lt.s32.totalorder %v88, 32
    %vm249 = vcmp.lt.s32.totalorder %v89, 32
    %vm250 = vcmp.lt.s32.totalorder %v90, 32
    %vm251 = vcmp.lt.s32.totalorder %v91, 32
    %vm252 = vmand %vm236, %vm244
    %vm253 = vmand %vm237, %vm245
    %vm254 = vmand %vm238, %vm246
    %vm255 = vmand %vm239, %vm247
    %vm256 = vmand %vm240, %vm248
    %vm257 = vmand %vm241, %vm249
    %vm258 = vmand %vm242, %vm250
    %vm259 = vmand %vm243, %vm251
    %vm260 = vcmp.ge.s32.totalorder %v93, 24
    %vm261 = vmand %vm252, %vm260
    %vm262 = vmand %vm253, %vm260
    %vm263 = vmand %vm254, %vm260
    %vm264 = vmand %vm255, %vm260
    %vm265 = vmand %vm256, %vm260
    %vm266 = vmand %vm257, %vm260
    %vm267 = vmand %vm258, %vm260
    %vm268 = vmand %vm259, %vm260
    %vm269 = vcmp.lt.s32.totalorder %v93, 32
    %vm270 = vmand %vm261, %vm269
    %vm271 = vmand %vm262, %vm269
    %vm272 = vmand %vm263, %vm269
    %vm273 = vmand %vm264, %vm269
    %vm274 = vmand %vm265, %vm269
    %vm275 = vmand %vm266, %vm269
    %vm276 = vmand %vm267, %vm269
    %vm277 = vmand %vm268, %vm269
    %vm278 = vmor %vm228, %vm270
    %vm279 = vmor %vm229, %vm271
    %vm280 = vmor %vm230, %vm272
    %vm281 = vmor %vm231, %vm273
    %vm282 = vmor %vm232, %vm274
    %vm283 = vmor %vm233, %vm275
    %vm284 = vmor %vm234, %vm276
    %vm285 = vmor %vm235, %vm277
    %vm286 = vcmp.ge.s32.totalorder %v84, 32
    %vm287 = vcmp.ge.s32.totalorder %v85, 32
    %vm288 = vcmp.ge.s32.totalorder %v86, 32
    %vm289 = vcmp.ge.s32.totalorder %v87, 32
    %vm290 = vcmp.ge.s32.totalorder %v88, 32
    %vm291 = vcmp.ge.s32.totalorder %v89, 32
    %vm292 = vcmp.ge.s32.totalorder %v90, 32
    %vm293 = vcmp.ge.s32.totalorder %v91, 32
    %vm294 = vcmp.lt.s32.totalorder %v84, 40
    %vm295 = vcmp.lt.s32.totalorder %v85, 40
    %vm296 = vcmp.lt.s32.totalorder %v86, 40
    %vm297 = vcmp.lt.s32.totalorder %v87, 40
    %vm298 = vcmp.lt.s32.totalorder %v88, 40
    %vm299 = vcmp.lt.s32.totalorder %v89, 40
    %vm300 = vcmp.lt.s32.totalorder %v90, 40
    %vm301 = vcmp.lt.s32.totalorder %v91, 40
    %vm302 = vmand %vm286, %vm294
    %vm303 = vmand %vm287, %vm295
    %vm304 = vmand %vm288, %vm296
    %vm305 = vmand %vm289, %vm297
    %vm306 = vmand %vm290, %vm298
    %vm307 = vmand %vm291, %vm299
    %vm308 = vmand %vm292, %vm300
    %vm309 = vmand %vm293, %vm301
    %vm310 = vcmp.ge.s32.totalorder %v93, 32
    %vm311 = vmand %vm302, %vm310
    %vm312 = vmand %vm303, %vm310
    %vm313 = vmand %vm304, %vm310
    %vm314 = vmand %vm305, %vm310
    %vm315 = vmand %vm306, %vm310
    %vm316 = vmand %vm307, %vm310
    %vm317 = vmand %vm308, %vm310
    %vm318 = vmand %vm309, %vm310
    %vm319 = vcmp.lt.s32.totalorder %v93, 40
    %vm320 = vmand %vm311, %vm319
    %vm321 = vmand %vm312, %vm319
    %vm322 = vmand %vm313, %vm319
    %vm323 = vmand %vm314, %vm319
    %vm324 = vmand %vm315, %vm319
    %vm325 = vmand %vm316, %vm319
    %vm326 = vmand %vm317, %vm319
    %vm327 = vmand %vm318, %vm319
    %vm328 = vmor %vm278, %vm320
    %vm329 = vmor %vm279, %vm321
    %vm330 = vmor %vm280, %vm322
    %vm331 = vmor %vm281, %vm323
    %vm332 = vmor %vm282, %vm324
    %vm333 = vmor %vm283, %vm325
    %vm334 = vmor %vm284, %vm326
    %vm335 = vmor %vm285, %vm327
    %vm336 = vcmp.ge.s32.totalorder %v84, 40
    %vm337 = vcmp.ge.s32.totalorder %v85, 40
    %vm338 = vcmp.ge.s32.totalorder %v86, 40
    %vm339 = vcmp.ge.s32.totalorder %v87, 40
    %vm340 = vcmp.ge.s32.totalorder %v88, 40
    %vm341 = vcmp.ge.s32.totalorder %v89, 40
    %vm342 = vcmp.ge.s32.totalorder %v90, 40
    %vm343 = vcmp.ge.s32.totalorder %v91, 40
    %vm344 = vcmp.lt.s32.totalorder %v84, 48
    %vm345 = vcmp.lt.s32.totalorder %v85, 48
    %vm346 = vcmp.lt.s32.totalorder %v86, 48
    %vm347 = vcmp.lt.s32.totalorder %v87, 48
    %vm348 = vcmp.lt.s32.totalorder %v88, 48
    %vm349 = vcmp.lt.s32.totalorder %v89, 48
    %vm350 = vcmp.lt.s32.totalorder %v90, 48
    %vm351 = vcmp.lt.s32.totalorder %v91, 48
    %vm352 = vmand %vm336, %vm344
    %vm353 = vmand %vm337, %vm345
    %vm354 = vmand %vm338, %vm346
    %vm355 = vmand %vm339, %vm347
    %vm356 = vmand %vm340, %vm348
    %vm357 = vmand %vm341, %vm349
    %vm358 = vmand %vm342, %vm350
    %vm359 = vmand %vm343, %vm351
    %vm360 = vcmp.ge.s32.totalorder %v93, 40
    %vm361 = vmand %vm352, %vm360
    %vm362 = vmand %vm353, %vm360
    %vm363 = vmand %vm354, %vm360
    %vm364 = vmand %vm355, %vm360
    %vm365 = vmand %vm356, %vm360
    %vm366 = vmand %vm357, %vm360
    %vm367 = vmand %vm358, %vm360
    %vm368 = vmand %vm359, %vm360
    %vm369 = vcmp.lt.s32.totalorder %v93, 48
    %vm370 = vmand %vm361, %vm369
    %vm371 = vmand %vm362, %vm369
    %vm372 = vmand %vm363, %vm369
    %vm373 = vmand %vm364, %vm369
    %vm374 = vmand %vm365, %vm369
    %vm375 = vmand %vm366, %vm369
    %vm376 = vmand %vm367, %vm369
    %vm377 = vmand %vm368, %vm369
    %vm378 = vmor %vm328, %vm370
    %vm379 = vmor %vm329, %vm371
    %vm380 = vmor %vm330, %vm372
    %vm381 = vmor %vm331, %vm373
    %vm382 = vmor %vm332, %vm374
    %vm383 = vmor %vm333, %vm375
    %vm384 = vmor %vm334, %vm376
    %vm385 = vmor %vm335, %vm377
    %vm386 = vcmp.ge.s32.totalorder %v84, 48
    %vm387 = vcmp.ge.s32.totalorder %v85, 48
    %vm388 = vcmp.ge.s32.totalorder %v86, 48
    %vm389 = vcmp.ge.s32.totalorder %v87, 48
    %vm390 = vcmp.ge.s32.totalorder %v88, 48
    %vm391 = vcmp.ge.s32.totalorder %v89, 48
    %vm392 = vcmp.ge.s32.totalorder %v90, 48
    %vm393 = vcmp.ge.s32.totalorder %v91, 48
    %vm394 = vcmp.lt.s32.totalorder %v84, 56
    %vm395 = vcmp.lt.s32.totalorder %v85, 56
    %vm396 = vcmp.lt.s32.totalorder %v86, 56
    %vm397 = vcmp.lt.s32.totalorder %v87, 56
    %vm398 = vcmp.lt.s32.totalorder %v88, 56
    %vm399 = vcmp.lt.s32.totalorder %v89, 56
    %vm400 = vcmp.lt.s32.totalorder %v90, 56
    %vm401 = vcmp.lt.s32.totalorder %v91, 56
    %vm402 = vmand %vm386, %vm394
    %vm403 = vmand %vm387, %vm395
    %vm404 = vmand %vm388, %vm396
    %vm405 = vmand %vm389, %vm397
    %vm406 = vmand %vm390, %vm398
    %vm407 = vmand %vm391, %vm399
    %vm408 = vmand %vm392, %vm400
    %vm409 = vmand %vm393, %vm401
    %vm410 = vcmp.ge.s32.totalorder %v93, 48
    %vm411 = vmand %vm402, %vm410
    %vm412 = vmand %vm403, %vm410
    %vm413 = vmand %vm404, %vm410
    %vm414 = vmand %vm405, %vm410
    %vm415 = vmand %vm406, %vm410
    %vm416 = vmand %vm407, %vm410
    %vm417 = vmand %vm408, %vm410
    %vm418 = vmand %vm409, %vm410
    %vm419 = vcmp.lt.s32.totalorder %v93, 56
    %vm420 = vmand %vm411, %vm419
    %vm421 = vmand %vm412, %vm419
    %vm422 = vmand %vm413, %vm419
    %vm423 = vmand %vm414, %vm419
    %vm424 = vmand %vm415, %vm419
    %vm425 = vmand %vm416, %vm419
    %vm426 = vmand %vm417, %vm419
    %vm427 = vmand %vm418, %vm419
    %vm428 = vmor %vm378, %vm420
    %vm429 = vmor %vm379, %vm421
    %vm430 = vmor %vm380, %vm422
    %vm431 = vmor %vm381, %vm423
    %vm432 = vmor %vm382, %vm424
    %vm433 = vmor %vm383, %vm425
    %vm434 = vmor %vm384, %vm426
    %vm435 = vmor %vm385, %vm427
    %vm436 = vcmp.ge.s32.totalorder %v84, 56
    %vm437 = vcmp.ge.s32.totalorder %v85, 56
    %vm438 = vcmp.ge.s32.totalorder %v86, 56
    %vm439 = vcmp.ge.s32.totalorder %v87, 56
    %vm440 = vcmp.ge.s32.totalorder %v88, 56
    %vm441 = vcmp.ge.s32.totalorder %v89, 56
    %vm442 = vcmp.ge.s32.totalorder %v90, 56
    %vm443 = vcmp.ge.s32.totalorder %v91, 56
    %vm444 = vcmp.lt.s32.totalorder %v84, 64
    %vm445 = vcmp.lt.s32.totalorder %v85, 64
    %vm446 = vcmp.lt.s32.totalorder %v86, 64
    %vm447 = vcmp.lt.s32.totalorder %v87, 64
    %vm448 = vcmp.lt.s32.totalorder %v88, 64
    %vm449 = vcmp.lt.s32.totalorder %v89, 64
    %vm450 = vcmp.lt.s32.totalorder %v90, 64
    %vm451 = vcmp.lt.s32.totalorder %v91, 64
    %vm452 = vmand %vm436, %vm444
    %vm453 = vmand %vm437, %vm445
    %vm454 = vmand %vm438, %vm446
    %vm455 = vmand %vm439, %vm447
    %vm456 = vmand %vm440, %vm448
    %vm457 = vmand %vm441, %vm449
    %vm458 = vmand %vm442, %vm450
    %vm459 = vmand %vm443, %vm451
    %vm460 = vcmp.ge.s32.totalorder %v93, 56
    %vm461 = vmand %vm452, %vm460
    %vm462 = vmand %vm453, %vm460
    %vm463 = vmand %vm454, %vm460
    %vm464 = vmand %vm455, %vm460
    %vm465 = vmand %vm456, %vm460
    %vm466 = vmand %vm457, %vm460
    %vm467 = vmand %vm458, %vm460
    %vm468 = vmand %vm459, %vm460
    %vm469 = vcmp.lt.s32.totalorder %v93, 64
    %vm470 = vmand %vm461, %vm469
    %vm471 = vmand %vm462, %vm469
    %vm472 = vmand %vm463, %vm469
    %vm473 = vmand %vm464, %vm469
    %vm474 = vmand %vm465, %vm469
    %vm475 = vmand %vm466, %vm469
    %vm476 = vmand %vm467, %vm469
    %vm477 = vmand %vm468, %vm469
    %vm478 = vmor %vm428, %vm470
    %vm479 = vmor %vm429, %vm471
    %vm480 = vmor %vm430, %vm472
    %vm481 = vmor %vm431, %vm473
    %vm482 = vmor %vm432, %vm474
    %vm483 = vmor %vm433, %vm475
    %vm484 = vmor %vm434, %vm476
    %vm485 = vmor %vm435, %vm477
    %vm486 = vcmp.le.s32.totalorder %v93, %v84
    %vm487 = vcmp.le.s32.totalorder %v93, %v85
    %vm488 = vcmp.le.s32.totalorder %v93, %v86
    %vm489 = vcmp.le.s32.totalorder %v93, %v87
    %vm490 = vcmp.le.s32.totalorder %v93, %v88
    %vm491 = vcmp.le.s32.totalorder %v93, %v89
    %vm492 = vcmp.le.s32.totalorder %v93, %v90
    %vm493 = vcmp.le.s32.totalorder %v93, %v91
    %vm494 = vmand %vm478, %vm486
    %vm495 = vmand %vm479, %vm487
    %vm496 = vmand %vm480, %vm488
    %vm497 = vmand %vm481, %vm489
    %vm498 = vmand %vm482, %vm490
    %vm499 = vmand %vm483, %vm491
    %vm500 = vmand %vm484, %vm492
    %vm501 = vmand %vm485, %vm493
    %v502 = vld [vmem:[%s2] sm:$0xf]
    %v503 = vld [vmem:[%s2 + $0x4] sm:$0xf]
    %v504 = vld [vmem:[%s2 + $0x8] sm:$0xf]
    %v505 = vld [vmem:[%s2 + $0xc] sm:$0xf]
    %v506 = vld [vmem:[%s2 + $0x10] sm:$0xf]
    %v507 = vld [vmem:[%s2 + $0x14] sm:$0xf]
    %v508 = vld [vmem:[%s2 + $0x18] sm:$0xf]
    %v509 = vld [vmem:[%s2 + $0x1c] sm:$0xf]
    %v510 = vld [vmem:[%s2 + $0x20] sm:$0xf]
    %v511 = vld [vmem:[%s2 + $0x24] sm:$0xf]
    %v512 = vld [vmem:[%s2 + $0x28] sm:$0xf]
    %v513 = vld [vmem:[%s2 + $0x2c] sm:$0xf]
    %v514 = vld [vmem:[%s2 + $0x30] sm:$0xf]
    %v515 = vld [vmem:[%s2 + $0x34] sm:$0xf]
    %v516 = vld [vmem:[%s2 + $0x38] sm:$0xf]
    %v517 = vld [vmem:[%s2 + $0x3c] sm:$0xf]
    %v518 = vld [vmem:[%s3] sm:$0x1]
    %v519 = vld [vmem:[%s4] sm:$0xf]
    %v520 = vld [vmem:[%s4 + $0x4] sm:$0xf]
    %v521 = vld [vmem:[%s4 + $0x8] sm:$0xf]
    %v522 = vld [vmem:[%s4 + $0xc] sm:$0xf]
    %v523 = vld [vmem:[%s5] sm:$0x1]
    %v524 = vpack.c.bf16 %v80, %v79
    %v526 = vlaneseq
    %v527 = vshrl.u32 %v526, 7
    %v528 = vsub.s32 0, %v527
    %v529 = vrot.slane %v518, %v528
    %v547 = vunpack.c.l.b16 %v502
    %v548 = vunpack.c.l.b16 %v503
    %v549 = vunpack.c.l.b16 %v504
    %v550 = vunpack.c.l.b16 %v505
    %v551 = vunpack.c.l.b16 %v506
    %v552 = vunpack.c.l.b16 %v507
    %v553 = vunpack.c.l.b16 %v508
    %v554 = vunpack.c.l.b16 %v509
    %v555 = vunpack.c.l.b16 %v510
    %v556 = vunpack.c.l.b16 %v511
    %v557 = vunpack.c.l.b16 %v512
    %v558 = vunpack.c.l.b16 %v513
    %v559 = vunpack.c.l.b16 %v514
    %v560 = vunpack.c.l.b16 %v515
    %v561 = vunpack.c.l.b16 %v516
    %v562 = vunpack.c.l.b16 %v517
    %v563 = vpack.c.b16 %v548, %v547
    %v564 = vpack.c.b16 %v550, %v549
    %v565 = vpack.c.b16 %v552, %v551
    %v566 = vpack.c.b16 %v554, %v553
    %v567 = vpack.c.b16 %v556, %v555
    %v568 = vpack.c.b16 %v558, %v557
    %v569 = vpack.c.b16 %v560, %v559
    %v570 = vpack.c.b16 %v562, %v561
    %579 = vmatprep.subr.bf16.mxu0 0
    %580 = vmatpush1.bf16.msra.mxu0 %v563
    %581 = vmatprep.subr.bf16.mxu0 0
    %582 = vmatpush1.bf16.msra.mxu0 %v564
    %583 = vmatprep.subr.bf16.mxu0 0
    %584 = vmatpush1.bf16.msra.mxu0 %v565
    %585 = vmatprep.subr.bf16.mxu0 0
    %586 = vmatpush1.bf16.msra.mxu0 %v566
    %587 = vmatprep.subr.bf16.mxu0 0
    %588 = vmatpush1.bf16.msra.mxu0 %v567
    %589 = vmatprep.subr.bf16.mxu0 0
    %590 = vmatpush1.bf16.msra.mxu0 %v568
    %591 = vmatprep.subr.bf16.mxu0 0
    %592 = vmatpush1.bf16.msra.mxu0 %v569
    %593 = vmatprep.subr.bf16.mxu0 0
    %594 = vmatpush1.bf16.msra.mxu0 %v570
    %595 = vmatprep.subr.bf16.mxu0 0
    %596 = vmatpush1.bf16.msra.mxu0 0
    %597 = vmatprep.subr.bf16.mxu0 0
    %598 = vmatpush1.bf16.msra.mxu0 0
    %599 = vmatprep.subr.bf16.mxu0 0
    %600 = vmatpush1.bf16.msra.mxu0 0
    %601 = vmatprep.subr.bf16.mxu0 0
    %602 = vmatpush1.bf16.msra.mxu0 0
    %603 = vmatprep.subr.bf16.mxu0 0
    %604 = vmatpush1.bf16.msra.mxu0 0
    %605 = vmatprep.subr.bf16.mxu0 0
    %606 = vmatpush1.bf16.msra.mxu0 0
    %607 = vmatprep.subr.bf16.mxu0 0
    %608 = vmatpush1.bf16.msra.mxu0 0
    %609 = vmatprep.subr.bf16.mxu0 0
    %610 = vmatpush1.bf16.msra.mxu0 0
    %611 = vmatprep.mubr.bf16.mxu0 0
    %612 = vmatmul.mubr.bf16.gmra.mrb[0].mxu0 %v524
    %v613 = vpop.f32.mrb[0].mxu0
    %v614 = vadd.f32 %v529, %v613
    %v615 = vpop.f32.mrb[0].mxu0
    %v616 = vpop.f32.mrb[0].mxu0
    %v617 = vadd.f32 %v529, %v616
    %v618 = vpop.f32.mrb[0].mxu0
    %619 = vdwg.mxu0
    %621 = vrot.lane.b32.xlu0 %v614, 120
    %v622 = vpop.permute.xlu0 %621
    %624 = vrot.lane.b32.xlu0 %v614, 112
    %v625 = vpop.permute.xlu0 %624
    %627 = vrot.lane.b32.xlu0 %v614, 104
    %v628 = vpop.permute.xlu0 %627
    %631 = vrot.lane.b32.xlu0 %v617, 120
    %v632 = vpop.permute.xlu0 %631
    %634 = vrot.lane.b32.xlu0 %v617, 112
    %v635 = vpop.permute.xlu0 %634
    %637 = vrot.lane.b32.xlu0 %v617, 104
    %v638 = vpop.permute.xlu0 %637
    %v640 = vpack.c.bf16 %v622, %v614
    %v641 = vpack.c.bf16 %v628, %v625
    %v642 = vpack.c.bf16 %v632, %v617
    %v643 = vpack.c.bf16 %v638, %v635
    %648 = vrot.lane.b32.xlu0 %v640, 96
    %v649 = vpop.permute.xlu0 %648
    %650 = vrot.lane.b32.xlu0 %v641, 96
    %v651 = vpop.permute.xlu0 %650
    %652 = vrot.lane.b32.xlu0 %v642, 96
    %v653 = vpop.permute.xlu0 %652
    %654 = vrot.lane.b32.xlu0 %v643, 96
    %v655 = vpop.permute.xlu0 %654
    %vm656 = vcmask 64512
    %v658 = vsel %vm656, %v640, 0
    %v661 = vsel %vm656, %v641, 0
    %v664 = vsel %vm656, %v642, 0
    %v667 = vsel %vm656, %v643, 0
    %v670 = vsel %vm656, %v649, 0
    %v673 = vsel %vm656, %v651, 0
    %v676 = vsel %vm656, %v653, 0
    %v679 = vsel %vm656, %v655, 0
    %681 = vmatprep.subr.bf16.mxu0 0
    %682 = vmatpush1.bf16.xpose.msra.mxu0 %v670
    %683 = vmatprep.subr.bf16.mxu0 0
    %684 = vmatpush1.bf16.xpose.msra.mxu0 %v673
    %685 = vmatprep.subr.bf16.mxu0 0
    %686 = vmatpush1.bf16.xpose.msra.mxu0 %v676
    %687 = vmatprep.subr.bf16.mxu0 0
    %688 = vmatpush1.bf16.xpose.msra.mxu0 %v679
    %689 = vmatprep.subr.bf16.mxu0 0
    %690 = vmatpush1.bf16.xpose.msra.mxu0 0
    %691 = vmatprep.subr.bf16.mxu0 0
    %692 = vmatpush1.bf16.xpose.msra.mxu0 0
    %693 = vmatprep.subr.bf16.mxu0 0
    %694 = vmatpush1.bf16.xpose.msra.mxu0 0
    %695 = vmatprep.subr.bf16.mxu0 0
    %696 = vmatpush1.bf16.xpose.msra.mxu0 0
    %697 = vmatprep.subr.bf16.mxu0 0
    %698 = vmatpush1.bf16.xpose.msra.mxu0 0
    %699 = vmatprep.subr.bf16.mxu0 0
    %700 = vmatpush1.bf16.xpose.msra.mxu0 0
    %701 = vmatprep.subr.bf16.mxu0 0
    %702 = vmatpush1.bf16.xpose.msra.mxu0 0
    %703 = vmatprep.subr.bf16.mxu0 0
    %704 = vmatpush1.bf16.xpose.msra.mxu0 0
    %705 = vmatprep.subr.bf16.mxu0 0
    %706 = vmatpush1.bf16.xpose.msra.mxu0 0
    %707 = vmatprep.subr.bf16.mxu0 0
    %708 = vmatpush1.bf16.xpose.msra.mxu0 0
    %709 = vmatprep.subr.bf16.mxu0 0
    %710 = vmatpush1.bf16.xpose.msra.mxu0 0
    %711 = vmatprep.subr.bf16.mxu0 0
    %712 = vmatpush1.bf16.xpose.msra.mxu0 0
    %713 = vmatprep.mubr.bf16.mxu0 0
    %714 = vmatmul.mubr.bf16.gmra.mrb[0].mxu0 %v658
    %v715 = vpop.f32.mrb[0].mxu0
    %v716 = vadd.f32 0.0, %v715
    %v717 = vpop.f32.mrb[0].mxu0
    %v718 = vpop.f32.mrb[0].mxu0
    %v719 = vadd.f32 0.0, %v718
    %v720 = vpop.f32.mrb[0].mxu0
    %721 = vmatprep.mubr.bf16.mxu0 0
    %722 = vmatmul.mubr.bf16.gmra.mrb[0].mxu0 %v661
    %v723 = vpop.f32.mrb[0].mxu0
    %v724 = vadd.f32 0.0, %v723
    %v725 = vpop.f32.mrb[0].mxu0
    %v726 = vpop.f32.mrb[0].mxu0
    %v727 = vadd.f32 0.0, %v726
    %v728 = vpop.f32.mrb[0].mxu0
    %729 = vmatprep.mubr.bf16.mxu0 0
    %730 = vmatmul.mubr.bf16.gmra.mrb[0].mxu0 %v664
    %v731 = vpop.f32.mrb[0].mxu0
    %v732 = vadd.f32 0.0, %v731
    %v733 = vpop.f32.mrb[0].mxu0
    %v734 = vpop.f32.mrb[0].mxu0
    %v735 = vadd.f32 0.0, %v734
    %v736 = vpop.f32.mrb[0].mxu0
    %737 = vmatprep.mubr.bf16.mxu0 0
    %738 = vmatmul.mubr.bf16.gmra.mrb[0].mxu0 %v667
    %v739 = vpop.f32.mrb[0].mxu0
    %v740 = vadd.f32 0.0, %v739
    %v741 = vpop.f32.mrb[0].mxu0
    %v742 = vpop.f32.mrb[0].mxu0
    %v743 = vadd.f32 0.0, %v742
    %v744 = vpop.f32.mrb[0].mxu0
    %745 = vdwg.mxu0
    %v746 = vsel %vm478, %v716, -1e+30
    %v747 = vsel %vm479, %v719, -1e+30
    %v748 = vsel %vm480, %v724, -1e+30
    %v749 = vsel %vm481, %v727, -1e+30
    %v750 = vsel %vm482, %v732, -1e+30
    %v751 = vsel %vm483, %v735, -1e+30
    %v752 = vsel %vm484, %v740, -1e+30
    %v753 = vsel %vm485, %v743, -1e+30
    %vm754 = vcmask 523264
    %v755 = vsel %vm754, %v746, -inf
    %756 = vmax.xlane.f32.xlu0 %v755
    %v757 = vpop.xlane.xlu0 %756
    %v758 = vsel %vm754, %v747, -inf
    %759 = vmax.xlane.f32.xlu0 %v758
    %v760 = vpop.xlane.xlu0 %759
    %v761 = vsel %vm754, %v748, -inf
    %762 = vmax.xlane.f32.xlu0 %v761
    %v763 = vpop.xlane.xlu0 %762
    %v764 = vsel %vm754, %v749, -inf
    %765 = vmax.xlane.f32.xlu0 %v764
    %v766 = vpop.xlane.xlu0 %765
    %v767 = vsel %vm754, %v750, -inf
    %768 = vmax.xlane.f32.xlu0 %v767
    %v769 = vpop.xlane.xlu0 %768
    %v770 = vsel %vm754, %v751, -inf
    %771 = vmax.xlane.f32.xlu0 %v770
    %v772 = vpop.xlane.xlu0 %771
    %v773 = vsel %vm754, %v752, -inf
    %774 = vmax.xlane.f32.xlu0 %v773
    %v775 = vpop.xlane.xlu0 %774
    %v776 = vsel %vm754, %v753, -inf
    %777 = vmax.xlane.f32.xlu0 %v776
    %v778 = vpop.xlane.xlu0 %777
    %v779 = vsub.f32 %v746, %v757
    %v780 = vsub.f32 %v747, %v760
    %v781 = vsub.f32 %v748, %v763
    %v782 = vsub.f32 %v749, %v766
    %v783 = vsub.f32 %v750, %v769
    %v784 = vsub.f32 %v751, %v772
    %v785 = vsub.f32 %v752, %v775
    %v786 = vsub.f32 %v753, %v778
    %v787 = vmul.f32 %v779, 1.442695
    %v788 = vpow.pop %v787
    %v789 = vmul.f32 %v780, 1.442695
    %v790 = vpow.pop %v789
    %v791 = vmul.f32 %v781, 1.442695
    %v792 = vpow.pop %v791
    %v793 = vmul.f32 %v782, 1.442695
    %v794 = vpow.pop %v793
    %v795 = vmul.f32 %v783, 1.442695
    %v796 = vpow.pop %v795
    %v797 = vmul.f32 %v784, 1.442695
    %v798 = vpow.pop %v797
    %v799 = vmul.f32 %v785, 1.442695
    %v800 = vpow.pop %v799
    %v801 = vmul.f32 %v786, 1.442695
    %v802 = vpow.pop %v801
    %v803 = vsel %vm754, %v788, 0.0
    %804 = vadd.xlane.f32.xlu0 %v803
    %v805 = vpop.xlane.xlu0 %804
    %v806 = vsel %vm754, %v790, 0.0
    %807 = vadd.xlane.f32.xlu0 %v806
    %v808 = vpop.xlane.xlu0 %807
    %v809 = vsel %vm754, %v792, 0.0
    %810 = vadd.xlane.f32.xlu0 %v809
    %v811 = vpop.xlane.xlu0 %810
    %v812 = vsel %vm754, %v794, 0.0
    %813 = vadd.xlane.f32.xlu0 %v812
    %v814 = vpop.xlane.xlu0 %813
    %v815 = vsel %vm754, %v796, 0.0
    %816 = vadd.xlane.f32.xlu0 %v815
    %v817 = vpop.xlane.xlu0 %816
    %v818 = vsel %vm754, %v798, 0.0
    %819 = vadd.xlane.f32.xlu0 %v818
    %v820 = vpop.xlane.xlu0 %819
    %v821 = vsel %vm754, %v800, 0.0
    %822 = vadd.xlane.f32.xlu0 %v821
    %v823 = vpop.xlane.xlu0 %822
    %v824 = vsel %vm754, %v802, 0.0
    %825 = vadd.xlane.f32.xlu0 %v824
    %v826 = vpop.xlane.xlu0 %825
    %v827 = vrcp.pop %v805
    %v828 = vmul.f32 %v788, %v827
    %v829 = vrcp.pop %v808
    %v830 = vmul.f32 %v790, %v829
    %v831 = vrcp.pop %v811
    %v832 = vmul.f32 %v792, %v831
    %v833 = vrcp.pop %v814
    %v834 = vmul.f32 %v794, %v833
    %v835 = vrcp.pop %v817
    %v836 = vmul.f32 %v796, %v835
    %v837 = vrcp.pop %v820
    %v838 = vmul.f32 %v798, %v837
    %v839 = vrcp.pop %v823
    %v840 = vmul.f32 %v800, %v839
    %v841 = vrcp.pop %v826
    %v842 = vmul.f32 %v802, %v841
    %v843 = vpack.c.bf16 %v830, %v828
    %v844 = vpack.c.bf16 %v834, %v832
    %v845 = vpack.c.bf16 %v838, %v836
    %v846 = vpack.c.bf16 %v842, %v840
    %847 = vrot.lane.b32.xlu0 %v640, 64
    %v848 = vpop.permute.xlu0 %847
    %849 = vrot.lane.b32.xlu0 %v641, 64
    %v850 = vpop.permute.xlu0 %849
    %851 = vrot.lane.b32.xlu0 %v642, 64
    %v852 = vpop.permute.xlu0 %851
    %853 = vrot.lane.b32.xlu0 %v643, 64
    %v854 = vpop.permute.xlu0 %853
    %v860 = vsel %vm754, %v843, 0
    %v863 = vsel %vm754, %v844, 0
    %v866 = vsel %vm754, %v845, 0
    %v869 = vsel %vm754, %v846, 0
    %871 = vmatprep.subr.bf16.mxu0 0
    %872 = vmatpush1.bf16.msra.mxu0 %v848
    %873 = vmatprep.subr.bf16.mxu0 0
    %874 = vmatpush1.bf16.msra.mxu0 %v850
    %875 = vmatprep.subr.bf16.mxu0 0
    %876 = vmatpush1.bf16.msra.mxu0 %v852
    %877 = vmatprep.subr.bf16.mxu0 0
    %878 = vmatpush1.bf16.msra.mxu0 %v854
    %879 = vmatprep.subr.bf16.mxu0 0
    %880 = vmatpush1.bf16.msra.mxu0 0
    %881 = vmatprep.subr.bf16.mxu0 0
    %882 = vmatpush1.bf16.msra.mxu0 0
    %883 = vmatprep.subr.bf16.mxu0 0
    %884 = vmatpush1.bf16.msra.mxu0 0
    %885 = vmatprep.subr.bf16.mxu0 0
    %886 = vmatpush1.bf16.msra.mxu0 0
    %887 = vmatprep.subr.bf16.mxu0 0
    %888 = vmatpush1.bf16.msra.mxu0 0
    %889 = vmatprep.subr.bf16.mxu0 0
    %890 = vmatpush1.bf16.msra.mxu0 0
    %891 = vmatprep.subr.bf16.mxu0 0
    %892 = vmatpush1.bf16.msra.mxu0 0
    %893 = vmatprep.subr.bf16.mxu0 0
    %894 = vmatpush1.bf16.msra.mxu0 0
    %895 = vmatprep.subr.bf16.mxu0 0
    %896 = vmatpush1.bf16.msra.mxu0 0
    %897 = vmatprep.subr.bf16.mxu0 0
    %898 = vmatpush1.bf16.msra.mxu0 0
    %899 = vmatprep.subr.bf16.mxu0 0
    %900 = vmatpush1.bf16.msra.mxu0 0
    %901 = vmatprep.subr.bf16.mxu0 0
    %902 = vmatpush1.bf16.msra.mxu0 0
    %903 = vmatprep.mubr.bf16.mxu0 0
    %904 = vmatmul.mubr.bf16.gmra.mrb[0].mxu0 %v860
    %v905 = vpop.f32.mrb[0].mxu0
    %v906 = vadd.f32 0.0, %v905
    %v907 = vpop.f32.mrb[0].mxu0
    %v908 = vpop.f32.mrb[0].mxu0
    %v909 = vadd.f32 0.0, %v908
    %v910 = vpop.f32.mrb[0].mxu0
    %911 = vmatprep.mubr.bf16.mxu0 0
    %912 = vmatmul.mubr.bf16.gmra.mrb[0].mxu0 %v863
    %v913 = vpop.f32.mrb[0].mxu0
    %v914 = vadd.f32 0.0, %v913
    %v915 = vpop.f32.mrb[0].mxu0
    %v916 = vpop.f32.mrb[0].mxu0
    %v917 = vadd.f32 0.0, %v916
    %v918 = vpop.f32.mrb[0].mxu0
    %919 = vmatprep.mubr.bf16.mxu0 0
    %920 = vmatmul.mubr.bf16.gmra.mrb[0].mxu0 %v866
    %v921 = vpop.f32.mrb[0].mxu0
    %v922 = vadd.f32 0.0, %v921
    %v923 = vpop.f32.mrb[0].mxu0
    %v924 = vpop.f32.mrb[0].mxu0
    %v925 = vadd.f32 0.0, %v924
    %v926 = vpop.f32.mrb[0].mxu0
    %927 = vmatprep.mubr.bf16.mxu0 0
    %928 = vmatmul.mubr.bf16.gmra.mrb[0].mxu0 %v869
    %v929 = vpop.f32.mrb[0].mxu0
    %v930 = vadd.f32 0.0, %v929
    %v931 = vpop.f32.mrb[0].mxu0
    %v932 = vpop.f32.mrb[0].mxu0
    %v933 = vadd.f32 0.0, %v932
    %v934 = vpop.f32.mrb[0].mxu0
    %935 = vdwg.mxu0
    %937 = vrot.lane.b32.xlu0 %v909, 8
    %v938 = vpop.permute.xlu0 %937
    %941 = vrot.lane.b32.xlu0 %v914, 16
    %v942 = vpop.permute.xlu0 %941
    %945 = vrot.lane.b32.xlu0 %v917, 24
    %v946 = vpop.permute.xlu0 %945
    %v948 = vsel %vm656, %v906, %v938
    %vm949 = vcmask 130048
    %v950 = vsel %vm949, %v948, %v942
    %vm951 = vcmask 195584
    %v952 = vsel %vm951, %v950, %v946
    %954 = vrot.lane.b32.xlu0 %v925, 8
    %v955 = vpop.permute.xlu0 %954
    %958 = vrot.lane.b32.xlu0 %v930, 16
    %v959 = vpop.permute.xlu0 %958
    %962 = vrot.lane.b32.xlu0 %v933, 24
    %v963 = vpop.permute.xlu0 %962
    %v965 = vsel %vm656, %v922, %v955
    %v966 = vsel %vm949, %v965, %v959
    %v967 = vsel %vm951, %v966, %v963
    %v968 = vpack.c.bf16 %v967, %v952
    %v970 = vlaneseq
    %v971 = vshrl.u32 %v970, 7
    %v972 = vsub.s32 0, %v971
    %v973 = vrot.slane %v523, %v972
    %v979 = vunpack.c.l.b16 %v519
    %v980 = vunpack.c.l.b16 %v520
    %v981 = vunpack.c.l.b16 %v521
    %v982 = vunpack.c.l.b16 %v522
    %v983 = vpack.c.b16 %v980, %v979
    %v984 = vpack.c.b16 %v982, %v981
    %vm987 = vcmask 261120
    %v989 = vsel %vm987, %v968, 0
    %991 = vmatprep.subr.bf16.mxu0 0
    %992 = vmatpush1.bf16.msra.mxu0 %v983
    %993 = vmatprep.subr.bf16.mxu0 0
    %994 = vmatpush1.bf16.msra.mxu0 %v984
    %995 = vmatprep.subr.bf16.mxu0 0
    %996 = vmatpush1.bf16.msra.mxu0 0
    %997 = vmatprep.subr.bf16.mxu0 0
    %998 = vmatpush1.bf16.msra.mxu0 0
    %999 = vmatprep.subr.bf16.mxu0 0
    %1000 = vmatpush1.bf16.msra.mxu0 0
    %1001 = vmatprep.subr.bf16.mxu0 0
    %1002 = vmatpush1.bf16.msra.mxu0 0
    %1003 = vmatprep.subr.bf16.mxu0 0
    %1004 = vmatpush1.bf16.msra.mxu0 0
    %1005 = vmatprep.subr.bf16.mxu0 0
    %1006 = vmatpush1.bf16.msra.mxu0 0
    %1007 = vmatprep.subr.bf16.mxu0 0
    %1008 = vmatpush1.bf16.msra.mxu0 0
    %1009 = vmatprep.subr.bf16.mxu0 0
    %1010 = vmatpush1.bf16.msra.mxu0 0
    %1011 = vmatprep.subr.bf16.mxu0 0
    %1012 = vmatpush1.bf16.msra.mxu0 0
    %1013 = vmatprep.subr.bf16.mxu0 0
    %1014 = vmatpush1.bf16.msra.mxu0 0
    %1015 = vmatprep.subr.bf16.mxu0 0
    %1016 = vmatpush1.bf16.msra.mxu0 0
    %1017 = vmatprep.subr.bf16.mxu0 0
    %1018 = vmatpush1.bf16.msra.mxu0 0
    %1019 = vmatprep.subr.bf16.mxu0 0
    %1020 = vmatpush1.bf16.msra.mxu0 0
    %1021 = vmatprep.subr.bf16.mxu0 0
    %1022 = vmatpush1.bf16.msra.mxu0 0
    %1023 = vmatprep.mubr.bf16.mxu0 0
    %1024 = vmatmul.mubr.bf16.gmra.mrb[0].mxu0 %v989
    %v1025 = vpop.f32.mrb[0].mxu0
    %v1026 = vadd.f32 %v973, %v1025
    %v1027 = vpop.f32.mrb[0].mxu0
    %v1028 = vpop.f32.mrb[0].mxu0
    %v1029 = vadd.f32 %v973, %v1028
    %v1030 = vpop.f32.mrb[0].mxu0
    %1031 = vdwg.mxu0
    %v1032 = vadd.f32 %v79, %v1026
    %v1033 = vadd.f32 %v80, %v1029
    %v1034 = vmul.f32 %v1032, %v1032
    %v1035 = vrot.slane %v1034, 4
    %v1036 = vadd.f32 %v1034, %v1035
    %v1037 = vrot.slane %v1036, 2
    %v1038 = vadd.f32 %v1036, %v1037
    %v1039 = vrot.slane %v1038, 1
    %v1040 = vadd.f32 %v1038, %v1039
    %v1041 = vmax.f32 %v1040, 1e-24
    %v1042 = vrsqrt.pop %v1041
    %v1043 = vmul.f32 %v1032, %v1042
    %v1044 = vmul.f32 %v1033, %v1033
    %v1045 = vrot.slane %v1044, 4
    %v1046 = vadd.f32 %v1044, %v1045
    %v1047 = vrot.slane %v1046, 2
    %v1048 = vadd.f32 %v1046, %v1047
    %v1049 = vrot.slane %v1048, 1
    %v1050 = vadd.f32 %v1048, %v1049
    %v1051 = vmax.f32 %v1050, 1e-24
    %v1052 = vrsqrt.pop %v1051
    %v1053 = vmul.f32 %v1033, %v1052
    %v1054 = vld [vmem:[%s6] sm:$0xf]
    %v1055 = vld [vmem:[%s6 + $0x4] sm:$0xf]
    %v1056 = vld [vmem:[%s6 + $0x8] sm:$0xf]
    %v1057 = vld [vmem:[%s6 + $0xc] sm:$0xf]
    %v1058 = vld [vmem:[%s6 + $0x10] sm:$0xf]
    %v1059 = vld [vmem:[%s6 + $0x14] sm:$0xf]
    %v1060 = vld [vmem:[%s6 + $0x18] sm:$0xf]
    %v1061 = vld [vmem:[%s6 + $0x1c] sm:$0xf]
    %v1062 = vld [vmem:[%s6 + $0x20] sm:$0xf]
    %v1063 = vld [vmem:[%s6 + $0x24] sm:$0xf]
    %v1064 = vld [vmem:[%s6 + $0x28] sm:$0xf]
    %v1065 = vld [vmem:[%s6 + $0x2c] sm:$0xf]
    %v1066 = vld [vmem:[%s6 + $0x30] sm:$0xf]
    %v1067 = vld [vmem:[%s6 + $0x34] sm:$0xf]
    %v1068 = vld [vmem:[%s6 + $0x38] sm:$0xf]
    %v1069 = vld [vmem:[%s6 + $0x3c] sm:$0xf]
    %v1070 = vld [vmem:[%s7] sm:$0x1]
    %v1071 = vld [vmem:[%s8] sm:$0xf]
    %v1072 = vld [vmem:[%s8 + $0x4] sm:$0xf]
    %v1073 = vld [vmem:[%s8 + $0x8] sm:$0xf]
    %v1074 = vld [vmem:[%s8 + $0xc] sm:$0xf]
    %v1075 = vld [vmem:[%s8 + $0x10] sm:$0xf]
    %v1076 = vld [vmem:[%s8 + $0x14] sm:$0xf]
    %v1077 = vld [vmem:[%s8 + $0x18] sm:$0xf]
    %v1078 = vld [vmem:[%s8 + $0x1c] sm:$0xf]
    %v1079 = vld [vmem:[%s8 + $0x20] sm:$0xf]
    %v1080 = vld [vmem:[%s8 + $0x24] sm:$0xf]
    %v1081 = vld [vmem:[%s8 + $0x28] sm:$0xf]
    %v1082 = vld [vmem:[%s8 + $0x2c] sm:$0xf]
    %v1083 = vld [vmem:[%s8 + $0x30] sm:$0xf]
    %v1084 = vld [vmem:[%s8 + $0x34] sm:$0xf]
    %v1085 = vld [vmem:[%s8 + $0x38] sm:$0xf]
    %v1086 = vld [vmem:[%s8 + $0x3c] sm:$0xf]
    %v1087 = vld [vmem:[%s9] sm:$0x1]
    %v1088 = vpack.c.bf16 %v1053, %v1043
    %v1090 = vlaneseq
    %v1091 = vshrl.u32 %v1090, 7
    %v1092 = vsub.s32 0, %v1091
    %v1093 = vrot.slane %v1070, %v1092
    %v1111 = vunpack.c.l.b16 %v1054
    %v1112 = vunpack.c.l.b16 %v1055
    %v1113 = vunpack.c.l.b16 %v1056
    %v1114 = vunpack.c.l.b16 %v1057
    %v1115 = vunpack.c.l.b16 %v1058
    %v1116 = vunpack.c.l.b16 %v1059
    %v1117 = vunpack.c.l.b16 %v1060
    %v1118 = vunpack.c.l.b16 %v1061
    %v1119 = vunpack.c.l.b16 %v1062
    %v1120 = vunpack.c.l.b16 %v1063
    %v1121 = vunpack.c.l.b16 %v1064
    %v1122 = vunpack.c.l.b16 %v1065
    %v1123 = vunpack.c.l.b16 %v1066
    %v1124 = vunpack.c.l.b16 %v1067
    %v1125 = vunpack.c.l.b16 %v1068
    %v1126 = vunpack.c.l.b16 %v1069
    %v1127 = vpack.c.b16 %v1112, %v1111
    %v1128 = vpack.c.b16 %v1114, %v1113
    %v1129 = vpack.c.b16 %v1116, %v1115
    %v1130 = vpack.c.b16 %v1118, %v1117
    %v1131 = vpack.c.b16 %v1120, %v1119
    %v1132 = vpack.c.b16 %v1122, %v1121
    %v1133 = vpack.c.b16 %v1124, %v1123
    %v1134 = vpack.c.b16 %v1126, %v1125
    %1143 = vmatprep.subr.bf16.mxu0 0
    %1144 = vmatpush1.bf16.msra.mxu0 %v1127
    %1145 = vmatprep.subr.bf16.mxu0 0
    %1146 = vmatpush1.bf16.msra.mxu0 %v1128
    %1147 = vmatprep.subr.bf16.mxu0 0
    %1148 = vmatpush1.bf16.msra.mxu0 %v1129
    %1149 = vmatprep.subr.bf16.mxu0 0
    %1150 = vmatpush1.bf16.msra.mxu0 %v1130
    %1151 = vmatprep.subr.bf16.mxu0 0
    %1152 = vmatpush1.bf16.msra.mxu0 %v1131
    %1153 = vmatprep.subr.bf16.mxu0 0
    %1154 = vmatpush1.bf16.msra.mxu0 %v1132
    %1155 = vmatprep.subr.bf16.mxu0 0
    %1156 = vmatpush1.bf16.msra.mxu0 %v1133
    %1157 = vmatprep.subr.bf16.mxu0 0
    %1158 = vmatpush1.bf16.msra.mxu0 %v1134
    %1159 = vmatprep.subr.bf16.mxu0 0
    %1160 = vmatpush1.bf16.msra.mxu0 0
    %1161 = vmatprep.subr.bf16.mxu0 0
    %1162 = vmatpush1.bf16.msra.mxu0 0
    %1163 = vmatprep.subr.bf16.mxu0 0
    %1164 = vmatpush1.bf16.msra.mxu0 0
    %1165 = vmatprep.subr.bf16.mxu0 0
    %1166 = vmatpush1.bf16.msra.mxu0 0
    %1167 = vmatprep.subr.bf16.mxu0 0
    %1168 = vmatpush1.bf16.msra.mxu0 0
    %1169 = vmatprep.subr.bf16.mxu0 0
    %1170 = vmatpush1.bf16.msra.mxu0 0
    %1171 = vmatprep.subr.bf16.mxu0 0
    %1172 = vmatpush1.bf16.msra.mxu0 0
    %1173 = vmatprep.subr.bf16.mxu0 0
    %1174 = vmatpush1.bf16.msra.mxu0 0
    %1175 = vmatprep.mubr.bf16.mxu0 0
    %1176 = vmatmul.mubr.bf16.gmra.mrb[0].mxu0 %v1088
    %v1177 = vpop.f32.mrb[0].mxu0
    %v1178 = vadd.f32 %v1093, %v1177
    %v1179 = vpop.f32.mrb[0].mxu0
    %v1180 = vpop.f32.mrb[0].mxu0
    %v1181 = vadd.f32 %v1093, %v1180
    %v1182 = vpop.f32.mrb[0].mxu0
    %1183 = vdwg.mxu0
    %v1184 = vmax.f32 %v1178, 0.0
    %v1185 = vmax.f32 %v1181, 0.0
    %v1186 = vpack.c.bf16 %v1185, %v1184
    %v1188 = vlaneseq
    %v1189 = vshrl.u32 %v1188, 7
    %v1190 = vsub.s32 0, %v1189
    %v1191 = vrot.slane %v1087, %v1190
    %v1209 = vunpack.c.l.b16 %v1071
    %v1210 = vunpack.c.l.b16 %v1072
    %v1211 = vunpack.c.l.b16 %v1073
    %v1212 = vunpack.c.l.b16 %v1074
    %v1213 = vunpack.c.l.b16 %v1075
    %v1214 = vunpack.c.l.b16 %v1076
    %v1215 = vunpack.c.l.b16 %v1077
    %v1216 = vunpack.c.l.b16 %v1078
    %v1217 = vunpack.c.l.b16 %v1079
    %v1218 = vunpack.c.l.b16 %v1080
    %v1219 = vunpack.c.l.b16 %v1081
    %v1220 = vunpack.c.l.b16 %v1082
    %v1221 = vunpack.c.l.b16 %v1083
    %v1222 = vunpack.c.l.b16 %v1084
    %v1223 = vunpack.c.l.b16 %v1085
    %v1224 = vunpack.c.l.b16 %v1086
    %v1225 = vpack.c.b16 %v1210, %v1209
    %v1226 = vpack.c.b16 %v1212, %v1211
    %v1227 = vpack.c.b16 %v1214, %v1213
    %v1228 = vpack.c.b16 %v1216, %v1215
    %v1229 = vpack.c.b16 %v1218, %v1217
    %v1230 = vpack.c.b16 %v1220, %v1219
    %v1231 = vpack.c.b16 %v1222, %v1221
    %v1232 = vpack.c.b16 %v1224, %v1223
    %1241 = vmatprep.subr.bf16.mxu0 0
    %1242 = vmatpush1.bf16.msra.mxu0 %v1225
    %1243 = vmatprep.subr.bf16.mxu0 0
    %1244 = vmatpush1.bf16.msra.mxu0 %v1226
    %1245 = vmatprep.subr.bf16.mxu0 0
    %1246 = vmatpush1.bf16.msra.mxu0 %v1227
    %1247 = vmatprep.subr.bf16.mxu0 0
    %1248 = vmatpush1.bf16.msra.mxu0 %v1228
    %1249 = vmatprep.subr.bf16.mxu0 0
    %1250 = vmatpush1.bf16.msra.mxu0 %v1229
    %1251 = vmatprep.subr.bf16.mxu0 0
    %1252 = vmatpush1.bf16.msra.mxu0 %v1230
    %1253 = vmatprep.subr.bf16.mxu0 0
    %1254 = vmatpush1.bf16.msra.mxu0 %v1231
    %1255 = vmatprep.subr.bf16.mxu0 0
    %1256 = vmatpush1.bf16.msra.mxu0 %v1232
    %1257 = vmatprep.subr.bf16.mxu0 0
    %1258 = vmatpush1.bf16.msra.mxu0 0
    %1259 = vmatprep.subr.bf16.mxu0 0
    %1260 = vmatpush1.bf16.msra.mxu0 0
    %1261 = vmatprep.subr.bf16.mxu0 0
    %1262 = vmatpush1.bf16.msra.mxu0 0
    %1263 = vmatprep.subr.bf16.mxu0 0
    %1264 = vmatpush1.bf16.msra.mxu0 0
    %1265 = vmatprep.subr.bf16.mxu0 0
    %1266 = vmatpush1.bf16.msra.mxu0 0
    %1267 = vmatprep.subr.bf16.mxu0 0
    %1268 = vmatpush1.bf16.msra.mxu0 0
    %1269 = vmatprep.subr.bf16.mxu0 0
    %1270 = vmatpush1.bf16.msra.mxu0 0
    %1271 = vmatprep.subr.bf16.mxu0 0
    %1272 = vmatpush1.bf16.msra.mxu0 0
    %1273 = vmatprep.mubr.bf16.mxu0 0
    %1274 = vmatmul.mubr.bf16.gmra.mrb[0].mxu0 %v1186
    %v1275 = vpop.f32.mrb[0].mxu0
    %v1276 = vadd.f32 %v1191, %v1275
    %v1277 = vpop.f32.mrb[0].mxu0
    %v1278 = vpop.f32.mrb[0].mxu0
    %v1279 = vadd.f32 %v1191, %v1278
    %v1280 = vpop.f32.mrb[0].mxu0
    %1281 = vdwg.mxu0
    %v1282 = vadd.f32 %v1043, %v1276
    %v1283 = vadd.f32 %v1053, %v1279
    %v1284 = vld [vmem:[%s10] sm:$0xf]
    %v1285 = vld [vmem:[%s10 + $0x4] sm:$0xf]
    %v1286 = vld [vmem:[%s10 + $0x8] sm:$0xf]
    %v1287 = vld [vmem:[%s10 + $0xc] sm:$0xf]
    %v1288 = vld [vmem:[%s10 + $0x10] sm:$0xf]
    %v1289 = vld [vmem:[%s10 + $0x14] sm:$0xf]
    %v1290 = vld [vmem:[%s10 + $0x18] sm:$0xf]
    %v1291 = vld [vmem:[%s10 + $0x1c] sm:$0xf]
    %v1292 = vld [vmem:[%s10 + $0x20] sm:$0xf]
    %v1293 = vld [vmem:[%s10 + $0x24] sm:$0xf]
    %v1294 = vld [vmem:[%s10 + $0x28] sm:$0xf]
    %v1295 = vld [vmem:[%s10 + $0x2c] sm:$0xf]
    %v1296 = vld [vmem:[%s10 + $0x30] sm:$0xf]
    %v1297 = vld [vmem:[%s10 + $0x34] sm:$0xf]
    %v1298 = vld [vmem:[%s10 + $0x38] sm:$0xf]
    %v1299 = vld [vmem:[%s10 + $0x3c] sm:$0xf]
    %v1300 = vld [vmem:[%s11] sm:$0x1]
    %v1301 = vld [vmem:[%s12] sm:$0xf]
    %v1302 = vld [vmem:[%s12 + $0x4] sm:$0xf]
    %v1303 = vld [vmem:[%s12 + $0x8] sm:$0xf]
    %v1304 = vld [vmem:[%s12 + $0xc] sm:$0xf]
    %v1305 = vld [vmem:[%s13] sm:$0x1]
    %v1306 = vpack.c.bf16 %v82, %v81
    %v1308 = vlaneseq
    %v1309 = vshrl.u32 %v1308, 7
    %v1310 = vsub.s32 0, %v1309
    %v1311 = vrot.slane %v1300, %v1310
    %v1329 = vunpack.c.l.b16 %v1284
    %v1330 = vunpack.c.l.b16 %v1285
    %v1331 = vunpack.c.l.b16 %v1286
    %v1332 = vunpack.c.l.b16 %v1287
    %v1333 = vunpack.c.l.b16 %v1288
    %v1334 = vunpack.c.l.b16 %v1289
    %v1335 = vunpack.c.l.b16 %v1290
    %v1336 = vunpack.c.l.b16 %v1291
    %v1337 = vunpack.c.l.b16 %v1292
    %v1338 = vunpack.c.l.b16 %v1293
    %v1339 = vunpack.c.l.b16 %v1294
    %v1340 = vunpack.c.l.b16 %v1295
    %v1341 = vunpack.c.l.b16 %v1296
    %v1342 = vunpack.c.l.b16 %v1297
    %v1343 = vunpack.c.l.b16 %v1298
    %v1344 = vunpack.c.l.b16 %v1299
    %v1345 = vpack.c.b16 %v1330, %v1329
    %v1346 = vpack.c.b16 %v1332, %v1331
    %v1347 = vpack.c.b16 %v1334, %v1333
    %v1348 = vpack.c.b16 %v1336, %v1335
    %v1349 = vpack.c.b16 %v1338, %v1337
    %v1350 = vpack.c.b16 %v1340, %v1339
    %v1351 = vpack.c.b16 %v1342, %v1341
    %v1352 = vpack.c.b16 %v1344, %v1343
    %1361 = vmatprep.subr.bf16.mxu0 0
    %1362 = vmatpush1.bf16.msra.mxu0 %v1345
    %1363 = vmatprep.subr.bf16.mxu0 0
    %1364 = vmatpush1.bf16.msra.mxu0 %v1346
    %1365 = vmatprep.subr.bf16.mxu0 0
    %1366 = vmatpush1.bf16.msra.mxu0 %v1347
    %1367 = vmatprep.subr.bf16.mxu0 0
    %1368 = vmatpush1.bf16.msra.mxu0 %v1348
    %1369 = vmatprep.subr.bf16.mxu0 0
    %1370 = vmatpush1.bf16.msra.mxu0 %v1349
    %1371 = vmatprep.subr.bf16.mxu0 0
    %1372 = vmatpush1.bf16.msra.mxu0 %v1350
    %1373 = vmatprep.subr.bf16.mxu0 0
    %1374 = vmatpush1.bf16.msra.mxu0 %v1351
    %1375 = vmatprep.subr.bf16.mxu0 0
    %1376 = vmatpush1.bf16.msra.mxu0 %v1352
    %1377 = vmatprep.subr.bf16.mxu0 0
    %1378 = vmatpush1.bf16.msra.mxu0 0
    %1379 = vmatprep.subr.bf16.mxu0 0
    %1380 = vmatpush1.bf16.msra.mxu0 0
    %1381 = vmatprep.subr.bf16.mxu0 0
    %1382 = vmatpush1.bf16.msra.mxu0 0
    %1383 = vmatprep.subr.bf16.mxu0 0
    %1384 = vmatpush1.bf16.msra.mxu0 0
    %1385 = vmatprep.subr.bf16.mxu0 0
    %1386 = vmatpush1.bf16.msra.mxu0 0
    %1387 = vmatprep.subr.bf16.mxu0 0
    %1388 = vmatpush1.bf16.msra.mxu0 0
    %1389 = vmatprep.subr.bf16.mxu0 0
    %1390 = vmatpush1.bf16.msra.mxu0 0
    %1391 = vmatprep.subr.bf16.mxu0 0
    %1392 = vmatpush1.bf16.msra.mxu0 0
    %1393 = vmatprep.mubr.bf16.mxu0 0
    %1394 = vmatmul.mubr.bf16.gmra.mrb[0].mxu0 %v1306
    %v1395 = vpop.f32.mrb[0].mxu0
    %v1396 = vadd.f32 %v1311, %v1395
    %v1397 = vpop.f32.mrb[0].mxu0
    %v1398 = vpop.f32.mrb[0].mxu0
    %v1399 = vadd.f32 %v1311, %v1398
    %v1400 = vpop.f32.mrb[0].mxu0
    %1401 = vdwg.mxu0
    %1403 = vrot.lane.b32.xlu0 %v1396, 120
    %v1404 = vpop.permute.xlu0 %1403
    %1406 = vrot.lane.b32.xlu0 %v1396, 112
    %v1407 = vpop.permute.xlu0 %1406
    %1409 = vrot.lane.b32.xlu0 %v1396, 104
    %v1410 = vpop.permute.xlu0 %1409
    %1413 = vrot.lane.b32.xlu0 %v1399, 120
    %v1414 = vpop.permute.xlu0 %1413
    %1416 = vrot.lane.b32.xlu0 %v1399, 112
    %v1417 = vpop.permute.xlu0 %1416
    %1419 = vrot.lane.b32.xlu0 %v1399, 104
    %v1420 = vpop.permute.xlu0 %1419
    %v1422 = vpack.c.bf16 %v1404, %v1396
    %v1423 = vpack.c.bf16 %v1410, %v1407
    %v1424 = vpack.c.bf16 %v1414, %v1399
    %v1425 = vpack.c.bf16 %v1420, %v1417
    %1430 = vrot.lane.b32.xlu0 %v1422, 96
    %v1431 = vpop.permute.xlu0 %1430
    %1432 = vrot.lane.b32.xlu0 %v1423, 96
    %v1433 = vpop.permute.xlu0 %1432
    %1434 = vrot.lane.b32.xlu0 %v1424, 96
    %v1435 = vpop.permute.xlu0 %1434
    %1436 = vrot.lane.b32.xlu0 %v1425, 96
    %v1437 = vpop.permute.xlu0 %1436
    %v1439 = vsel %vm656, %v1422, 0
    %v1442 = vsel %vm656, %v1423, 0
    %v1445 = vsel %vm656, %v1424, 0
    %v1448 = vsel %vm656, %v1425, 0
    %v1451 = vsel %vm656, %v1431, 0
    %v1454 = vsel %vm656, %v1433, 0
    %v1457 = vsel %vm656, %v1435, 0
    %v1460 = vsel %vm656, %v1437, 0
    %1462 = vmatprep.subr.bf16.mxu0 0
    %1463 = vmatpush1.bf16.xpose.msra.mxu0 %v1451
    %1464 = vmatprep.subr.bf16.mxu0 0
    %1465 = vmatpush1.bf16.xpose.msra.mxu0 %v1454
    %1466 = vmatprep.subr.bf16.mxu0 0
    %1467 = vmatpush1.bf16.xpose.msra.mxu0 %v1457
    %1468 = vmatprep.subr.bf16.mxu0 0
    %1469 = vmatpush1.bf16.xpose.msra.mxu0 %v1460
    %1470 = vmatprep.subr.bf16.mxu0 0
    %1471 = vmatpush1.bf16.xpose.msra.mxu0 0
    %1472 = vmatprep.subr.bf16.mxu0 0
    %1473 = vmatpush1.bf16.xpose.msra.mxu0 0
    %1474 = vmatprep.subr.bf16.mxu0 0
    %1475 = vmatpush1.bf16.xpose.msra.mxu0 0
    %1476 = vmatprep.subr.bf16.mxu0 0
    %1477 = vmatpush1.bf16.xpose.msra.mxu0 0
    %1478 = vmatprep.subr.bf16.mxu0 0
    %1479 = vmatpush1.bf16.xpose.msra.mxu0 0
    %1480 = vmatprep.subr.bf16.mxu0 0
    %1481 = vmatpush1.bf16.xpose.msra.mxu0 0
    %1482 = vmatprep.subr.bf16.mxu0 0
    %1483 = vmatpush1.bf16.xpose.msra.mxu0 0
    %1484 = vmatprep.subr.bf16.mxu0 0
    %1485 = vmatpush1.bf16.xpose.msra.mxu0 0
    %1486 = vmatprep.subr.bf16.mxu0 0
    %1487 = vmatpush1.bf16.xpose.msra.mxu0 0
    %1488 = vmatprep.subr.bf16.mxu0 0
    %1489 = vmatpush1.bf16.xpose.msra.mxu0 0
    %1490 = vmatprep.subr.bf16.mxu0 0
    %1491 = vmatpush1.bf16.xpose.msra.mxu0 0
    %1492 = vmatprep.subr.bf16.mxu0 0
    %1493 = vmatpush1.bf16.xpose.msra.mxu0 0
    %1494 = vmatprep.mubr.bf16.mxu0 0
    %1495 = vmatmul.mubr.bf16.gmra.mrb[0].mxu0 %v1439
    %v1496 = vpop.f32.mrb[0].mxu0
    %v1497 = vadd.f32 0.0, %v1496
    %v1498 = vpop.f32.mrb[0].mxu0
    %v1499 = vpop.f32.mrb[0].mxu0
    %v1500 = vadd.f32 0.0, %v1499
    %v1501 = vpop.f32.mrb[0].mxu0
    %1502 = vmatprep.mubr.bf16.mxu0 0
    %1503 = vmatmul.mubr.bf16.gmra.mrb[0].mxu0 %v1442
    %v1504 = vpop.f32.mrb[0].mxu0
    %v1505 = vadd.f32 0.0, %v1504
    %v1506 = vpop.f32.mrb[0].mxu0
    %v1507 = vpop.f32.mrb[0].mxu0
    %v1508 = vadd.f32 0.0, %v1507
    %v1509 = vpop.f32.mrb[0].mxu0
    %1510 = vmatprep.mubr.bf16.mxu0 0
    %1511 = vmatmul.mubr.bf16.gmra.mrb[0].mxu0 %v1445
    %v1512 = vpop.f32.mrb[0].mxu0
    %v1513 = vadd.f32 0.0, %v1512
    %v1514 = vpop.f32.mrb[0].mxu0
    %v1515 = vpop.f32.mrb[0].mxu0
    %v1516 = vadd.f32 0.0, %v1515
    %v1517 = vpop.f32.mrb[0].mxu0
    %1518 = vmatprep.mubr.bf16.mxu0 0
    %1519 = vmatmul.mubr.bf16.gmra.mrb[0].mxu0 %v1448
    %v1520 = vpop.f32.mrb[0].mxu0
    %v1521 = vadd.f32 0.0, %v1520
    %v1522 = vpop.f32.mrb[0].mxu0
    %v1523 = vpop.f32.mrb[0].mxu0
    %v1524 = vadd.f32 0.0, %v1523
    %v1525 = vpop.f32.mrb[0].mxu0
    %1526 = vdwg.mxu0
    %v1527 = vsel %vm494, %v1497, -1e+30
    %v1528 = vsel %vm495, %v1500, -1e+30
    %v1529 = vsel %vm496, %v1505, -1e+30
    %v1530 = vsel %vm497, %v1508, -1e+30
    %v1531 = vsel %vm498, %v1513, -1e+30
    %v1532 = vsel %vm499, %v1516, -1e+30
    %v1533 = vsel %vm500, %v1521, -1e+30
    %v1534 = vsel %vm501, %v1524, -1e+30
    %v1535 = vsel %vm754, %v1527, -inf
    %1536 = vmax.xlane.f32.xlu0 %v1535
    %v1537 = vpop.xlane.xlu0 %1536
    %v1538 = vsel %vm754, %v1528, -inf
    %1539 = vmax.xlane.f32.xlu0 %v1538
    %v1540 = vpop.xlane.xlu0 %1539
    %v1541 = vsel %vm754, %v1529, -inf
    %1542 = vmax.xlane.f32.xlu0 %v1541
    %v1543 = vpop.xlane.xlu0 %1542
    %v1544 = vsel %vm754, %v1530, -inf
    %1545 = vmax.xlane.f32.xlu0 %v1544
    %v1546 = vpop.xlane.xlu0 %1545
    %v1547 = vsel %vm754, %v1531, -inf
    %1548 = vmax.xlane.f32.xlu0 %v1547
    %v1549 = vpop.xlane.xlu0 %1548
    %v1550 = vsel %vm754, %v1532, -inf
    %1551 = vmax.xlane.f32.xlu0 %v1550
    %v1552 = vpop.xlane.xlu0 %1551
    %v1553 = vsel %vm754, %v1533, -inf
    %1554 = vmax.xlane.f32.xlu0 %v1553
    %v1555 = vpop.xlane.xlu0 %1554
    %v1556 = vsel %vm754, %v1534, -inf
    %1557 = vmax.xlane.f32.xlu0 %v1556
    %v1558 = vpop.xlane.xlu0 %1557
    %v1559 = vsub.f32 %v1527, %v1537
    %v1560 = vsub.f32 %v1528, %v1540
    %v1561 = vsub.f32 %v1529, %v1543
    %v1562 = vsub.f32 %v1530, %v1546
    %v1563 = vsub.f32 %v1531, %v1549
    %v1564 = vsub.f32 %v1532, %v1552
    %v1565 = vsub.f32 %v1533, %v1555
    %v1566 = vsub.f32 %v1534, %v1558
    %v1567 = vmul.f32 %v1559, 1.442695
    %v1568 = vpow.pop %v1567
    %v1569 = vmul.f32 %v1560, 1.442695
    %v1570 = vpow.pop %v1569
    %v1571 = vmul.f32 %v1561, 1.442695
    %v1572 = vpow.pop %v1571
    %v1573 = vmul.f32 %v1562, 1.442695
    %v1574 = vpow.pop %v1573
    %v1575 = vmul.f32 %v1563, 1.442695
    %v1576 = vpow.pop %v1575
    %v1577 = vmul.f32 %v1564, 1.442695
    %v1578 = vpow.pop %v1577
    %v1579 = vmul.f32 %v1565, 1.442695
    %v1580 = vpow.pop %v1579
    %v1581 = vmul.f32 %v1566, 1.442695
    %v1582 = vpow.pop %v1581
    %v1583 = vsel %vm754, %v1568, 0.0
    %1584 = vadd.xlane.f32.xlu0 %v1583
    %v1585 = vpop.xlane.xlu0 %1584
    %v1586 = vsel %vm754, %v1570, 0.0
    %1587 = vadd.xlane.f32.xlu0 %v1586
    %v1588 = vpop.xlane.xlu0 %1587
    %v1589 = vsel %vm754, %v1572, 0.0
    %1590 = vadd.xlane.f32.xlu0 %v1589
    %v1591 = vpop.xlane.xlu0 %1590
    %v1592 = vsel %vm754, %v1574, 0.0
    %1593 = vadd.xlane.f32.xlu0 %v1592
    %v1594 = vpop.xlane.xlu0 %1593
    %v1595 = vsel %vm754, %v1576, 0.0
    %1596 = vadd.xlane.f32.xlu0 %v1595
    %v1597 = vpop.xlane.xlu0 %1596
    %v1598 = vsel %vm754, %v1578, 0.0
    %1599 = vadd.xlane.f32.xlu0 %v1598
    %v1600 = vpop.xlane.xlu0 %1599
    %v1601 = vsel %vm754, %v1580, 0.0
    %1602 = vadd.xlane.f32.xlu0 %v1601
    %v1603 = vpop.xlane.xlu0 %1602
    %v1604 = vsel %vm754, %v1582, 0.0
    %1605 = vadd.xlane.f32.xlu0 %v1604
    %v1606 = vpop.xlane.xlu0 %1605
    %v1607 = vrcp.pop %v1585
    %v1608 = vmul.f32 %v1568, %v1607
    %v1609 = vrcp.pop %v1588
    %v1610 = vmul.f32 %v1570, %v1609
    %v1611 = vrcp.pop %v1591
    %v1612 = vmul.f32 %v1572, %v1611
    %v1613 = vrcp.pop %v1594
    %v1614 = vmul.f32 %v1574, %v1613
    %v1615 = vrcp.pop %v1597
    %v1616 = vmul.f32 %v1576, %v1615
    %v1617 = vrcp.pop %v1600
    %v1618 = vmul.f32 %v1578, %v1617
    %v1619 = vrcp.pop %v1603
    %v1620 = vmul.f32 %v1580, %v1619
    %v1621 = vrcp.pop %v1606
    %v1622 = vmul.f32 %v1582, %v1621
    %v1623 = vpack.c.bf16 %v1610, %v1608
    %v1624 = vpack.c.bf16 %v1614, %v1612
    %v1625 = vpack.c.bf16 %v1618, %v1616
    %v1626 = vpack.c.bf16 %v1622, %v1620
    %1627 = vrot.lane.b32.xlu0 %v1422, 64
    %v1628 = vpop.permute.xlu0 %1627
    %1629 = vrot.lane.b32.xlu0 %v1423, 64
    %v1630 = vpop.permute.xlu0 %1629
    %1631 = vrot.lane.b32.xlu0 %v1424, 64
    %v1632 = vpop.permute.xlu0 %1631
    %1633 = vrot.lane.b32.xlu0 %v1425, 64
    %v1634 = vpop.permute.xlu0 %1633
    %v1640 = vsel %vm754, %v1623, 0
    %v1643 = vsel %vm754, %v1624, 0
    %v1646 = vsel %vm754, %v1625, 0
    %v1649 = vsel %vm754, %v1626, 0
    %1651 = vmatprep.subr.bf16.mxu0 0
    %1652 = vmatpush1.bf16.msra.mxu0 %v1628
    %1653 = vmatprep.subr.bf16.mxu0 0
    %1654 = vmatpush1.bf16.msra.mxu0 %v1630
    %1655 = vmatprep.subr.bf16.mxu0 0
    %1656 = vmatpush1.bf16.msra.mxu0 %v1632
    %1657 = vmatprep.subr.bf16.mxu0 0
    %1658 = vmatpush1.bf16.msra.mxu0 %v1634
    %1659 = vmatprep.subr.bf16.mxu0 0
    %1660 = vmatpush1.bf16.msra.mxu0 0
    %1661 = vmatprep.subr.bf16.mxu0 0
    %1662 = vmatpush1.bf16.msra.mxu0 0
    %1663 = vmatprep.subr.bf16.mxu0 0
    %1664 = vmatpush1.bf16.msra.mxu0 0
    %1665 = vmatprep.subr.bf16.mxu0 0
    %1666 = vmatpush1.bf16.msra.mxu0 0
    %1667 = vmatprep.subr.bf16.mxu0 0
    %1668 = vmatpush1.bf16.msra.mxu0 0
    %1669 = vmatprep.subr.bf16.mxu0 0
    %1670 = vmatpush1.bf16.msra.mxu0 0
    %1671 = vmatprep.subr.bf16.mxu0 0
    %1672 = vmatpush1.bf16.msra.mxu0 0
    %1673 = vmatprep.subr.bf16.mxu0 0
    %1674 = vmatpush1.bf16.msra.mxu0 0
    %1675 = vmatprep.subr.bf16.mxu0 0
    %1676 = vmatpush1.bf16.msra.mxu0 0
    %1677 = vmatprep.subr.bf16.mxu0 0
    %1678 = vmatpush1.bf16.msra.mxu0 0
    %1679 = vmatprep.subr.bf16.mxu0 0
    %1680 = vmatpush1.bf16.msra.mxu0 0
    %1681 = vmatprep.subr.bf16.mxu0 0
    %1682 = vmatpush1.bf16.msra.mxu0 0
    %1683 = vmatprep.mubr.bf16.mxu0 0
    %1684 = vmatmul.mubr.bf16.gmra.mrb[0].mxu0 %v1640
    %v1685 = vpop.f32.mrb[0].mxu0
    %v1686 = vadd.f32 0.0, %v1685
    %v1687 = vpop.f32.mrb[0].mxu0
    %v1688 = vpop.f32.mrb[0].mxu0
    %v1689 = vadd.f32 0.0, %v1688
    %v1690 = vpop.f32.mrb[0].mxu0
    %1691 = vmatprep.mubr.bf16.mxu0 0
    %1692 = vmatmul.mubr.bf16.gmra.mrb[0].mxu0 %v1643
    %v1693 = vpop.f32.mrb[0].mxu0
    %v1694 = vadd.f32 0.0, %v1693
    %v1695 = vpop.f32.mrb[0].mxu0
    %v1696 = vpop.f32.mrb[0].mxu0
    %v1697 = vadd.f32 0.0, %v1696
    %v1698 = vpop.f32.mrb[0].mxu0
    %1699 = vmatprep.mubr.bf16.mxu0 0
    %1700 = vmatmul.mubr.bf16.gmra.mrb[0].mxu0 %v1646
    %v1701 = vpop.f32.mrb[0].mxu0
    %v1702 = vadd.f32 0.0, %v1701
    %v1703 = vpop.f32.mrb[0].mxu0
    %v1704 = vpop.f32.mrb[0].mxu0
    %v1705 = vadd.f32 0.0, %v1704
    %v1706 = vpop.f32.mrb[0].mxu0
    %1707 = vmatprep.mubr.bf16.mxu0 0
    %1708 = vmatmul.mubr.bf16.gmra.mrb[0].mxu0 %v1649
    %v1709 = vpop.f32.mrb[0].mxu0
    %v1710 = vadd.f32 0.0, %v1709
    %v1711 = vpop.f32.mrb[0].mxu0
    %v1712 = vpop.f32.mrb[0].mxu0
    %v1713 = vadd.f32 0.0, %v1712
    %v1714 = vpop.f32.mrb[0].mxu0
    %1715 = vdwg.mxu0
    %1717 = vrot.lane.b32.xlu0 %v1689, 8
    %v1718 = vpop.permute.xlu0 %1717
    %1721 = vrot.lane.b32.xlu0 %v1694, 16
    %v1722 = vpop.permute.xlu0 %1721
    %1725 = vrot.lane.b32.xlu0 %v1697, 24
    %v1726 = vpop.permute.xlu0 %1725
    %v1728 = vsel %vm656, %v1686, %v1718
    %v1729 = vsel %vm949, %v1728, %v1722
    %v1730 = vsel %vm951, %v1729, %v1726
    %1732 = vrot.lane.b32.xlu0 %v1705, 8
    %v1733 = vpop.permute.xlu0 %1732
    %1736 = vrot.lane.b32.xlu0 %v1710, 16
    %v1737 = vpop.permute.xlu0 %1736
    %1740 = vrot.lane.b32.xlu0 %v1713, 24
    %v1741 = vpop.permute.xlu0 %1740
    %v1743 = vsel %vm656, %v1702, %v1733
    %v1744 = vsel %vm949, %v1743, %v1737
    %v1745 = vsel %vm951, %v1744, %v1741
    %v1746 = vpack.c.bf16 %v1745, %v1730
    %v1748 = vlaneseq
    %v1749 = vshrl.u32 %v1748, 7
    %v1750 = vsub.s32 0, %v1749
    %v1751 = vrot.slane %v1305, %v1750
    %v1757 = vunpack.c.l.b16 %v1301
    %v1758 = vunpack.c.l.b16 %v1302
    %v1759 = vunpack.c.l.b16 %v1303
    %v1760 = vunpack.c.l.b16 %v1304
    %v1761 = vpack.c.b16 %v1758, %v1757
    %v1762 = vpack.c.b16 %v1760, %v1759
    %v1766 = vsel %vm987, %v1746, 0
    %1768 = vmatprep.subr.bf16.mxu0 0
    %1769 = vmatpush1.bf16.msra.mxu0 %v1761
    %1770 = vmatprep.subr.bf16.mxu0 0
    %1771 = vmatpush1.bf16.msra.mxu0 %v1762
    %1772 = vmatprep.subr.bf16.mxu0 0
    %1773 = vmatpush1.bf16.msra.mxu0 0
    %1774 = vmatprep.subr.bf16.mxu0 0
    %1775 = vmatpush1.bf16.msra.mxu0 0
    %1776 = vmatprep.subr.bf16.mxu0 0
    %1777 = vmatpush1.bf16.msra.mxu0 0
    %1778 = vmatprep.subr.bf16.mxu0 0
    %1779 = vmatpush1.bf16.msra.mxu0 0
    %1780 = vmatprep.subr.bf16.mxu0 0
    %1781 = vmatpush1.bf16.msra.mxu0 0
    %1782 = vmatprep.subr.bf16.mxu0 0
    %1783 = vmatpush1.bf16.msra.mxu0 0
    %1784 = vmatprep.subr.bf16.mxu0 0
    %1785 = vmatpush1.bf16.msra.mxu0 0
    %1786 = vmatprep.subr.bf16.mxu0 0
    %1787 = vmatpush1.bf16.msra.mxu0 0
    %1788 = vmatprep.subr.bf16.mxu0 0
    %1789 = vmatpush1.bf16.msra.mxu0 0
    %1790 = vmatprep.subr.bf16.mxu0 0
    %1791 = vmatpush1.bf16.msra.mxu0 0
    %1792 = vmatprep.subr.bf16.mxu0 0
    %1793 = vmatpush1.bf16.msra.mxu0 0
    %1794 = vmatprep.subr.bf16.mxu0 0
    %1795 = vmatpush1.bf16.msra.mxu0 0
    %1796 = vmatprep.subr.bf16.mxu0 0
    %1797 = vmatpush1.bf16.msra.mxu0 0
    %1798 = vmatprep.subr.bf16.mxu0 0
    %1799 = vmatpush1.bf16.msra.mxu0 0
    %1800 = vmatprep.mubr.bf16.mxu0 0
    %1801 = vmatmul.mubr.bf16.gmra.mrb[0].mxu0 %v1766
    %v1802 = vpop.f32.mrb[0].mxu0
    %v1803 = vadd.f32 %v1751, %v1802
    %v1804 = vpop.f32.mrb[0].mxu0
    %v1805 = vpop.f32.mrb[0].mxu0
    %v1806 = vadd.f32 %v1751, %v1805
    %v1807 = vpop.f32.mrb[0].mxu0
    %1808 = vdwg.mxu0
    %v1809 = vmul.f32 %v1803, %v1803
    %v1810 = vrot.slane %v1809, 4
    %v1811 = vadd.f32 %v1809, %v1810
    %v1812 = vrot.slane %v1811, 2
    %v1813 = vadd.f32 %v1811, %v1812
    %v1814 = vrot.slane %v1813, 1
    %v1815 = vadd.f32 %v1813, %v1814
    %v1816 = vmax.f32 %v1815, 1e-24
    %v1817 = vrsqrt.pop %v1816
    %v1818 = vmul.f32 %v1803, %v1817
    %v1819 = vmul.f32 %v1806, %v1806
    %v1820 = vrot.slane %v1819, 4
    %v1821 = vadd.f32 %v1819, %v1820
    %v1822 = vrot.slane %v1821, 2
    %v1823 = vadd.f32 %v1821, %v1822
    %v1824 = vrot.slane %v1823, 1
    %v1825 = vadd.f32 %v1823, %v1824
    %v1826 = vmax.f32 %v1825, 1e-24
    %v1827 = vrsqrt.pop %v1826
    %v1828 = vmul.f32 %v1806, %v1827
    %v1829 = vld [vmem:[%s14] sm:$0xf]
    %v1830 = vld [vmem:[%s14 + $0x4] sm:$0xf]
    %v1831 = vld [vmem:[%s14 + $0x8] sm:$0xf]
    %v1832 = vld [vmem:[%s14 + $0xc] sm:$0xf]
    %v1833 = vld [vmem:[%s14 + $0x10] sm:$0xf]
    %v1834 = vld [vmem:[%s14 + $0x14] sm:$0xf]
    %v1835 = vld [vmem:[%s14 + $0x18] sm:$0xf]
    %v1836 = vld [vmem:[%s14 + $0x1c] sm:$0xf]
    %v1837 = vld [vmem:[%s14 + $0x20] sm:$0xf]
    %v1838 = vld [vmem:[%s14 + $0x24] sm:$0xf]
    %v1839 = vld [vmem:[%s14 + $0x28] sm:$0xf]
    %v1840 = vld [vmem:[%s14 + $0x2c] sm:$0xf]
    %v1841 = vld [vmem:[%s14 + $0x30] sm:$0xf]
    %v1842 = vld [vmem:[%s14 + $0x34] sm:$0xf]
    %v1843 = vld [vmem:[%s14 + $0x38] sm:$0xf]
    %v1844 = vld [vmem:[%s14 + $0x3c] sm:$0xf]
    %v1845 = vld [vmem:[%s15] sm:$0x1]
    %v1846 = vld [vmem:[%s16] sm:$0xf]
    %v1847 = vld [vmem:[%s16 + $0x4] sm:$0xf]
    %v1848 = vld [vmem:[%s16 + $0x8] sm:$0xf]
    %v1849 = vld [vmem:[%s16 + $0xc] sm:$0xf]
    %v1850 = vld [vmem:[%s17] sm:$0x1]
    %v1851 = vpack.c.bf16 %v1828, %v1818
    %v1853 = vlaneseq
    %v1854 = vshrl.u32 %v1853, 7
    %v1855 = vsub.s32 0, %v1854
    %v1856 = vrot.slane %v1845, %v1855
    %v1874 = vunpack.c.l.b16 %v1829
    %v1875 = vunpack.c.l.b16 %v1830
    %v1876 = vunpack.c.l.b16 %v1831
    %v1877 = vunpack.c.l.b16 %v1832
    %v1878 = vunpack.c.l.b16 %v1833
    %v1879 = vunpack.c.l.b16 %v1834
    %v1880 = vunpack.c.l.b16 %v1835
    %v1881 = vunpack.c.l.b16 %v1836
    %v1882 = vunpack.c.l.b16 %v1837
    %v1883 = vunpack.c.l.b16 %v1838
    %v1884 = vunpack.c.l.b16 %v1839
    %v1885 = vunpack.c.l.b16 %v1840
    %v1886 = vunpack.c.l.b16 %v1841
    %v1887 = vunpack.c.l.b16 %v1842
    %v1888 = vunpack.c.l.b16 %v1843
    %v1889 = vunpack.c.l.b16 %v1844
    %v1890 = vpack.c.b16 %v1875, %v1874
    %v1891 = vpack.c.b16 %v1877, %v1876
    %v1892 = vpack.c.b16 %v1879, %v1878
    %v1893 = vpack.c.b16 %v1881, %v1880
    %v1894 = vpack.c.b16 %v1883, %v1882
    %v1895 = vpack.c.b16 %v1885, %v1884
    %v1896 = vpack.c.b16 %v1887, %v1886
    %v1897 = vpack.c.b16 %v1889, %v1888
    %1906 = vmatprep.subr.bf16.mxu0 0
    %1907 = vmatpush1.bf16.msra.mxu0 %v1890
    %1908 = vmatprep.subr.bf16.mxu0 0
    %1909 = vmatpush1.bf16.msra.mxu0 %v1891
    %1910 = vmatprep.subr.bf16.mxu0 0
    %1911 = vmatpush1.bf16.msra.mxu0 %v1892
    %1912 = vmatprep.subr.bf16.mxu0 0
    %1913 = vmatpush1.bf16.msra.mxu0 %v1893
    %1914 = vmatprep.subr.bf16.mxu0 0
    %1915 = vmatpush1.bf16.msra.mxu0 %v1894
    %1916 = vmatprep.subr.bf16.mxu0 0
    %1917 = vmatpush1.bf16.msra.mxu0 %v1895
    %1918 = vmatprep.subr.bf16.mxu0 0
    %1919 = vmatpush1.bf16.msra.mxu0 %v1896
    %1920 = vmatprep.subr.bf16.mxu0 0
    %1921 = vmatpush1.bf16.msra.mxu0 %v1897
    %1922 = vmatprep.subr.bf16.mxu0 0
    %1923 = vmatpush1.bf16.msra.mxu0 0
    %1924 = vmatprep.subr.bf16.mxu0 0
    %1925 = vmatpush1.bf16.msra.mxu0 0
    %1926 = vmatprep.subr.bf16.mxu0 0
    %1927 = vmatpush1.bf16.msra.mxu0 0
    %1928 = vmatprep.subr.bf16.mxu0 0
    %1929 = vmatpush1.bf16.msra.mxu0 0
    %1930 = vmatprep.subr.bf16.mxu0 0
    %1931 = vmatpush1.bf16.msra.mxu0 0
    %1932 = vmatprep.subr.bf16.mxu0 0
    %1933 = vmatpush1.bf16.msra.mxu0 0
    %1934 = vmatprep.subr.bf16.mxu0 0
    %1935 = vmatpush1.bf16.msra.mxu0 0
    %1936 = vmatprep.subr.bf16.mxu0 0
    %1937 = vmatpush1.bf16.msra.mxu0 0
    %1938 = vmatprep.mubr.bf16.mxu0 0
    %1939 = vmatmul.mubr.bf16.gmra.mrb[0].mxu0 %v1851
    %v1940 = vpop.f32.mrb[0].mxu0
    %v1941 = vadd.f32 %v1856, %v1940
    %v1942 = vpop.f32.mrb[0].mxu0
    %v1943 = vpop.f32.mrb[0].mxu0
    %v1944 = vadd.f32 %v1856, %v1943
    %v1945 = vpop.f32.mrb[0].mxu0
    %1946 = vdwg.mxu0
    %v1947 = vpack.c.bf16 %v1283, %v1282
    %1948 = vrot.lane.b32.xlu0 %v1890, 96
    %v1949 = vpop.permute.xlu0 %1948
    %1950 = vrot.lane.b32.xlu0 %v1891, 96
    %v1951 = vpop.permute.xlu0 %1950
    %1952 = vrot.lane.b32.xlu0 %v1892, 96
    %v1953 = vpop.permute.xlu0 %1952
    %1954 = vrot.lane.b32.xlu0 %v1893, 96
    %v1955 = vpop.permute.xlu0 %1954
    %1956 = vrot.lane.b32.xlu0 %v1894, 96
    %v1957 = vpop.permute.xlu0 %1956
    %1958 = vrot.lane.b32.xlu0 %v1895, 96
    %v1959 = vpop.permute.xlu0 %1958
    %1960 = vrot.lane.b32.xlu0 %v1896, 96
    %v1961 = vpop.permute.xlu0 %1960
    %1962 = vrot.lane.b32.xlu0 %v1897, 96
    %v1963 = vpop.permute.xlu0 %1962
    %1972 = vrot.lane.b32.xlu0 %v1856, 96
    %v1973 = vpop.permute.xlu0 %1972
    %1975 = vmatprep.subr.bf16.mxu0 0
    %1976 = vmatpush1.bf16.msra.mxu0 %v1949
    %1977 = vmatprep.subr.bf16.mxu0 0
    %1978 = vmatpush1.bf16.msra.mxu0 %v1951
    %1979 = vmatprep.subr.bf16.mxu0 0
    %1980 = vmatpush1.bf16.msra.mxu0 %v1953
    %1981 = vmatprep.subr.bf16.mxu0 0
    %1982 = vmatpush1.bf16.msra.mxu0 %v1955
    %1983 = vmatprep.subr.bf16.mxu0 0
    %1984 = vmatpush1.bf16.msra.mxu0 %v1957
    %1985 = vmatprep.subr.bf16.mxu0 0
    %1986 = vmatpush1.bf16.msra.mxu0 %v1959
    %1987 = vmatprep.subr.bf16.mxu0 0
    %1988 = vmatpush1.bf16.msra.mxu0 %v1961
    %1989 = vmatprep.subr.bf16.mxu0 0
    %1990 = vmatpush1.bf16.msra.mxu0 %v1963
    %1991 = vmatprep.subr.bf16.mxu0 0
    %1992 = vmatpush1.bf16.msra.mxu0 0
    %1993 = vmatprep.subr.bf16.mxu0 0
    %1994 = vmatpush1.bf16.msra.mxu0 0
    %1995 = vmatprep.subr.bf16.mxu0 0
    %1996 = vmatpush1.bf16.msra.mxu0 0
    %1997 = vmatprep.subr.bf16.mxu0 0
    %1998 = vmatpush1.bf16.msra.mxu0 0
    %1999 = vmatprep.subr.bf16.mxu0 0
    %2000 = vmatpush1.bf16.msra.mxu0 0
    %2001 = vmatprep.subr.bf16.mxu0 0
    %2002 = vmatpush1.bf16.msra.mxu0 0
    %2003 = vmatprep.subr.bf16.mxu0 0
    %2004 = vmatpush1.bf16.msra.mxu0 0
    %2005 = vmatprep.subr.bf16.mxu0 0
    %2006 = vmatpush1.bf16.msra.mxu0 0
    %2007 = vmatprep.mubr.bf16.mxu0 0
    %2008 = vmatmul.mubr.bf16.gmra.mrb[0].mxu0 %v1947
    %v2009 = vpop.f32.mrb[0].mxu0
    %v2010 = vadd.f32 %v1973, %v2009
    %v2011 = vpop.f32.mrb[0].mxu0
    %v2012 = vpop.f32.mrb[0].mxu0
    %v2013 = vadd.f32 %v1973, %v2012
    %v2014 = vpop.f32.mrb[0].mxu0
    %2015 = vdwg.mxu0
    %2017 = vrot.lane.b32.xlu0 %v1941, 120
    %v2018 = vpop.permute.xlu0 %2017
    %2020 = vrot.lane.b32.xlu0 %v1941, 112
    %v2021 = vpop.permute.xlu0 %2020
    %2023 = vrot.lane.b32.xlu0 %v1941, 104
    %v2024 = vpop.permute.xlu0 %2023
    %2027 = vrot.lane.b32.xlu0 %v1944, 120
    %v2028 = vpop.permute.xlu0 %2027
    %2030 = vrot.lane.b32.xlu0 %v1944, 112
    %v2031 = vpop.permute.xlu0 %2030
    %2033 = vrot.lane.b32.xlu0 %v1944, 104
    %v2034 = vpop.permute.xlu0 %2033
    %v2036 = vpack.c.bf16 %v2018, %v1941
    %v2037 = vpack.c.bf16 %v2024, %v2021
    %v2038 = vpack.c.bf16 %v2028, %v1944
    %v2039 = vpack.c.bf16 %v2034, %v2031
    %2041 = vrot.lane.b32.xlu0 %v2010, 120
    %v2042 = vpop.permute.xlu0 %2041
    %2044 = vrot.lane.b32.xlu0 %v2010, 112
    %v2045 = vpop.permute.xlu0 %2044
    %2047 = vrot.lane.b32.xlu0 %v2010, 104
    %v2048 = vpop.permute.xlu0 %2047
    %2051 = vrot.lane.b32.xlu0 %v2013, 120
    %v2052 = vpop.permute.xlu0 %2051
    %2054 = vrot.lane.b32.xlu0 %v2013, 112
    %v2055 = vpop.permute.xlu0 %2054
    %2057 = vrot.lane.b32.xlu0 %v2013, 104
    %v2058 = vpop.permute.xlu0 %2057
    %v2060 = vpack.c.bf16 %v2042, %v2010
    %v2061 = vpack.c.bf16 %v2048, %v2045
    %v2062 = vpack.c.bf16 %v2052, %v2013
    %v2063 = vpack.c.bf16 %v2058, %v2055
    %v2065 = vsel %vm656, %v2036, 0
    %v2068 = vsel %vm656, %v2037, 0
    %v2071 = vsel %vm656, %v2038, 0
    %v2074 = vsel %vm656, %v2039, 0
    %v2077 = vsel %vm656, %v2060, 0
    %v2080 = vsel %vm656, %v2061, 0
    %v2083 = vsel %vm656, %v2062, 0
    %v2086 = vsel %vm656, %v2063, 0
    %2088 = vmatprep.subr.bf16.mxu0 0
    %2089 = vmatpush1.bf16.xpose.msra.mxu0 %v2077
    %2090 = vmatprep.subr.bf16.mxu0 0
    %2091 = vmatpush1.bf16.xpose.msra.mxu0 %v2080
    %2092 = vmatprep.subr.bf16.mxu0 0
    %2093 = vmatpush1.bf16.xpose.msra.mxu0 %v2083
    %2094 = vmatprep.subr.bf16.mxu0 0
    %2095 = vmatpush1.bf16.xpose.msra.mxu0 %v2086
    %2096 = vmatprep.subr.bf16.mxu0 0
    %2097 = vmatpush1.bf16.xpose.msra.mxu0 0
    %2098 = vmatprep.subr.bf16.mxu0 0
    %2099 = vmatpush1.bf16.xpose.msra.mxu0 0
    %2100 = vmatprep.subr.bf16.mxu0 0
    %2101 = vmatpush1.bf16.xpose.msra.mxu0 0
    %2102 = vmatprep.subr.bf16.mxu0 0
    %2103 = vmatpush1.bf16.xpose.msra.mxu0 0
    %2104 = vmatprep.subr.bf16.mxu0 0
    %2105 = vmatpush1.bf16.xpose.msra.mxu0 0
    %2106 = vmatprep.subr.bf16.mxu0 0
    %2107 = vmatpush1.bf16.xpose.msra.mxu0 0
    %2108 = vmatprep.subr.bf16.mxu0 0
    %2109 = vmatpush1.bf16.xpose.msra.mxu0 0
    %2110 = vmatprep.subr.bf16.mxu0 0
    %2111 = vmatpush1.bf16.xpose.msra.mxu0 0
    %2112 = vmatprep.subr.bf16.mxu0 0
    %2113 = vmatpush1.bf16.xpose.msra.mxu0 0
    %2114 = vmatprep.subr.bf16.mxu0 0
    %2115 = vmatpush1.bf16.xpose.msra.mxu0 0
    %2116 = vmatprep.subr.bf16.mxu0 0
    %2117 = vmatpush1.bf16.xpose.msra.mxu0 0
    %2118 = vmatprep.subr.bf16.mxu0 0
    %2119 = vmatpush1.bf16.xpose.msra.mxu0 0
    %2120 = vmatprep.mubr.bf16.mxu0 0
    %2121 = vmatmul.mubr.bf16.gmra.mrb[0].mxu0 %v2065
    %v2122 = vpop.f32.mrb[0].mxu0
    %v2123 = vadd.f32 0.0, %v2122
    %v2124 = vpop.f32.mrb[0].mxu0
    %v2125 = vpop.f32.mrb[0].mxu0
    %v2126 = vadd.f32 0.0, %v2125
    %v2127 = vpop.f32.mrb[0].mxu0
    %2128 = vmatprep.mubr.bf16.mxu0 0
    %2129 = vmatmul.mubr.bf16.gmra.mrb[0].mxu0 %v2068
    %v2130 = vpop.f32.mrb[0].mxu0
    %v2131 = vadd.f32 0.0, %v2130
    %v2132 = vpop.f32.mrb[0].mxu0
    %v2133 = vpop.f32.mrb[0].mxu0
    %v2134 = vadd.f32 0.0, %v2133
    %v2135 = vpop.f32.mrb[0].mxu0
    %2136 = vmatprep.mubr.bf16.mxu0 0
    %2137 = vmatmul.mubr.bf16.gmra.mrb[0].mxu0 %v2071
    %v2138 = vpop.f32.mrb[0].mxu0
    %v2139 = vadd.f32 0.0, %v2138
    %v2140 = vpop.f32.mrb[0].mxu0
    %v2141 = vpop.f32.mrb[0].mxu0
    %v2142 = vadd.f32 0.0, %v2141
    %v2143 = vpop.f32.mrb[0].mxu0
    %2144 = vmatprep.mubr.bf16.mxu0 0
    %2145 = vmatmul.mubr.bf16.gmra.mrb[0].mxu0 %v2074
    %v2146 = vpop.f32.mrb[0].mxu0
    %v2147 = vadd.f32 0.0, %v2146
    %v2148 = vpop.f32.mrb[0].mxu0
    %v2149 = vpop.f32.mrb[0].mxu0
    %v2150 = vadd.f32 0.0, %v2149
    %v2151 = vpop.f32.mrb[0].mxu0
    %2152 = vdwg.mxu0
    %v2153 = vsel %vm478, %v2123, -1e+30
    %v2154 = vsel %vm479, %v2126, -1e+30
    %v2155 = vsel %vm480, %v2131, -1e+30
    %v2156 = vsel %vm481, %v2134, -1e+30
    %v2157 = vsel %vm482, %v2139, -1e+30
    %v2158 = vsel %vm483, %v2142, -1e+30
    %v2159 = vsel %vm484, %v2147, -1e+30
    %v2160 = vsel %vm485, %v2150, -1e+30
    %v2161 = vsel %vm754, %v2153, -inf
    %2162 = vmax.xlane.f32.xlu0 %v2161
    %v2163 = vpop.xlane.xlu0 %2162
    %v2164 = vsel %vm754, %v2154, -inf
    %2165 = vmax.xlane.f32.xlu0 %v2164
    %v2166 = vpop.xlane.xlu0 %2165
    %v2167 = vsel %vm754, %v2155, -inf
    %2168 = vmax.xlane.f32.xlu0 %v2167
    %v2169 = vpop.xlane.xlu0 %2168
    %v2170 = vsel %vm754, %v2156, -inf
    %2171 = vmax.xlane.f32.xlu0 %v2170
    %v2172 = vpop.xlane.xlu0 %2171
    %v2173 = vsel %vm754, %v2157, -inf
    %2174 = vmax.xlane.f32.xlu0 %v2173
    %v2175 = vpop.xlane.xlu0 %2174
    %v2176 = vsel %vm754, %v2158, -inf
    %2177 = vmax.xlane.f32.xlu0 %v2176
    %v2178 = vpop.xlane.xlu0 %2177
    %v2179 = vsel %vm754, %v2159, -inf
    %2180 = vmax.xlane.f32.xlu0 %v2179
    %v2181 = vpop.xlane.xlu0 %2180
    %v2182 = vsel %vm754, %v2160, -inf
    %2183 = vmax.xlane.f32.xlu0 %v2182
    %v2184 = vpop.xlane.xlu0 %2183
    %v2185 = vsub.f32 %v2153, %v2163
    %v2186 = vsub.f32 %v2154, %v2166
    %v2187 = vsub.f32 %v2155, %v2169
    %v2188 = vsub.f32 %v2156, %v2172
    %v2189 = vsub.f32 %v2157, %v2175
    %v2190 = vsub.f32 %v2158, %v2178
    %v2191 = vsub.f32 %v2159, %v2181
    %v2192 = vsub.f32 %v2160, %v2184
    %v2193 = vmul.f32 %v2185, 1.442695
    %v2194 = vpow.pop %v2193
    %v2195 = vmul.f32 %v2186, 1.442695
    %v2196 = vpow.pop %v2195
    %v2197 = vmul.f32 %v2187, 1.442695
    %v2198 = vpow.pop %v2197
    %v2199 = vmul.f32 %v2188, 1.442695
    %v2200 = vpow.pop %v2199
    %v2201 = vmul.f32 %v2189, 1.442695
    %v2202 = vpow.pop %v2201
    %v2203 = vmul.f32 %v2190, 1.442695
    %v2204 = vpow.pop %v2203
    %v2205 = vmul.f32 %v2191, 1.442695
    %v2206 = vpow.pop %v2205
    %v2207 = vmul.f32 %v2192, 1.442695
    %v2208 = vpow.pop %v2207
    %v2209 = vsel %vm754, %v2194, 0.0
    %2210 = vadd.xlane.f32.xlu0 %v2209
    %v2211 = vpop.xlane.xlu0 %2210
    %v2212 = vsel %vm754, %v2196, 0.0
    %2213 = vadd.xlane.f32.xlu0 %v2212
    %v2214 = vpop.xlane.xlu0 %2213
    %v2215 = vsel %vm754, %v2198, 0.0
    %2216 = vadd.xlane.f32.xlu0 %v2215
    %v2217 = vpop.xlane.xlu0 %2216
    %v2218 = vsel %vm754, %v2200, 0.0
    %2219 = vadd.xlane.f32.xlu0 %v2218
    %v2220 = vpop.xlane.xlu0 %2219
    %v2221 = vsel %vm754, %v2202, 0.0
    %2222 = vadd.xlane.f32.xlu0 %v2221
    %v2223 = vpop.xlane.xlu0 %2222
    %v2224 = vsel %vm754, %v2204, 0.0
    %2225 = vadd.xlane.f32.xlu0 %v2224
    %v2226 = vpop.xlane.xlu0 %2225
    %v2227 = vsel %vm754, %v2206, 0.0
    %2228 = vadd.xlane.f32.xlu0 %v2227
    %v2229 = vpop.xlane.xlu0 %2228
    %v2230 = vsel %vm754, %v2208, 0.0
    %2231 = vadd.xlane.f32.xlu0 %v2230
    %v2232 = vpop.xlane.xlu0 %2231
    %v2233 = vrcp.pop %v2211
    %v2234 = vmul.f32 %v2194, %v2233
    %v2235 = vrcp.pop %v2214
    %v2236 = vmul.f32 %v2196, %v2235
    %v2237 = vrcp.pop %v2217
    %v2238 = vmul.f32 %v2198, %v2237
    %v2239 = vrcp.pop %v2220
    %v2240 = vmul.f32 %v2200, %v2239
    %v2241 = vrcp.pop %v2223
    %v2242 = vmul.f32 %v2202, %v2241
    %v2243 = vrcp.pop %v2226
    %v2244 = vmul.f32 %v2204, %v2243
    %v2245 = vrcp.pop %v2229
    %v2246 = vmul.f32 %v2206, %v2245
    %v2247 = vrcp.pop %v2232
    %v2248 = vmul.f32 %v2208, %v2247
    %v2249 = vpack.c.bf16 %v2236, %v2234
    %v2250 = vpack.c.bf16 %v2240, %v2238
    %v2251 = vpack.c.bf16 %v2244, %v2242
    %v2252 = vpack.c.bf16 %v2248, %v2246
    %2257 = vrot.lane.b32.xlu0 %v2060, 96
    %v2258 = vpop.permute.xlu0 %2257
    %2259 = vrot.lane.b32.xlu0 %v2061, 96
    %v2260 = vpop.permute.xlu0 %2259
    %2261 = vrot.lane.b32.xlu0 %v2062, 96
    %v2262 = vpop.permute.xlu0 %2261
    %2263 = vrot.lane.b32.xlu0 %v2063, 96
    %v2264 = vpop.permute.xlu0 %2263
    %v2270 = vsel %vm754, %v2249, 0
    %v2273 = vsel %vm754, %v2250, 0
    %v2276 = vsel %vm754, %v2251, 0
    %v2279 = vsel %vm754, %v2252, 0
    %2281 = vmatprep.subr.bf16.mxu0 0
    %2282 = vmatpush1.bf16.msra.mxu0 %v2258
    %2283 = vmatprep.subr.bf16.mxu0 0
    %2284 = vmatpush1.bf16.msra.mxu0 %v2260
    %2285 = vmatprep.subr.bf16.mxu0 0
    %2286 = vmatpush1.bf16.msra.mxu0 %v2262
    %2287 = vmatprep.subr.bf16.mxu0 0
    %2288 = vmatpush1.bf16.msra.mxu0 %v2264
    %2289 = vmatprep.subr.bf16.mxu0 0
    %2290 = vmatpush1.bf16.msra.mxu0 0
    %2291 = vmatprep.subr.bf16.mxu0 0
    %2292 = vmatpush1.bf16.msra.mxu0 0
    %2293 = vmatprep.subr.bf16.mxu0 0
    %2294 = vmatpush1.bf16.msra.mxu0 0
    %2295 = vmatprep.subr.bf16.mxu0 0
    %2296 = vmatpush1.bf16.msra.mxu0 0
    %2297 = vmatprep.subr.bf16.mxu0 0
    %2298 = vmatpush1.bf16.msra.mxu0 0
    %2299 = vmatprep.subr.bf16.mxu0 0
    %2300 = vmatpush1.bf16.msra.mxu0 0
    %2301 = vmatprep.subr.bf16.mxu0 0
    %2302 = vmatpush1.bf16.msra.mxu0 0
    %2303 = vmatprep.subr.bf16.mxu0 0
    %2304 = vmatpush1.bf16.msra.mxu0 0
    %2305 = vmatprep.subr.bf16.mxu0 0
    %2306 = vmatpush1.bf16.msra.mxu0 0
    %2307 = vmatprep.subr.bf16.mxu0 0
    %2308 = vmatpush1.bf16.msra.mxu0 0
    %2309 = vmatprep.subr.bf16.mxu0 0
    %2310 = vmatpush1.bf16.msra.mxu0 0
    %2311 = vmatprep.subr.bf16.mxu0 0
    %2312 = vmatpush1.bf16.msra.mxu0 0
    %2313 = vmatprep.mubr.bf16.mxu0 0
    %2314 = vmatmul.mubr.bf16.gmra.mrb[0].mxu0 %v2270
    %v2315 = vpop.f32.mrb[0].mxu0
    %v2316 = vadd.f32 0.0, %v2315
    %v2317 = vpop.f32.mrb[0].mxu0
    %v2318 = vpop.f32.mrb[0].mxu0
    %v2319 = vadd.f32 0.0, %v2318
    %v2320 = vpop.f32.mrb[0].mxu0
    %2321 = vmatprep.mubr.bf16.mxu0 0
    %2322 = vmatmul.mubr.bf16.gmra.mrb[0].mxu0 %v2273
    %v2323 = vpop.f32.mrb[0].mxu0
    %v2324 = vadd.f32 0.0, %v2323
    %v2325 = vpop.f32.mrb[0].mxu0
    %v2326 = vpop.f32.mrb[0].mxu0
    %v2327 = vadd.f32 0.0, %v2326
    %v2328 = vpop.f32.mrb[0].mxu0
    %2329 = vmatprep.mubr.bf16.mxu0 0
    %2330 = vmatmul.mubr.bf16.gmra.mrb[0].mxu0 %v2276
    %v2331 = vpop.f32.mrb[0].mxu0
    %v2332 = vadd.f32 0.0, %v2331
    %v2333 = vpop.f32.mrb[0].mxu0
    %v2334 = vpop.f32.mrb[0].mxu0
    %v2335 = vadd.f32 0.0, %v2334
    %v2336 = vpop.f32.mrb[0].mxu0
    %2337 = vmatprep.mubr.bf16.mxu0 0
    %2338 = vmatmul.mubr.bf16.gmra.mrb[0].mxu0 %v2279
    %v2339 = vpop.f32.mrb[0].mxu0
    %v2340 = vadd.f32 0.0, %v2339
    %v2341 = vpop.f32.mrb[0].mxu0
    %v2342 = vpop.f32.mrb[0].mxu0
    %v2343 = vadd.f32 0.0, %v2342
    %v2344 = vpop.f32.mrb[0].mxu0
    %2345 = vdwg.mxu0
    %2347 = vrot.lane.b32.xlu0 %v2319, 8
    %v2348 = vpop.permute.xlu0 %2347
    %2351 = vrot.lane.b32.xlu0 %v2324, 16
    %v2352 = vpop.permute.xlu0 %2351
    %2355 = vrot.lane.b32.xlu0 %v2327, 24
    %v2356 = vpop.permute.xlu0 %2355
    %v2358 = vsel %vm656, %v2316, %v2348
    %v2359 = vsel %vm949, %v2358, %v2352
    %v2360 = vsel %vm951, %v2359, %v2356
    %2362 = vrot.lane.b32.xlu0 %v2335, 8
    %v2363 = vpop.permute.xlu0 %2362
    %2366 = vrot.lane.b32.xlu0 %v2340, 16
    %v2367 = vpop.permute.xlu0 %2366
    %2370 = vrot.lane.b32.xlu0 %v2343, 24
    %v2371 = vpop.permute.xlu0 %2370
    %v2373 = vsel %vm656, %v2332, %v2363
    %v2374 = vsel %vm949, %v2373, %v2367
    %v2375 = vsel %vm951, %v2374, %v2371
    %v2376 = vpack.c.bf16 %v2375, %v2360
    %v2378 = vlaneseq
    %v2379 = vshrl.u32 %v2378, 7
    %v2380 = vsub.s32 0, %v2379
    %v2381 = vrot.slane %v1850, %v2380
    %v2387 = vunpack.c.l.b16 %v1846
    %v2388 = vunpack.c.l.b16 %v1847
    %v2389 = vunpack.c.l.b16 %v1848
    %v2390 = vunpack.c.l.b16 %v1849
    %v2391 = vpack.c.b16 %v2388, %v2387
    %v2392 = vpack.c.b16 %v2390, %v2389
    %v2396 = vsel %vm987, %v2376, 0
    %2398 = vmatprep.subr.bf16.mxu0 0
    %2399 = vmatpush1.bf16.msra.mxu0 %v2391
    %2400 = vmatprep.subr.bf16.mxu0 0
    %2401 = vmatpush1.bf16.msra.mxu0 %v2392
    %2402 = vmatprep.subr.bf16.mxu0 0
    %2403 = vmatpush1.bf16.msra.mxu0 0
    %2404 = vmatprep.subr.bf16.mxu0 0
    %2405 = vmatpush1.bf16.msra.mxu0 0
    %2406 = vmatprep.subr.bf16.mxu0 0
    %2407 = vmatpush1.bf16.msra.mxu0 0
    %2408 = vmatprep.subr.bf16.mxu0 0
    %2409 = vmatpush1.bf16.msra.mxu0 0
    %2410 = vmatprep.subr.bf16.mxu0 0
    %2411 = vmatpush1.bf16.msra.mxu0 0
    %2412 = vmatprep.subr.bf16.mxu0 0
    %2413 = vmatpush1.bf16.msra.mxu0 0
    %2414 = vmatprep.subr.bf16.mxu0 0
    %2415 = vmatpush1.bf16.msra.mxu0 0
    %2416 = vmatprep.subr.bf16.mxu0 0
    %2417 = vmatpush1.bf16.msra.mxu0 0
    %2418 = vmatprep.subr.bf16.mxu0 0
    %2419 = vmatpush1.bf16.msra.mxu0 0
    %2420 = vmatprep.subr.bf16.mxu0 0
    %2421 = vmatpush1.bf16.msra.mxu0 0
    %2422 = vmatprep.subr.bf16.mxu0 0
    %2423 = vmatpush1.bf16.msra.mxu0 0
    %2424 = vmatprep.subr.bf16.mxu0 0
    %2425 = vmatpush1.bf16.msra.mxu0 0
    %2426 = vmatprep.subr.bf16.mxu0 0
    %2427 = vmatpush1.bf16.msra.mxu0 0
    %2428 = vmatprep.subr.bf16.mxu0 0
    %2429 = vmatpush1.bf16.msra.mxu0 0
    %2430 = vmatprep.mubr.bf16.mxu0 0
    %2431 = vmatmul.mubr.bf16.gmra.mrb[0].mxu0 %v2396
    %v2432 = vpop.f32.mrb[0].mxu0
    %v2433 = vadd.f32 %v2381, %v2432
    %v2434 = vpop.f32.mrb[0].mxu0
    %v2435 = vpop.f32.mrb[0].mxu0
    %v2436 = vadd.f32 %v2381, %v2435
    %v2437 = vpop.f32.mrb[0].mxu0
    %2438 = vdwg.mxu0
    %v2439 = vadd.f32 %v1818, %v2433
    %v2440 = vadd.f32 %v1828, %v2436
    %v2441 = vmul.f32 %v2439, %v2439
    %v2442 = vrot.slane %v2441, 4
    %v2443 = vadd.f32 %v2441, %v2442
    %v2444 = vrot.slane %v2443, 2
    %v2445 = vadd.f32 %v2443, %v2444
    %v2446 = vrot.slane %v2445, 1
    %v2447 = vadd.f32 %v2445, %v2446
    %v2448 = vmax.f32 %v2447, 1e-24
    %v2449 = vrsqrt.pop %v2448
    %v2450 = vmul.f32 %v2439, %v2449
    %v2451 = vmul.f32 %v2440, %v2440
    %v2452 = vrot.slane %v2451, 4
    %v2453 = vadd.f32 %v2451, %v2452
    %v2454 = vrot.slane %v2453, 2
    %v2455 = vadd.f32 %v2453, %v2454
    %v2456 = vrot.slane %v2455, 1
    %v2457 = vadd.f32 %v2455, %v2456
    %v2458 = vmax.f32 %v2457, 1e-24
    %v2459 = vrsqrt.pop %v2458
    %v2460 = vmul.f32 %v2440, %v2459
    %v2461 = vld [vmem:[%s18] sm:$0xf]
    %v2462 = vld [vmem:[%s18 + $0x4] sm:$0xf]
    %v2463 = vld [vmem:[%s18 + $0x8] sm:$0xf]
    %v2464 = vld [vmem:[%s18 + $0xc] sm:$0xf]
    %v2465 = vld [vmem:[%s18 + $0x10] sm:$0xf]
    %v2466 = vld [vmem:[%s18 + $0x14] sm:$0xf]
    %v2467 = vld [vmem:[%s18 + $0x18] sm:$0xf]
    %v2468 = vld [vmem:[%s18 + $0x1c] sm:$0xf]
    %v2469 = vld [vmem:[%s18 + $0x20] sm:$0xf]
    %v2470 = vld [vmem:[%s18 + $0x24] sm:$0xf]
    %v2471 = vld [vmem:[%s18 + $0x28] sm:$0xf]
    %v2472 = vld [vmem:[%s18 + $0x2c] sm:$0xf]
    %v2473 = vld [vmem:[%s18 + $0x30] sm:$0xf]
    %v2474 = vld [vmem:[%s18 + $0x34] sm:$0xf]
    %v2475 = vld [vmem:[%s18 + $0x38] sm:$0xf]
    %v2476 = vld [vmem:[%s18 + $0x3c] sm:$0xf]
    %v2477 = vld [vmem:[%s19] sm:$0x1]
    %v2478 = vld [vmem:[%s20] sm:$0xf]
    %v2479 = vld [vmem:[%s20 + $0x4] sm:$0xf]
    %v2480 = vld [vmem:[%s20 + $0x8] sm:$0xf]
    %v2481 = vld [vmem:[%s20 + $0xc] sm:$0xf]
    %v2482 = vld [vmem:[%s20 + $0x10] sm:$0xf]
    %v2483 = vld [vmem:[%s20 + $0x14] sm:$0xf]
    %v2484 = vld [vmem:[%s20 + $0x18] sm:$0xf]
    %v2485 = vld [vmem:[%s20 + $0x1c] sm:$0xf]
    %v2486 = vld [vmem:[%s20 + $0x20] sm:$0xf]
    %v2487 = vld [vmem:[%s20 + $0x24] sm:$0xf]
    %v2488 = vld [vmem:[%s20 + $0x28] sm:$0xf]
    %v2489 = vld [vmem:[%s20 + $0x2c] sm:$0xf]
    %v2490 = vld [vmem:[%s20 + $0x30] sm:$0xf]
    %v2491 = vld [vmem:[%s20 + $0x34] sm:$0xf]
    %v2492 = vld [vmem:[%s20 + $0x38] sm:$0xf]
    %v2493 = vld [vmem:[%s20 + $0x3c] sm:$0xf]
    %v2494 = vld [vmem:[%s21] sm:$0x1]
    %v2495 = vpack.c.bf16 %v2460, %v2450
    %v2497 = vlaneseq
    %v2498 = vshrl.u32 %v2497, 7
    %v2499 = vsub.s32 0, %v2498
    %v2500 = vrot.slane %v2477, %v2499
    %v2518 = vunpack.c.l.b16 %v2461
    %v2519 = vunpack.c.l.b16 %v2462
    %v2520 = vunpack.c.l.b16 %v2463
    %v2521 = vunpack.c.l.b16 %v2464
    %v2522 = vunpack.c.l.b16 %v2465
    %v2523 = vunpack.c.l.b16 %v2466
    %v2524 = vunpack.c.l.b16 %v2467
    %v2525 = vunpack.c.l.b16 %v2468
    %v2526 = vunpack.c.l.b16 %v2469
    %v2527 = vunpack.c.l.b16 %v2470
    %v2528 = vunpack.c.l.b16 %v2471
    %v2529 = vunpack.c.l.b16 %v2472
    %v2530 = vunpack.c.l.b16 %v2473
    %v2531 = vunpack.c.l.b16 %v2474
    %v2532 = vunpack.c.l.b16 %v2475
    %v2533 = vunpack.c.l.b16 %v2476
    %v2534 = vpack.c.b16 %v2519, %v2518
    %v2535 = vpack.c.b16 %v2521, %v2520
    %v2536 = vpack.c.b16 %v2523, %v2522
    %v2537 = vpack.c.b16 %v2525, %v2524
    %v2538 = vpack.c.b16 %v2527, %v2526
    %v2539 = vpack.c.b16 %v2529, %v2528
    %v2540 = vpack.c.b16 %v2531, %v2530
    %v2541 = vpack.c.b16 %v2533, %v2532
    %2550 = vmatprep.subr.bf16.mxu0 0
    %2551 = vmatpush1.bf16.msra.mxu0 %v2534
    %2552 = vmatprep.subr.bf16.mxu0 0
    %2553 = vmatpush1.bf16.msra.mxu0 %v2535
    %2554 = vmatprep.subr.bf16.mxu0 0
    %2555 = vmatpush1.bf16.msra.mxu0 %v2536
    %2556 = vmatprep.subr.bf16.mxu0 0
    %2557 = vmatpush1.bf16.msra.mxu0 %v2537
    %2558 = vmatprep.subr.bf16.mxu0 0
    %2559 = vmatpush1.bf16.msra.mxu0 %v2538
    %2560 = vmatprep.subr.bf16.mxu0 0
    %2561 = vmatpush1.bf16.msra.mxu0 %v2539
    %2562 = vmatprep.subr.bf16.mxu0 0
    %2563 = vmatpush1.bf16.msra.mxu0 %v2540
    %2564 = vmatprep.subr.bf16.mxu0 0
    %2565 = vmatpush1.bf16.msra.mxu0 %v2541
    %2566 = vmatprep.subr.bf16.mxu0 0
    %2567 = vmatpush1.bf16.msra.mxu0 0
    %2568 = vmatprep.subr.bf16.mxu0 0
    %2569 = vmatpush1.bf16.msra.mxu0 0
    %2570 = vmatprep.subr.bf16.mxu0 0
    %2571 = vmatpush1.bf16.msra.mxu0 0
    %2572 = vmatprep.subr.bf16.mxu0 0
    %2573 = vmatpush1.bf16.msra.mxu0 0
    %2574 = vmatprep.subr.bf16.mxu0 0
    %2575 = vmatpush1.bf16.msra.mxu0 0
    %2576 = vmatprep.subr.bf16.mxu0 0
    %2577 = vmatpush1.bf16.msra.mxu0 0
    %2578 = vmatprep.subr.bf16.mxu0 0
    %2579 = vmatpush1.bf16.msra.mxu0 0
    %2580 = vmatprep.subr.bf16.mxu0 0
    %2581 = vmatpush1.bf16.msra.mxu0 0
    %2582 = vmatprep.mubr.bf16.mxu0 0
    %2583 = vmatmul.mubr.bf16.gmra.mrb[0].mxu0 %v2495
    %v2584 = vpop.f32.mrb[0].mxu0
    %v2585 = vadd.f32 %v2500, %v2584
    %v2586 = vpop.f32.mrb[0].mxu0
    %v2587 = vpop.f32.mrb[0].mxu0
    %v2588 = vadd.f32 %v2500, %v2587
    %v2589 = vpop.f32.mrb[0].mxu0
    %2590 = vdwg.mxu0
    %v2591 = vmax.f32 %v2585, 0.0
    %v2592 = vmax.f32 %v2588, 0.0
    %v2593 = vpack.c.bf16 %v2592, %v2591
    %v2595 = vlaneseq
    %v2596 = vshrl.u32 %v2595, 7
    %v2597 = vsub.s32 0, %v2596
    %v2598 = vrot.slane %v2494, %v2597
    %v2616 = vunpack.c.l.b16 %v2478
    %v2617 = vunpack.c.l.b16 %v2479
    %v2618 = vunpack.c.l.b16 %v2480
    %v2619 = vunpack.c.l.b16 %v2481
    %v2620 = vunpack.c.l.b16 %v2482
    %v2621 = vunpack.c.l.b16 %v2483
    %v2622 = vunpack.c.l.b16 %v2484
    %v2623 = vunpack.c.l.b16 %v2485
    %v2624 = vunpack.c.l.b16 %v2486
    %v2625 = vunpack.c.l.b16 %v2487
    %v2626 = vunpack.c.l.b16 %v2488
    %v2627 = vunpack.c.l.b16 %v2489
    %v2628 = vunpack.c.l.b16 %v2490
    %v2629 = vunpack.c.l.b16 %v2491
    %v2630 = vunpack.c.l.b16 %v2492
    %v2631 = vunpack.c.l.b16 %v2493
    %v2632 = vpack.c.b16 %v2617, %v2616
    %v2633 = vpack.c.b16 %v2619, %v2618
    %v2634 = vpack.c.b16 %v2621, %v2620
    %v2635 = vpack.c.b16 %v2623, %v2622
    %v2636 = vpack.c.b16 %v2625, %v2624
    %v2637 = vpack.c.b16 %v2627, %v2626
    %v2638 = vpack.c.b16 %v2629, %v2628
    %v2639 = vpack.c.b16 %v2631, %v2630
    %2648 = vmatprep.subr.bf16.mxu0 0
    %2649 = vmatpush1.bf16.msra.mxu0 %v2632
    %2650 = vmatprep.subr.bf16.mxu0 0
    %2651 = vmatpush1.bf16.msra.mxu0 %v2633
    %2652 = vmatprep.subr.bf16.mxu0 0
    %2653 = vmatpush1.bf16.msra.mxu0 %v2634
    %2654 = vmatprep.subr.bf16.mxu0 0
    %2655 = vmatpush1.bf16.msra.mxu0 %v2635
    %2656 = vmatprep.subr.bf16.mxu0 0
    %2657 = vmatpush1.bf16.msra.mxu0 %v2636
    %2658 = vmatprep.subr.bf16.mxu0 0
    %2659 = vmatpush1.bf16.msra.mxu0 %v2637
    %2660 = vmatprep.subr.bf16.mxu0 0
    %2661 = vmatpush1.bf16.msra.mxu0 %v2638
    %2662 = vmatprep.subr.bf16.mxu0 0
    %2663 = vmatpush1.bf16.msra.mxu0 %v2639
    %2664 = vmatprep.subr.bf16.mxu0 0
    %2665 = vmatpush1.bf16.msra.mxu0 0
    %2666 = vmatprep.subr.bf16.mxu0 0
    %2667 = vmatpush1.bf16.msra.mxu0 0
    %2668 = vmatprep.subr.bf16.mxu0 0
    %2669 = vmatpush1.bf16.msra.mxu0 0
    %2670 = vmatprep.subr.bf16.mxu0 0
    %2671 = vmatpush1.bf16.msra.mxu0 0
    %2672 = vmatprep.subr.bf16.mxu0 0
    %2673 = vmatpush1.bf16.msra.mxu0 0
    %2674 = vmatprep.subr.bf16.mxu0 0
    %2675 = vmatpush1.bf16.msra.mxu0 0
    %2676 = vmatprep.subr.bf16.mxu0 0
    %2677 = vmatpush1.bf16.msra.mxu0 0
    %2678 = vmatprep.subr.bf16.mxu0 0
    %2679 = vmatpush1.bf16.msra.mxu0 0
    %2680 = vmatprep.mubr.bf16.mxu0 0
    %2681 = vmatmul.mubr.bf16.gmra.mrb[0].mxu0 %v2593
    %v2682 = vpop.f32.mrb[0].mxu0
    %v2683 = vadd.f32 %v2598, %v2682
    %v2684 = vpop.f32.mrb[0].mxu0
    %v2685 = vpop.f32.mrb[0].mxu0
    %v2686 = vadd.f32 %v2598, %v2685
    %v2687 = vpop.f32.mrb[0].mxu0
    %2688 = vdwg.mxu0
    %v2689 = vadd.f32 %v2450, %v2683
    %v2690 = vadd.f32 %v2460, %v2686
    %v2691 = vmul.f32 %v2689, %v2689
    %v2692 = vrot.slane %v2691, 4
    %v2693 = vadd.f32 %v2691, %v2692
    %v2694 = vrot.slane %v2693, 2
    %v2695 = vadd.f32 %v2693, %v2694
    %v2696 = vrot.slane %v2695, 1
    %v2697 = vadd.f32 %v2695, %v2696
    %v2698 = vmax.f32 %v2697, 1e-24
    %v2699 = vrsqrt.pop %v2698
    %v2700 = vmul.f32 %v2689, %v2699
    %v2701 = vmul.f32 %v2690, %v2690
    %v2702 = vrot.slane %v2701, 4
    %v2703 = vadd.f32 %v2701, %v2702
    %v2704 = vrot.slane %v2703, 2
    %v2705 = vadd.f32 %v2703, %v2704
    %v2706 = vrot.slane %v2705, 1
    %v2707 = vadd.f32 %v2705, %v2706
    %v2708 = vmax.f32 %v2707, 1e-24
    %v2709 = vrsqrt.pop %v2708
    %v2710 = vmul.f32 %v2690, %v2709
    %v2711 = vld [vmem:[%s22] sm:$0xf]
    %v2712 = vld [vmem:[%s22 + $0x4] sm:$0xf]
    %v2713 = vld [vmem:[%s22 + $0x8] sm:$0xf]
    %v2714 = vld [vmem:[%s22 + $0xc] sm:$0xf]
    %v2715 = vld [vmem:[%s22 + $0x10] sm:$0xf]
    %v2716 = vld [vmem:[%s22 + $0x14] sm:$0xf]
    %v2717 = vld [vmem:[%s22 + $0x18] sm:$0xf]
    %v2718 = vld [vmem:[%s22 + $0x1c] sm:$0xf]
    %v2719 = vld [vmem:[%s22 + $0x20] sm:$0xf]
    %v2720 = vld [vmem:[%s22 + $0x24] sm:$0xf]
    %v2721 = vld [vmem:[%s22 + $0x28] sm:$0xf]
    %v2722 = vld [vmem:[%s22 + $0x2c] sm:$0xf]
    %v2723 = vld [vmem:[%s22 + $0x30] sm:$0xf]
    %v2724 = vld [vmem:[%s22 + $0x34] sm:$0xf]
    %v2725 = vld [vmem:[%s22 + $0x38] sm:$0xf]
    %v2726 = vld [vmem:[%s22 + $0x3c] sm:$0xf]
    %v2727 = vld [vmem:[%s23] sm:$0x1]
    %v2728 = vpack.c.bf16 %v2710, %v2700
    %v2730 = vlaneseq
    %v2731 = vshrl.u32 %v2730, 7
    %v2732 = vsub.s32 0, %v2731
    %v2733 = vrot.slane %v2727, %v2732
    %v2751 = vunpack.c.l.b16 %v2711
    %v2752 = vunpack.c.l.b16 %v2712
    %v2753 = vunpack.c.l.b16 %v2713
    %v2754 = vunpack.c.l.b16 %v2714
    %v2755 = vunpack.c.l.b16 %v2715
    %v2756 = vunpack.c.l.b16 %v2716
    %v2757 = vunpack.c.l.b16 %v2717
    %v2758 = vunpack.c.l.b16 %v2718
    %v2759 = vunpack.c.l.b16 %v2719
    %v2760 = vunpack.c.l.b16 %v2720
    %v2761 = vunpack.c.l.b16 %v2721
    %v2762 = vunpack.c.l.b16 %v2722
    %v2763 = vunpack.c.l.b16 %v2723
    %v2764 = vunpack.c.l.b16 %v2724
    %v2765 = vunpack.c.l.b16 %v2725
    %v2766 = vunpack.c.l.b16 %v2726
    %v2767 = vpack.c.b16 %v2752, %v2751
    %v2768 = vpack.c.b16 %v2754, %v2753
    %v2769 = vpack.c.b16 %v2756, %v2755
    %v2770 = vpack.c.b16 %v2758, %v2757
    %v2771 = vpack.c.b16 %v2760, %v2759
    %v2772 = vpack.c.b16 %v2762, %v2761
    %v2773 = vpack.c.b16 %v2764, %v2763
    %v2774 = vpack.c.b16 %v2766, %v2765
    %2783 = vmatprep.subr.bf16.mxu0 0
    %2784 = vmatpush1.bf16.msra.mxu0 %v2767
    %2785 = vmatprep.subr.bf16.mxu0 0
    %2786 = vmatpush1.bf16.msra.mxu0 %v2768
    %2787 = vmatprep.subr.bf16.mxu0 0
    %2788 = vmatpush1.bf16.msra.mxu0 %v2769
    %2789 = vmatprep.subr.bf16.mxu0 0
    %2790 = vmatpush1.bf16.msra.mxu0 %v2770
    %2791 = vmatprep.subr.bf16.mxu0 0
    %2792 = vmatpush1.bf16.msra.mxu0 %v2771
    %2793 = vmatprep.subr.bf16.mxu0 0
    %2794 = vmatpush1.bf16.msra.mxu0 %v2772
    %2795 = vmatprep.subr.bf16.mxu0 0
    %2796 = vmatpush1.bf16.msra.mxu0 %v2773
    %2797 = vmatprep.subr.bf16.mxu0 0
    %2798 = vmatpush1.bf16.msra.mxu0 %v2774
    %2799 = vmatprep.subr.bf16.mxu0 0
    %2800 = vmatpush1.bf16.msra.mxu0 0
    %2801 = vmatprep.subr.bf16.mxu0 0
    %2802 = vmatpush1.bf16.msra.mxu0 0
    %2803 = vmatprep.subr.bf16.mxu0 0
    %2804 = vmatpush1.bf16.msra.mxu0 0
    %2805 = vmatprep.subr.bf16.mxu0 0
    %2806 = vmatpush1.bf16.msra.mxu0 0
    %2807 = vmatprep.subr.bf16.mxu0 0
    %2808 = vmatpush1.bf16.msra.mxu0 0
    %2809 = vmatprep.subr.bf16.mxu0 0
    %2810 = vmatpush1.bf16.msra.mxu0 0
    %2811 = vmatprep.subr.bf16.mxu0 0
    %2812 = vmatpush1.bf16.msra.mxu0 0
    %2813 = vmatprep.subr.bf16.mxu0 0
    %2814 = vmatpush1.bf16.msra.mxu0 0
    %2815 = vmatprep.mubr.bf16.mxu0 0
    %2816 = vmatmul.mubr.bf16.gmra.mrb[0].mxu0 %v2728
    %v2817 = vpop.f32.mrb[0].mxu0
    %v2818 = vadd.f32 %v2733, %v2817
    %v2819 = vpop.f32.mrb[0].mxu0
    %v2820 = vpop.f32.mrb[0].mxu0
    %v2821 = vadd.f32 %v2733, %v2820
    %v2822 = vpop.f32.mrb[0].mxu0
    %2823 = vdwg.mxu0
    %v2824 = vmax.f32 %v2818, %v2821
    %v2825 = vsub.f32 %v2818, %v2824
    %v2826 = vmul.f32 %v2825, 1.442695
    %v2827 = vpow.pop %v2826
    %v2828 = vsub.f32 %v2821, %v2824
    %v2829 = vmul.f32 %v2828, 1.442695
    %v2830 = vpow.pop %v2829
    %v2831 = vadd.f32 %v2827, %v2830
    %v2832 = vrcp.pop %v2831
    %v2833 = vmul.f32 %v2827, %v2832
    %v2834 = vmul.f32 %v2830, %v2832
    %2835 = vst [vmem:[#allocation2] sm:$0xff] %v2833
    %2836 = vst [vmem:[#allocation2 + $0x8] sm:$0xff] %v2834
    // Predicated region
    $region98: #{transformer_forward.1} parent=1 // pred_check
      _
    $region99: #{transformer_forward.1} parent=1 // pred_check_branch
      %2838 = sbr.rel (0) target = $region101
    $region100: #{transformer_forward.1} parent=1 // pred_region
      %s2840 = ssub.s32 256, 256
      %2841 = vsyncadd [#allocation3], %s2840
      %s2842 = sshll.u32 [#allocation2], 4
      %s2843 = int_to_ptr.vmem [resolvable:$true] %s2842
      %2848 = dma.vmem_to_hbm [thread:$0]  %s2843, 256, %s24, [#allocation3], 128, 128, 8
    $region101: #{transformer_forward.1} parent=1 // pred_fallthru
      _
    // Predicated region
    $region102: #{transformer_forward.1} parent=1 // pred_check
      _
    $region103: #{transformer_forward.1} parent=1 // pred_check_branch
      %2850 = sbr.rel (0) target = $region105
    $region104: #{transformer_forward.1} parent=1 // pred_region
      %2851 = dma.done [#allocation3], 256
    $region105: #{transformer_forward.1} parent=1 // pred_fallthru
      _
    %2852 = vsyncpa [#allocation3], 1

</llo_original>
